<compile_context>
chip_gen: v6e
topology: v6e:2x2x1
jax: 0.10.0
libtpu: 0.0.40
codegen_flags: <defaults>
</compile_context>

<pallas_src>
import math
from functools import partial

import jax
import jax.numpy as jnp
from jax.experimental import pallas as pl
from jax.experimental.pallas import tpu as pltpu


# ----------------------------------------------------------------------------
# Fused Pallas kernel
# ----------------------------------------------------------------------------
def _tcn_fused_kernel(x_ref, pe_ref, cw_ref, cb_ref, fcw_ref, fcb_ref, o_ref, *,
                      ksize, dilations):
    # x_ref : (B, T, C) f32        pe_ref : (B, 1, C) f32
    # cw_ref: (L, 2, K, C, C) bf16 (per-tap weights, (C_in, C_out) on the MXU axes)
    # cb_ref: (L, 2, 1, C) f32     fcw_ref/fcb_ref: (1, C) f32
    # o_ref : (B, C, C) f32
    B, T, C = x_ref.shape
    Cout = o_ref.shape[-1]

    # PositionalEncoding add.  TODO(synk): nn.Dropout(0.1) is identity (inference semantics).
    h = x_ref[...] + pe_ref[...]                               # (B, T, C)

    def causal_conv(a, lvl, ci, dil):
        # Dilated causal conv + Chomp1d:
        #   out[:, t] = b + sum_j a[:, t - (K-1-j)*dil] @ w[j]   (zeros for t < shift)
        a2 = a.reshape(B * T, C)                               # lanes (C) untouched
        w_last = cw_ref[lvl, ci, ksize - 1].astype(jnp.float32)  # shift-0 tap
        acc = (jnp.dot(a2, w_last, preferred_element_type=jnp.float32)
               + cb_ref[lvl, ci]).reshape(B, T, Cout)          # bias folded into epilogue
        for j in range(ksize - 1):                             # static unroll over shifted taps
            s = (ksize - 1 - j) * dil
            if s >= T:
                continue                                       # tap sees only left zero-padding
            wj = cw_ref[lvl, ci, j].astype(jnp.float32)
            part = jnp.dot(a[:, :T - s, :].reshape(B * (T - s), C), wj,
                           preferred_element_type=jnp.float32)
            acc = acc + jnp.pad(part.reshape(B, T - s, Cout),
                                ((0, 0), (s, 0), (0, 0)))
        return acc

    for lvl, dil in enumerate(dilations):
        # TODO(synk): the two nn.Dropout(0.2) layers inside each block are identity (inference).
        h1 = jax.nn.relu(causal_conv(h, lvl, 0, dil))
        h2 = jax.nn.relu(causal_conv(h1, lvl, 1, dil))
        h = jax.nn.relu(h2 + h)                                # downsample is None (C_in == C_out)

    # nn.Linear(1, C): out[b, c, o] = net[b, c] * w[o] + bias[o], net = h[:, 0, :].
    # net has C on the lane axis but the output needs it on the sublane axis; instead of a
    # lane->sublane relayout we build diag(net[b]) with iota+where (sublane broadcasts only)
    # and use one MXU matmul per batch element: diag(net[b]) @ rows(w).
    net = h[:, 0, :]                                           # (B, C)
    row = jax.lax.broadcasted_iota(jnp.int32, (C, C), 0)
    col = jax.lax.broadcasted_iota(jnp.int32, (C, C), 1)
    eye = row == col
    w_rows = jnp.broadcast_to(fcw_ref[...], (C, Cout))         # hoisted: every row == fc weight
    bias = fcb_ref[...]                                        # (1, Cout)
    for b in range(B):                                         # static unroll, B is tiny
        diag_b = jnp.where(eye, net[b:b + 1, :], 0.0)          # (C, C)
        out_b = jnp.dot(diag_b, w_rows, preferred_element_type=jnp.float32) + bias
        o_ref[b] = out_b.astype(o_ref.dtype)


# ----------------------------------------------------------------------------
# pallas_call wrapper (single launch, single grid step)
# ----------------------------------------------------------------------------
def temporal_conv_net(params, x):
    B, L, D = x.shape
    assert L == 1, "nn.Linear(1, C) at the end forces the conv length dim to be 1"
    pe_slice = params["pe"][:B]                                # pe[:x.size(0)] -> (B, 1, D)
    cw, cb = params["conv_w"], params["conv_b"]                # (L,2,K,C,C) bf16, (L,2,1,C) f32
    nl, _, K, C, Cout = cw.shape
    dilations = tuple(2 ** i for i in range(nl))
    kern = partial(_tcn_fused_kernel, ksize=K, dilations=dilations)
    return pl.pallas_call(
        kern,
        out_shape=jax.ShapeDtypeStruct((B, C, Cout), jnp.float32),
        grid=(1,),
        in_specs=[pl.BlockSpec((B, L, D), lambda i: (0, 0, 0)),
                  pl.BlockSpec((B, 1, D), lambda i: (0, 0, 0)),
                  pl.BlockSpec(cw.shape, lambda i: (0, 0, 0, 0, 0)),
                  pl.BlockSpec(cb.shape, lambda i: (0, 0, 0, 0)),
                  pl.BlockSpec((1, Cout), lambda i: (0, 0)),
                  pl.BlockSpec((1, Cout), lambda i: (0, 0))],
        out_specs=pl.BlockSpec((B, C, Cout), lambda i: (0, 0, 0)),
        compiler_params=pltpu.CompilerParams(dimension_semantics=("arbitrary",)),
    )(x, pe_slice, cw, cb, params["fc_w"], params["fc_b"])


# ----------------------------------------------------------------------------
# Parameters (deterministic, synthetic)
# ----------------------------------------------------------------------------
def make_pe(max_len=2614, d_model=256):
    position = jnp.arange(max_len, dtype=jnp.float32)[:, None]
    div_term = jnp.exp(jnp.arange(0, d_model, 2, dtype=jnp.float32)
                       * (-math.log(500.0) / d_model))
    ang = position * div_term
    pe = jnp.zeros((max_len, d_model), jnp.float32)
    pe = pe.at[:, 0::2].set(jnp.sin(ang)).at[:, 1::2].set(jnp.cos(ang))
    return pe[:, None, :]                                      # (max_len, 1, d_model)


def init_params(key, num_channels=256, kernel_size=2, num_levels=3):
    C, K = num_channels, kernel_size
    ws, bs = [], []
    for _ in range(num_levels):
        key, kv1, kg1, kb1, kv2, kg2, kb2 = jax.random.split(key, 7)

        def make_conv(kv, kg, kb):
            # weight_norm reparameterization: w = g * v / ||v||_(in,k) (per out channel)
            v = 0.01 * jax.random.normal(kv, (C, C, K), jnp.float32)   # torch (out, in, K)
            g = 0.5 + jax.random.uniform(kg, (C, 1, 1), jnp.float32)
            w = g * v / jnp.sqrt(jnp.sum(v * v, axis=(1, 2), keepdims=True))
            w_taps = jnp.transpose(w, (2, 1, 0))                        # (K, C_in, C_out)
            b = 0.1 * jax.random.normal(kb, (1, C), jnp.float32)
            return w_taps, b

        w1, b1 = make_conv(kv1, kg1, kb1)
        w2, b2 = make_conv(kv2, kg2, kb2)
        ws.append(jnp.stack([w1, w2]))                          # (2, K, C, C)
        bs.append(jnp.stack([b1, b2]))                          # (2, 1, C)

    key, kw, kb = jax.random.split(key, 3)
    fc_w = 0.05 * jax.random.normal(kw, (1, C), jnp.float32)    # = torch Linear(1,C).weight.T
    fc_b = 0.05 * jax.random.normal(kb, (1, C), jnp.float32)
    return dict(conv_w=jnp.stack(ws).astype(jnp.bfloat16),      # (L, 2, K, C, C) bf16 in HBM
                conv_b=jnp.stack(bs),                           # (L, 2, 1, C) f32
                pe=make_pe(d_model=C), fc_w=fc_w, fc_b=fc_b)


# ----------------------------------------------------------------------------
# Pure-JAX reference (uses the same bf16-stored weights, cast to f32)
# ----------------------------------------------------------------------------
def reference_forward(params, x):
    B, L, D = x.shape
    h = x + params["pe"][:B]
    nl, _, K, C, _ = params["conv_w"].shape
    for lvl in range(nl):
        dil = 2 ** lvl
        w_lvl = params["conv_w"][lvl].astype(jnp.float32)       # (2, K, C, C)
        b_lvl = params["conv_b"][lvl]                           # (2, 1, C)

        def conv(a, ci):
            T = a.shape[1]
            out = jnp.zeros((B, T, C), jnp.float32) + b_lvl[ci]
            for j in range(K):
                s = (K - 1 - j) * dil
                asft = jnp.pad(a, ((0, 0), (s, 0), (0, 0)))[:, :T, :]
                out = out + jnp.einsum("btc,cd->btd", asft, w_lvl[ci, j],
                                       precision="highest")
            return out

        h1 = jax.nn.relu(conv(h, 0))
        h2 = jax.nn.relu(conv(h1, 1))
        h = jax.nn.relu(h2 + h)
    net = h[:, 0, :]
    return (net[:, :, None] * params["fc_w"][0][None, None, :]
            + params["fc_b"][0][None, None, :])


if __name__ == "__main__":
    key = jax.random.PRNGKey(0)
    kx, kp = jax.random.split(key)

    # Shapes implied by the module:
    #  - PositionalEncoding(d_model=256) + permute(0,2,1) => conv channel dim = 256
    #  - every TemporalBlock keeps in_channels == out_channels == 256
    #  - the trailing nn.Linear(1, C) => temporal length must be 1
    B, L, D = 4, 1, 256
    x = jax.random.normal(kx, (B, L, D), dtype=jnp.float32)
    params = init_params(kp, num_channels=D, kernel_size=2, num_levels=3)

    out = temporal_conv_net(params, x)
    out = jax.block_until_ready(out)

    ref = reference_forward(params, x)
    assert out.shape == (B, D, D), out.shape
    assert jnp.allclose(out, ref, atol=2e-3, rtol=2e-3), float(jnp.max(jnp.abs(out - ref)))

    print("KERNEL_OK")
</pallas_src>

<mosaic_0001>
module attributes {stable_mosaic.version = 11 : i64} {
  func.func @_tcn_fused_kernel(%arg0: i32, %arg1: memref<4x1x256xf32, #tpu.memory_space<vmem>>, %arg2: memref<4x1x256xf32, #tpu.memory_space<vmem>>, %arg3: memref<3x2x2x256x256xbf16, #tpu.memory_space<vmem>>, %arg4: memref<3x2x1x256xf32, #tpu.memory_space<vmem>>, %arg5: memref<1x256xf32, #tpu.memory_space<vmem>>, %arg6: memref<1x256xf32, #tpu.memory_space<vmem>>, %arg7: memref<4x256x256xf32, #tpu.memory_space<vmem>>) attributes {dimension_semantics = [#tpu.dimension_semantics<arbitrary>], iteration_bounds = array<i64: 1>, scalar_prefetch = 0 : i64, scratch_operands = 0 : i64, tpu.core_type = #tpu.core_type<tc>, window_params = [{pipeline_mode = #tpu.pipeline_mode<synchronous>, transform_indices = @transform_0, window_bounds = array<i64: 4, 1, 256>}, {pipeline_mode = #tpu.pipeline_mode<synchronous>, transform_indices = @transform_1, window_bounds = array<i64: 4, 1, 256>}, {pipeline_mode = #tpu.pipeline_mode<synchronous>, transform_indices = @transform_2, window_bounds = array<i64: 3, 2, 2, 256, 256>}, {pipeline_mode = #tpu.pipeline_mode<synchronous>, transform_indices = @transform_3, window_bounds = array<i64: 3, 2, 1, 256>}, {pipeline_mode = #tpu.pipeline_mode<synchronous>, transform_indices = @transform_4, window_bounds = array<i64: 1, 256>}, {pipeline_mode = #tpu.pipeline_mode<synchronous>, transform_indices = @transform_5, window_bounds = array<i64: 1, 256>}, {pipeline_mode = #tpu.pipeline_mode<synchronous>, transform_indices = @transform_6, window_bounds = array<i64: 4, 256, 256>}]} {
    %c0 = arith.constant 0 : index
    %c0_0 = arith.constant 0 : index
    %c0_1 = arith.constant 0 : index
    %0 = vector.load %arg1[%c0, %c0_0, %c0_1] : memref<4x1x256xf32, #tpu.memory_space<vmem>>, vector<4x1x256xf32>
    %c0_2 = arith.constant 0 : index
    %c0_3 = arith.constant 0 : index
    %c0_4 = arith.constant 0 : index
    %1 = vector.load %arg2[%c0_2, %c0_3, %c0_4] : memref<4x1x256xf32, #tpu.memory_space<vmem>>, vector<4x1x256xf32>
    %2 = arith.addf %0, %1 : vector<4x1x256xf32>
    %3 = vector.shape_cast %2 : vector<4x1x256xf32> to vector<4x256xf32>
    %c0_5 = arith.constant 0 : index
    %c0_6 = arith.constant 0 : index
    %c1 = arith.constant 1 : index
    %c0_7 = arith.constant 0 : index
    %c0_8 = arith.constant 0 : index
    %4 = vector.load %arg3[%c0_5, %c0_6, %c1, %c0_7, %c0_8] : memref<3x2x2x256x256xbf16, #tpu.memory_space<vmem>>, vector<1x1x1x256x256xbf16>
    %5 = vector.shape_cast %4 : vector<1x1x1x256x256xbf16> to vector<256x256xbf16>
    %6 = arith.extf %5 : vector<256x256xbf16> to vector<256x256xf32>
    %cst = arith.constant dense<0.000000e+00> : vector<4x256xf32>
    %7 = tpu.matmul %3, %6, %cst {dimension_numbers = #tpu.dot_dimension_numbers<[1], [0], [0], [1], [0, 0, 1, 1], [], []>} : vector<4x256xf32>, vector<256x256xf32>, vector<4x256xf32> -> vector<4x256xf32>
    %c0_9 = arith.constant 0 : index
    %c0_10 = arith.constant 0 : index
    %c0_11 = arith.constant 0 : index
    %c0_12 = arith.constant 0 : index
    %8 = vector.load %arg4[%c0_9, %c0_10, %c0_11, %c0_12] : memref<3x2x1x256xf32, #tpu.memory_space<vmem>>, vector<1x1x1x256xf32>
    %9 = vector.shape_cast %8 : vector<1x1x1x256xf32> to vector<1x256xf32>
    %10 = vector.broadcast %9 : vector<1x256xf32> to vector<4x256xf32>
    %11 = arith.addf %7, %10 : vector<4x256xf32>
    %12 = vector.shape_cast %11 : vector<4x256xf32> to vector<4x1x256xf32>
    %cst_13 = arith.constant 0.000000e+00 : f32
    %13 = vector.broadcast %cst_13 : f32 to vector<4x1x256xf32>
    %14 = arith.maximumf %12, %13 : vector<4x1x256xf32>
    %15 = vector.shape_cast %14 : vector<4x1x256xf32> to vector<4x256xf32>
    %c0_14 = arith.constant 0 : index
    %c1_15 = arith.constant 1 : index
    %c1_16 = arith.constant 1 : index
    %c0_17 = arith.constant 0 : index
    %c0_18 = arith.constant 0 : index
    %16 = vector.load %arg3[%c0_14, %c1_15, %c1_16, %c0_17, %c0_18] : memref<3x2x2x256x256xbf16, #tpu.memory_space<vmem>>, vector<1x1x1x256x256xbf16>
    %17 = vector.shape_cast %16 : vector<1x1x1x256x256xbf16> to vector<256x256xbf16>
    %18 = arith.extf %17 : vector<256x256xbf16> to vector<256x256xf32>
    %cst_19 = arith.constant dense<0.000000e+00> : vector<4x256xf32>
    %19 = tpu.matmul %15, %18, %cst_19 {dimension_numbers = #tpu.dot_dimension_numbers<[1], [0], [0], [1], [0, 0, 1, 1], [], []>} : vector<4x256xf32>, vector<256x256xf32>, vector<4x256xf32> -> vector<4x256xf32>
    %c0_20 = arith.constant 0 : index
    %c1_21 = arith.constant 1 : index
    %c0_22 = arith.constant 0 : index
    %c0_23 = arith.constant 0 : index
    %20 = vector.load %arg4[%c0_20, %c1_21, %c0_22, %c0_23] : memref<3x2x1x256xf32, #tpu.memory_space<vmem>>, vector<1x1x1x256xf32>
    %21 = vector.shape_cast %20 : vector<1x1x1x256xf32> to vector<1x256xf32>
    %22 = vector.broadcast %21 : vector<1x256xf32> to vector<4x256xf32>
    %23 = arith.addf %19, %22 : vector<4x256xf32>
    %24 = vector.shape_cast %23 : vector<4x256xf32> to vector<4x1x256xf32>
    %cst_24 = arith.constant 0.000000e+00 : f32
    %25 = vector.broadcast %cst_24 : f32 to vector<4x1x256xf32>
    %26 = arith.maximumf %24, %25 : vector<4x1x256xf32>
    %27 = arith.addf %26, %2 : vector<4x1x256xf32>
    %cst_25 = arith.constant 0.000000e+00 : f32
    %28 = vector.broadcast %cst_25 : f32 to vector<4x1x256xf32>
    %29 = arith.maximumf %27, %28 : vector<4x1x256xf32>
    %30 = vector.shape_cast %29 : vector<4x1x256xf32> to vector<4x256xf32>
    %c1_26 = arith.constant 1 : index
    %c0_27 = arith.constant 0 : index
    %c1_28 = arith.constant 1 : index
    %c0_29 = arith.constant 0 : index
    %c0_30 = arith.constant 0 : index
    %31 = vector.load %arg3[%c1_26, %c0_27, %c1_28, %c0_29, %c0_30] : memref<3x2x2x256x256xbf16, #tpu.memory_space<vmem>>, vector<1x1x1x256x256xbf16>
    %32 = vector.shape_cast %31 : vector<1x1x1x256x256xbf16> to vector<256x256xbf16>
    %33 = arith.extf %32 : vector<256x256xbf16> to vector<256x256xf32>
    %cst_31 = arith.constant dense<0.000000e+00> : vector<4x256xf32>
    %34 = tpu.matmul %30, %33, %cst_31 {dimension_numbers = #tpu.dot_dimension_numbers<[1], [0], [0], [1], [0, 0, 1, 1], [], []>} : vector<4x256xf32>, vector<256x256xf32>, vector<4x256xf32> -> vector<4x256xf32>
    %c1_32 = arith.constant 1 : index
    %c0_33 = arith.constant 0 : index
    %c0_34 = arith.constant 0 : index
    %c0_35 = arith.constant 0 : index
    %35 = vector.load %arg4[%c1_32, %c0_33, %c0_34, %c0_35] : memref<3x2x1x256xf32, #tpu.memory_space<vmem>>, vector<1x1x1x256xf32>
    %36 = vector.shape_cast %35 : vector<1x1x1x256xf32> to vector<1x256xf32>
    %37 = vector.broadcast %36 : vector<1x256xf32> to vector<4x256xf32>
    %38 = arith.addf %34, %37 : vector<4x256xf32>
    %39 = vector.shape_cast %38 : vector<4x256xf32> to vector<4x1x256xf32>
    %cst_36 = arith.constant 0.000000e+00 : f32
    %40 = vector.broadcast %cst_36 : f32 to vector<4x1x256xf32>
    %41 = arith.maximumf %39, %40 : vector<4x1x256xf32>
    %42 = vector.shape_cast %41 : vector<4x1x256xf32> to vector<4x256xf32>
    %c1_37 = arith.constant 1 : index
    %c1_38 = arith.constant 1 : index
    %c1_39 = arith.constant 1 : index
    %c0_40 = arith.constant 0 : index
    %c0_41 = arith.constant 0 : index
    %43 = vector.load %arg3[%c1_37, %c1_38, %c1_39, %c0_40, %c0_41] : memref<3x2x2x256x256xbf16, #tpu.memory_space<vmem>>, vector<1x1x1x256x256xbf16>
    %44 = vector.shape_cast %43 : vector<1x1x1x256x256xbf16> to vector<256x256xbf16>
    %45 = arith.extf %44 : vector<256x256xbf16> to vector<256x256xf32>
    %cst_42 = arith.constant dense<0.000000e+00> : vector<4x256xf32>
    %46 = tpu.matmul %42, %45, %cst_42 {dimension_numbers = #tpu.dot_dimension_numbers<[1], [0], [0], [1], [0, 0, 1, 1], [], []>} : vector<4x256xf32>, vector<256x256xf32>, vector<4x256xf32> -> vector<4x256xf32>
    %c1_43 = arith.constant 1 : index
    %c1_44 = arith.constant 1 : index
    %c0_45 = arith.constant 0 : index
    %c0_46 = arith.constant 0 : index
    %47 = vector.load %arg4[%c1_43, %c1_44, %c0_45, %c0_46] : memref<3x2x1x256xf32, #tpu.memory_space<vmem>>, vector<1x1x1x256xf32>
    %48 = vector.shape_cast %47 : vector<1x1x1x256xf32> to vector<1x256xf32>
    %49 = vector.broadcast %48 : vector<1x256xf32> to vector<4x256xf32>
    %50 = arith.addf %46, %49 : vector<4x256xf32>
    %51 = vector.shape_cast %50 : vector<4x256xf32> to vector<4x1x256xf32>
    %cst_47 = arith.constant 0.000000e+00 : f32
    %52 = vector.broadcast %cst_47 : f32 to vector<4x1x256xf32>
    %53 = arith.maximumf %51, %52 : vector<4x1x256xf32>
    %54 = arith.addf %53, %29 : vector<4x1x256xf32>
    %cst_48 = arith.constant 0.000000e+00 : f32
    %55 = vector.broadcast %cst_48 : f32 to vector<4x1x256xf32>
    %56 = arith.maximumf %54, %55 : vector<4x1x256xf32>
    %57 = vector.shape_cast %56 : vector<4x1x256xf32> to vector<4x256xf32>
    %c2 = arith.constant 2 : index
    %c0_49 = arith.constant 0 : index
    %c1_50 = arith.constant 1 : index
    %c0_51 = arith.constant 0 : index
    %c0_52 = arith.constant 0 : index
    %58 = vector.load %arg3[%c2, %c0_49, %c1_50, %c0_51, %c0_52] : memref<3x2x2x256x256xbf16, #tpu.memory_space<vmem>>, vector<1x1x1x256x256xbf16>
    %59 = vector.shape_cast %58 : vector<1x1x1x256x256xbf16> to vector<256x256xbf16>
    %60 = arith.extf %59 : vector<256x256xbf16> to vector<256x256xf32>
    %cst_53 = arith.constant dense<0.000000e+00> : vector<4x256xf32>
    %61 = tpu.matmul %57, %60, %cst_53 {dimension_numbers = #tpu.dot_dimension_numbers<[1], [0], [0], [1], [0, 0, 1, 1], [], []>} : vector<4x256xf32>, vector<256x256xf32>, vector<4x256xf32> -> vector<4x256xf32>
    %c2_54 = arith.constant 2 : index
    %c0_55 = arith.constant 0 : index
    %c0_56 = arith.constant 0 : index
    %c0_57 = arith.constant 0 : index
    %62 = vector.load %arg4[%c2_54, %c0_55, %c0_56, %c0_57] : memref<3x2x1x256xf32, #tpu.memory_space<vmem>>, vector<1x1x1x256xf32>
    %63 = vector.shape_cast %62 : vector<1x1x1x256xf32> to vector<1x256xf32>
    %64 = vector.broadcast %63 : vector<1x256xf32> to vector<4x256xf32>
    %65 = arith.addf %61, %64 : vector<4x256xf32>
    %66 = vector.shape_cast %65 : vector<4x256xf32> to vector<4x1x256xf32>
    %cst_58 = arith.constant 0.000000e+00 : f32
    %67 = vector.broadcast %cst_58 : f32 to vector<4x1x256xf32>
    %68 = arith.maximumf %66, %67 : vector<4x1x256xf32>
    %69 = vector.shape_cast %68 : vector<4x1x256xf32> to vector<4x256xf32>
    %c2_59 = arith.constant 2 : index
    %c1_60 = arith.constant 1 : index
    %c1_61 = arith.constant 1 : index
    %c0_62 = arith.constant 0 : index
    %c0_63 = arith.constant 0 : index
    %70 = vector.load %arg3[%c2_59, %c1_60, %c1_61, %c0_62, %c0_63] : memref<3x2x2x256x256xbf16, #tpu.memory_space<vmem>>, vector<1x1x1x256x256xbf16>
    %71 = vector.shape_cast %70 : vector<1x1x1x256x256xbf16> to vector<256x256xbf16>
    %72 = arith.extf %71 : vector<256x256xbf16> to vector<256x256xf32>
    %cst_64 = arith.constant dense<0.000000e+00> : vector<4x256xf32>
    %73 = tpu.matmul %69, %72, %cst_64 {dimension_numbers = #tpu.dot_dimension_numbers<[1], [0], [0], [1], [0, 0, 1, 1], [], []>} : vector<4x256xf32>, vector<256x256xf32>, vector<4x256xf32> -> vector<4x256xf32>
    %c2_65 = arith.constant 2 : index
    %c1_66 = arith.constant 1 : index
    %c0_67 = arith.constant 0 : index
    %c0_68 = arith.constant 0 : index
    %74 = vector.load %arg4[%c2_65, %c1_66, %c0_67, %c0_68] : memref<3x2x1x256xf32, #tpu.memory_space<vmem>>, vector<1x1x1x256xf32>
    %75 = vector.shape_cast %74 : vector<1x1x1x256xf32> to vector<1x256xf32>
    %76 = vector.broadcast %75 : vector<1x256xf32> to vector<4x256xf32>
    %77 = arith.addf %73, %76 : vector<4x256xf32>
    %78 = vector.shape_cast %77 : vector<4x256xf32> to vector<4x1x256xf32>
    %cst_69 = arith.constant 0.000000e+00 : f32
    %79 = vector.broadcast %cst_69 : f32 to vector<4x1x256xf32>
    %80 = arith.maximumf %78, %79 : vector<4x1x256xf32>
    %81 = arith.addf %80, %56 : vector<4x1x256xf32>
    %cst_70 = arith.constant 0.000000e+00 : f32
    %82 = vector.broadcast %cst_70 : f32 to vector<4x1x256xf32>
    %83 = arith.maximumf %81, %82 : vector<4x1x256xf32>
    %84 = vector.shape_cast %83 : vector<4x1x256xf32> to vector<4x256xf32>
    %85 = tpu.iota {dimensions = array<i32: 0>} : vector<256x256xi32>
    %86 = tpu.iota {dimensions = array<i32: 1>} : vector<256x256xi32>
    %87 = arith.cmpi eq, %85, %86 : vector<256x256xi32>
    %c0_71 = arith.constant 0 : index
    %c0_72 = arith.constant 0 : index
    %88 = vector.load %arg5[%c0_71, %c0_72] : memref<1x256xf32, #tpu.memory_space<vmem>>, vector<1x256xf32>
    %89 = vector.shape_cast %88 : vector<1x256xf32> to vector<1x256xf32>
    %90 = vector.broadcast %89 : vector<1x256xf32> to vector<256x256xf32>
    %c0_73 = arith.constant 0 : index
    %c0_74 = arith.constant 0 : index
    %91 = vector.load %arg6[%c0_73, %c0_74] : memref<1x256xf32, #tpu.memory_space<vmem>>, vector<1x256xf32>
    %92 = vector.extract_strided_slice %84 {offsets = [0, 0], sizes = [1, 256], strides = [1, 1]} : vector<4x256xf32> to vector<1x256xf32>
    %cst_75 = arith.constant 0.000000e+00 : f32
    %93 = vector.shape_cast %92 : vector<1x256xf32> to vector<1x256xf32>
    %94 = vector.broadcast %93 : vector<1x256xf32> to vector<256x256xf32>
    %95 = vector.broadcast %cst_75 : f32 to vector<256x256xf32>
    %96 = arith.select %87, %94, %95 : vector<256x256xi1>, vector<256x256xf32>
    %cst_76 = arith.constant dense<0.000000e+00> : vector<256x256xf32>
    %97 = tpu.matmul %96, %90, %cst_76 {dimension_numbers = #tpu.dot_dimension_numbers<[1], [0], [0], [1], [0, 0, 1, 1], [], []>} : vector<256x256xf32>, vector<256x256xf32>, vector<256x256xf32> -> vector<256x256xf32>
    %98 = vector.broadcast %91 : vector<1x256xf32> to vector<256x256xf32>
    %99 = arith.addf %97, %98 : vector<256x256xf32>
    %c0_77 = arith.constant 0 : index
    %c0_78 = arith.constant 0 : index
    %c0_79 = arith.constant 0 : index
    %100 = vector.load %arg7[%c0_77, %c0_78, %c0_79] : memref<4x256x256xf32, #tpu.memory_space<vmem>>, vector<1x256x256xf32>
    %101 = vector.shape_cast %100 : vector<1x256x256xf32> to vector<256x256xf32>
    %102 = vector.shape_cast %99 : vector<256x256xf32> to vector<1x256x256xf32>
    tpu.vector_store %arg7[%c0_77, %c0_78, %c0_79], %102 {strides = array<i32>} : memref<4x256x256xf32, #tpu.memory_space<vmem>>, vector<1x256x256xf32>,
    %103 = vector.extract_strided_slice %84 {offsets = [1, 0], sizes = [1, 256], strides = [1, 1]} : vector<4x256xf32> to vector<1x256xf32>
    %cst_80 = arith.constant 0.000000e+00 : f32
    %104 = vector.shape_cast %103 : vector<1x256xf32> to vector<1x256xf32>
    %105 = vector.broadcast %104 : vector<1x256xf32> to vector<256x256xf32>
    %106 = vector.broadcast %cst_80 : f32 to vector<256x256xf32>
    %107 = arith.select %87, %105, %106 : vector<256x256xi1>, vector<256x256xf32>
    %cst_81 = arith.constant dense<0.000000e+00> : vector<256x256xf32>
    %108 = tpu.matmul %107, %90, %cst_81 {dimension_numbers = #tpu.dot_dimension_numbers<[1], [0], [0], [1], [0, 0, 1, 1], [], []>} : vector<256x256xf32>, vector<256x256xf32>, vector<256x256xf32> -> vector<256x256xf32>
    %109 = vector.broadcast %91 : vector<1x256xf32> to vector<256x256xf32>
    %110 = arith.addf %108, %109 : vector<256x256xf32>
    %c1_82 = arith.constant 1 : index
    %c0_83 = arith.constant 0 : index
    %c0_84 = arith.constant 0 : index
    %111 = vector.load %arg7[%c1_82, %c0_83, %c0_84] : memref<4x256x256xf32, #tpu.memory_space<vmem>>, vector<1x256x256xf32>
    %112 = vector.shape_cast %111 : vector<1x256x256xf32> to vector<256x256xf32>
    %113 = vector.shape_cast %110 : vector<256x256xf32> to vector<1x256x256xf32>
    tpu.vector_store %arg7[%c1_82, %c0_83, %c0_84], %113 {strides = array<i32>} : memref<4x256x256xf32, #tpu.memory_space<vmem>>, vector<1x256x256xf32>,
    %114 = vector.extract_strided_slice %84 {offsets = [2, 0], sizes = [1, 256], strides = [1, 1]} : vector<4x256xf32> to vector<1x256xf32>
    %cst_85 = arith.constant 0.000000e+00 : f32
    %115 = vector.shape_cast %114 : vector<1x256xf32> to vector<1x256xf32>
    %116 = vector.broadcast %115 : vector<1x256xf32> to vector<256x256xf32>
    %117 = vector.broadcast %cst_85 : f32 to vector<256x256xf32>
    %118 = arith.select %87, %116, %117 : vector<256x256xi1>, vector<256x256xf32>
    %cst_86 = arith.constant dense<0.000000e+00> : vector<256x256xf32>
    %119 = tpu.matmul %118, %90, %cst_86 {dimension_numbers = #tpu.dot_dimension_numbers<[1], [0], [0], [1], [0, 0, 1, 1], [], []>} : vector<256x256xf32>, vector<256x256xf32>, vector<256x256xf32> -> vector<256x256xf32>
    %120 = vector.broadcast %91 : vector<1x256xf32> to vector<256x256xf32>
    %121 = arith.addf %119, %120 : vector<256x256xf32>
    %c2_87 = arith.constant 2 : index
    %c0_88 = arith.constant 0 : index
    %c0_89 = arith.constant 0 : index
    %122 = vector.load %arg7[%c2_87, %c0_88, %c0_89] : memref<4x256x256xf32, #tpu.memory_space<vmem>>, vector<1x256x256xf32>
    %123 = vector.shape_cast %122 : vector<1x256x256xf32> to vector<256x256xf32>
    %124 = vector.shape_cast %121 : vector<256x256xf32> to vector<1x256x256xf32>
    tpu.vector_store %arg7[%c2_87, %c0_88, %c0_89], %124 {strides = array<i32>} : memref<4x256x256xf32, #tpu.memory_space<vmem>>, vector<1x256x256xf32>,
    %125 = vector.extract_strided_slice %84 {offsets = [3, 0], sizes = [1, 256], strides = [1, 1]} : vector<4x256xf32> to vector<1x256xf32>
    %cst_90 = arith.constant 0.000000e+00 : f32
    %126 = vector.shape_cast %125 : vector<1x256xf32> to vector<1x256xf32>
    %127 = vector.broadcast %126 : vector<1x256xf32> to vector<256x256xf32>
    %128 = vector.broadcast %cst_90 : f32 to vector<256x256xf32>
    %129 = arith.select %87, %127, %128 : vector<256x256xi1>, vector<256x256xf32>
    %cst_91 = arith.constant dense<0.000000e+00> : vector<256x256xf32>
    %130 = tpu.matmul %129, %90, %cst_91 {dimension_numbers = #tpu.dot_dimension_numbers<[1], [0], [0], [1], [0, 0, 1, 1], [], []>} : vector<256x256xf32>, vector<256x256xf32>, vector<256x256xf32> -> vector<256x256xf32>
    %131 = vector.broadcast %91 : vector<1x256xf32> to vector<256x256xf32>
    %132 = arith.addf %130, %131 : vector<256x256xf32>
    %c3 = arith.constant 3 : index
    %c0_92 = arith.constant 0 : index
    %c0_93 = arith.constant 0 : index
    %133 = vector.load %arg7[%c3, %c0_92, %c0_93] : memref<4x256x256xf32, #tpu.memory_space<vmem>>, vector<1x256x256xf32>
    %134 = vector.shape_cast %133 : vector<1x256x256xf32> to vector<256x256xf32>
    %135 = vector.shape_cast %132 : vector<256x256xf32> to vector<1x256x256xf32>
    tpu.vector_store %arg7[%c3, %c0_92, %c0_93], %135 {strides = array<i32>} : memref<4x256x256xf32, #tpu.memory_space<vmem>>, vector<1x256x256xf32>,
    return
  }
  func.func @transform_0(%arg0: i32) -> (i32, i32, i32) {
    %c0_i32 = arith.constant 0 : i32
    %c0_i32_0 = arith.constant 0 : i32
    %c0_i32_1 = arith.constant 0 : i32
    %c0_i32_2 = arith.constant 0 : i32
    return %c0_i32, %c0_i32_0, %c0_i32_1 : i32, i32, i32
  }
  func.func @transform_1(%arg0: i32) -> (i32, i32, i32) {
    %c0_i32 = arith.constant 0 : i32
    %c0_i32_0 = arith.constant 0 : i32
    %c0_i32_1 = arith.constant 0 : i32
    %c0_i32_2 = arith.constant 0 : i32
    return %c0_i32, %c0_i32_0, %c0_i32_1 : i32, i32, i32
  }
  func.func @transform_2(%arg0: i32) -> (i32, i32, i32, i32, i32) {
    %c0_i32 = arith.constant 0 : i32
    %c0_i32_0 = arith.constant 0 : i32
    %c0_i32_1 = arith.constant 0 : i32
    %c0_i32_2 = arith.constant 0 : i32
    %c0_i32_3 = arith.constant 0 : i32
    %c0_i32_4 = arith.constant 0 : i32
    return %c0_i32, %c0_i32_0, %c0_i32_1, %c0_i32_2, %c0_i32_3 : i32, i32, i32, i32, i32
  }
  func.func @transform_3(%arg0: i32) -> (i32, i32, i32, i32) {
    %c0_i32 = arith.constant 0 : i32
    %c0_i32_0 = arith.constant 0 : i32
    %c0_i32_1 = arith.constant 0 : i32
    %c0_i32_2 = arith.constant 0 : i32
    %c0_i32_3 = arith.constant 0 : i32
    return %c0_i32, %c0_i32_0, %c0_i32_1, %c0_i32_2 : i32, i32, i32, i32
  }
  func.func @transform_4(%arg0: i32) -> (i32, i32) {
    %c0_i32 = arith.constant 0 : i32
    %c0_i32_0 = arith.constant 0 : i32
    %c0_i32_1 = arith.constant 0 : i32
    return %c0_i32, %c0_i32_0 : i32, i32
  }
  func.func @transform_5(%arg0: i32) -> (i32, i32) {
    %c0_i32 = arith.constant 0 : i32
    %c0_i32_0 = arith.constant 0 : i32
    %c0_i32_1 = arith.constant 0 : i32
    return %c0_i32, %c0_i32_0 : i32, i32
  }
  func.func @transform_6(%arg0: i32) -> (i32, i32, i32) {
    %c0_i32 = arith.constant 0 : i32
    %c0_i32_0 = arith.constant 0 : i32
    %c0_i32_1 = arith.constant 0 : i32
    %c0_i32_2 = arith.constant 0 : i32
    return %c0_i32, %c0_i32_0, %c0_i32_1 : i32, i32, i32
  }
}

</mosaic_0001>

<llo_original>
// kernel: tpu_custom_call.1
$region0: #{tpu_custom_call.1}
  #allocation0 [shape = 'u32[]', space=smem, size = 0x4, offset = 0x4, fixed_abs, tag = 'smem constant byte address 0x4 - core index']
  #allocation1 [shape = 'u32[144,128]{1,0:T(1,128)}', space=vmem, size = 0x12000, scoped, tag = 'internal scratch']
  %s0 = inlined_call_operand.hbm [shape: f32[4,1,256], index: 0, kind: input, shape index: {}]
  %s1 = inlined_call_operand.hbm [shape: f32[4,1,256], index: 1, kind: input, shape index: {}]
  %s2 = inlined_call_operand.hbm [shape: bf16[3,2,2,256,256], index: 2, kind: input, shape index: {}]
  %s3 = inlined_call_operand.hbm [shape: f32[3,2,1,256], index: 3, kind: input, shape index: {}]
  %s4 = inlined_call_operand.hbm [shape: f32[1,256], index: 4, kind: input, shape index: {}]
  %s5 = inlined_call_operand.hbm [shape: f32[1,256], index: 5, kind: input, shape index: {}]
  %s6 = inlined_call_operand.hbm [shape: f32[4,256,256], index: 6, kind: output, shape index: {}]
  %s7 = sld [smem:[#allocation0]]
  $region58: #{tpu_custom_call.1} parent=0
    _
  %s9 = ssub.s32 1, %s7
  %s10 = scalar_select 0, %s9, %s7
  $region1: #{tpu_custom_call.1} parent=0
    #allocation2 [shape = 'u8[4096]{0}', space=vmem, size = 0x1000, scoped, tag = 'input window, operand 0, single buffered']
    #allocation3 [shape = 's32[1]{0}', space=sflag, size = 0x4, scoped, tag = 'scoped memory for tpu_custom_call.1']
    #allocation4 [shape = 's32[1]{0}', space=sflag, size = 0x4, scoped, tag = 'scoped memory for tpu_custom_call.1']
    #allocation5 [shape = 'u8[4096]{0}', space=vmem, size = 0x1000, scoped, tag = 'input window, operand 1, single buffered']
    #allocation6 [shape = 's32[1]{0}', space=sflag, size = 0x4, scoped, tag = 'scoped memory for tpu_custom_call.1']
    #allocation7 [shape = 'u8[1572864]{0}', space=vmem, size = 0x180000, scoped, tag = 'input window, operand 2, single buffered']
    #allocation8 [shape = 'u8[6144]{0}', space=vmem, size = 0x1800, scoped, tag = 'input window, operand 3, single buffered']
    #allocation9 [shape = 's32[1]{0}', space=sflag, size = 0x4, scoped, tag = 'scoped memory for tpu_custom_call.1']
    #allocation10 [shape = 'u8[1024]{0}', space=vmem, size = 0x400, scoped, tag = 'input window, operand 4, single buffered']
    #allocation11 [shape = 'u8[1024]{0}', space=vmem, size = 0x400, scoped, tag = 'input window, operand 5, single buffered']
    #allocation12 [shape = 's32[1]{0}', space=sflag, size = 0x4, scoped, tag = 'scoped memory for tpu_custom_call.1']
    #allocation13 [shape = 'u8[1048576]{0}', space=vmem, size = 0x100000, scoped, tag = 'output window, operand 0, single buffered']
    %11 = vsyncpa [#allocation3], 0
    %12 = vsyncpa [#allocation6], 0
    %13 = vsyncpa [#allocation9], 0
    %14 = vsyncpa [#allocation12], 0
    %15 = vsyncpa [#allocation4], 0
    // Predicated region
    $region2: #{tpu_custom_call.1} parent=1 // pred_check
      _
    $region3: #{tpu_custom_call.1} parent=1 // pred_check_branch
      %17 = sbr.rel (0) target = $region5
    $region4: #{tpu_custom_call.1} parent=1 // pred_region
      %s19 = ssub.s32 128, 128
      %20 = vsyncadd [#allocation3], %s19
      %s21 = sshll.u32 [#allocation2], 4
      %s22 = int_to_ptr.vmem [resolvable:$true] %s21
      %27 = dma.hbm_to_vmem [thread:$0]  %s0, 128, %s22, [#allocation3], 32, 32, 2
    $region5: #{tpu_custom_call.1} parent=1 // pred_fallthru
      _
    // Predicated region
    $region6: #{tpu_custom_call.1} parent=1 // pred_check
      _
    $region7: #{tpu_custom_call.1} parent=1 // pred_check_branch
      %29 = sbr.rel (0) target = $region9
    $region8: #{tpu_custom_call.1} parent=1 // pred_region
      %s31 = ssub.s32 128, 128
      %32 = vsyncadd [#allocation6], %s31
      %s33 = sshll.u32 [#allocation5], 4
      %s34 = int_to_ptr.vmem [resolvable:$true] %s33
      %39 = dma.hbm_to_vmem [thread:$0]  %s1, 128, %s34, [#allocation6], 32, 32, 2
    $region9: #{tpu_custom_call.1} parent=1 // pred_fallthru
      _
    // Predicated region
    $region10: #{tpu_custom_call.1} parent=1 // pred_check
      _
    $region11: #{tpu_custom_call.1} parent=1 // pred_check_branch
      %41 = sbr.rel (0) target = $region13
    $region12: #{tpu_custom_call.1} parent=1 // pred_region
      %s43 = ssub.s32 49152, 49152
      %44 = vsyncadd [#allocation6], %s43
      %s45 = sshll.u32 [#allocation7], 4
      %s46 = int_to_ptr.vmem [resolvable:$true] %s45
      %51 = dma.hbm_to_vmem [thread:$0]  %s2, 49152, %s46, [#allocation6], 128, 128, 8
    $region13: #{tpu_custom_call.1} parent=1 // pred_fallthru
      _
    // Predicated region
    $region14: #{tpu_custom_call.1} parent=1 // pred_check
      _
    $region15: #{tpu_custom_call.1} parent=1 // pred_check_branch
      %53 = sbr.rel (0) target = $region17
    $region16: #{tpu_custom_call.1} parent=1 // pred_region
      %s55 = ssub.s32 192, 192
      %56 = vsyncadd [#allocation9], %s55
      %s57 = sshll.u32 [#allocation8], 4
      %s58 = int_to_ptr.vmem [resolvable:$true] %s57
      %63 = dma.hbm_to_vmem [thread:$0]  %s3, 192, %s58, [#allocation9], 32, 32, 2
    $region17: #{tpu_custom_call.1} parent=1 // pred_fallthru
      _
    // Predicated region
    $region18: #{tpu_custom_call.1} parent=1 // pred_check
      _
    $region19: #{tpu_custom_call.1} parent=1 // pred_check_branch
      %65 = sbr.rel (0) target = $region21
    $region20: #{tpu_custom_call.1} parent=1 // pred_region
      %s67 = ssub.s32 32, 32
      %68 = vsyncadd [#allocation9], %s67
      %s70 = sshll.u32 [#allocation10], 4
      %s71 = int_to_ptr.vmem [resolvable:$true] %s70
      %73 = dma.hbm_to_vmem [thread:$0]  %s4, 32, %s71, [#allocation9]
    $region21: #{tpu_custom_call.1} parent=1 // pred_fallthru
      _
    // Predicated region
    $region22: #{tpu_custom_call.1} parent=1 // pred_check
      _
    $region23: #{tpu_custom_call.1} parent=1 // pred_check_branch
      %75 = sbr.rel (0) target = $region25
    $region24: #{tpu_custom_call.1} parent=1 // pred_region
      %s77 = ssub.s32 32, 32
      %78 = vsyncadd [#allocation12], %s77
      %s80 = sshll.u32 [#allocation11], 4
      %s81 = int_to_ptr.vmem [resolvable:$true] %s80
      %83 = dma.hbm_to_vmem [thread:$0]  %s5, 32, %s81, [#allocation12]
    $region25: #{tpu_custom_call.1} parent=1 // pred_fallthru
      _
    // Predicated region
    $region26: #{tpu_custom_call.1} parent=1 // pred_check
      _
    $region27: #{tpu_custom_call.1} parent=1 // pred_check_branch
      %85 = sbr.rel (0) target = $region29
    $region28: #{tpu_custom_call.1} parent=1 // pred_region
      %86 = dma.done [#allocation3], 128
    $region29: #{tpu_custom_call.1} parent=1 // pred_fallthru
      _
    // Predicated region
    $region30: #{tpu_custom_call.1} parent=1 // pred_check
      _
    $region31: #{tpu_custom_call.1} parent=1 // pred_check_branch
      %88 = sbr.rel (0) target = $region33
    $region32: #{tpu_custom_call.1} parent=1 // pred_region
      %89 = dma.done [#allocation6], 128
    $region33: #{tpu_custom_call.1} parent=1 // pred_fallthru
      _
    // Predicated region
    $region34: #{tpu_custom_call.1} parent=1 // pred_check
      _
    $region35: #{tpu_custom_call.1} parent=1 // pred_check_branch
      %91 = sbr.rel (0) target = $region37
    $region36: #{tpu_custom_call.1} parent=1 // pred_region
      %92 = dma.done [#allocation6], 49152
    $region37: #{tpu_custom_call.1} parent=1 // pred_fallthru
      _
    // Predicated region
    $region38: #{tpu_custom_call.1} parent=1 // pred_check
      _
    $region39: #{tpu_custom_call.1} parent=1 // pred_check_branch
      %94 = sbr.rel (0) target = $region41
    $region40: #{tpu_custom_call.1} parent=1 // pred_region
      %95 = dma.done [#allocation9], 192
    $region41: #{tpu_custom_call.1} parent=1 // pred_fallthru
      _
    // Predicated region
    $region42: #{tpu_custom_call.1} parent=1 // pred_check
      _
    $region43: #{tpu_custom_call.1} parent=1 // pred_check_branch
      %97 = sbr.rel (0) target = $region45
    $region44: #{tpu_custom_call.1} parent=1 // pred_region
      %98 = dma.done [#allocation9], 32
    $region45: #{tpu_custom_call.1} parent=1 // pred_fallthru
      _
    // Predicated region
    $region46: #{tpu_custom_call.1} parent=1 // pred_check
      _
    $region47: #{tpu_custom_call.1} parent=1 // pred_check_branch
      %100 = sbr.rel (0) target = $region49
    $region48: #{tpu_custom_call.1} parent=1 // pred_region
      %101 = dma.done [#allocation12], 32
    $region49: #{tpu_custom_call.1} parent=1 // pred_fallthru
      _
    %v102 = vld [vmem:[#allocation2] sm:$0x3]
    %v103 = vld [vmem:[#allocation2 + $0x2] sm:$0x3]
    %v104 = vld [vmem:[#allocation2 + $0x4] sm:$0x3]
    %v105 = vld [vmem:[#allocation2 + $0x6] sm:$0x3]
    %v106 = vld [vmem:[#allocation5] sm:$0x3]
    %v107 = vld [vmem:[#allocation5 + $0x2] sm:$0x3]
    %v108 = vld [vmem:[#allocation5 + $0x4] sm:$0x3]
    %v109 = vld [vmem:[#allocation5 + $0x6] sm:$0x3]
    %v110 = vadd.f32 %v102, %v106
    %v111 = vadd.f32 %v103, %v107
    %v112 = vadd.f32 %v104, %v108
    %v113 = vadd.f32 %v105, %v109
    %s114 = scalar_lea.vmem [#allocation7], 256
    %v115 = vld [vmem:[%s114] sm:$0xff]
    %v116 = vld [vmem:[%s114 + $0x8] sm:$0xff]
    %v117 = vld [vmem:[%s114 + $0x10] sm:$0xff]
    %v118 = vld [vmem:[%s114 + $0x18] sm:$0xff]
    %v119 = vld [vmem:[%s114 + $0x20] sm:$0xff]
    %v120 = vld [vmem:[%s114 + $0x28] sm:$0xff]
    %v121 = vld [vmem:[%s114 + $0x30] sm:$0xff]
    %v122 = vld [vmem:[%s114 + $0x38] sm:$0xff]
    %v123 = vld [vmem:[%s114 + $0x40] sm:$0xff]
    %v124 = vld [vmem:[%s114 + $0x48] sm:$0xff]
    %v125 = vld [vmem:[%s114 + $0x50] sm:$0xff]
    %v126 = vld [vmem:[%s114 + $0x58] sm:$0xff]
    %v127 = vld [vmem:[%s114 + $0x60] sm:$0xff]
    %v128 = vld [vmem:[%s114 + $0x68] sm:$0xff]
    %v129 = vld [vmem:[%s114 + $0x70] sm:$0xff]
    %v130 = vld [vmem:[%s114 + $0x78] sm:$0xff]
    %v131 = vld [vmem:[%s114 + $0x80] sm:$0xff]
    %v132 = vld [vmem:[%s114 + $0x88] sm:$0xff]
    %v133 = vld [vmem:[%s114 + $0x90] sm:$0xff]
    %v134 = vld [vmem:[%s114 + $0x98] sm:$0xff]
    %v135 = vld [vmem:[%s114 + $0xa0] sm:$0xff]
    %v136 = vld [vmem:[%s114 + $0xa8] sm:$0xff]
    %v137 = vld [vmem:[%s114 + $0xb0] sm:$0xff]
    %v138 = vld [vmem:[%s114 + $0xb8] sm:$0xff]
    %v139 = vld [vmem:[%s114 + $0xc0] sm:$0xff]
    %v140 = vld [vmem:[%s114 + $0xc8] sm:$0xff]
    %v141 = vld [vmem:[%s114 + $0xd0] sm:$0xff]
    %v142 = vld [vmem:[%s114 + $0xd8] sm:$0xff]
    %v143 = vld [vmem:[%s114 + $0xe0] sm:$0xff]
    %v144 = vld [vmem:[%s114 + $0xe8] sm:$0xff]
    %v145 = vld [vmem:[%s114 + $0xf0] sm:$0xff]
    %v146 = vld [vmem:[%s114 + $0xf8] sm:$0xff]
    %v147 = vunpack.c.l.bf16 %v115
    %v148 = vunpack.c.h.bf16 %v115
    %v149 = vunpack.c.l.bf16 %v116
    %v150 = vunpack.c.h.bf16 %v116
    %v151 = vunpack.c.l.bf16 %v117
    %v152 = vunpack.c.h.bf16 %v117
    %v153 = vunpack.c.l.bf16 %v118
    %v154 = vunpack.c.h.bf16 %v118
    %v155 = vunpack.c.l.bf16 %v119
    %v156 = vunpack.c.h.bf16 %v119
    %v157 = vunpack.c.l.bf16 %v120
    %v158 = vunpack.c.h.bf16 %v120
    %v159 = vunpack.c.l.bf16 %v121
    %v160 = vunpack.c.h.bf16 %v121
    %v161 = vunpack.c.l.bf16 %v122
    %v162 = vunpack.c.h.bf16 %v122
    %v163 = vunpack.c.l.bf16 %v123
    %v164 = vunpack.c.h.bf16 %v123
    %v165 = vunpack.c.l.bf16 %v124
    %v166 = vunpack.c.h.bf16 %v124
    %v167 = vunpack.c.l.bf16 %v125
    %v168 = vunpack.c.h.bf16 %v125
    %v169 = vunpack.c.l.bf16 %v126
    %v170 = vunpack.c.h.bf16 %v126
    %v171 = vunpack.c.l.bf16 %v127
    %v172 = vunpack.c.h.bf16 %v127
    %v173 = vunpack.c.l.bf16 %v128
    %v174 = vunpack.c.h.bf16 %v128
    %v175 = vunpack.c.l.bf16 %v129
    %v176 = vunpack.c.h.bf16 %v129
    %v177 = vunpack.c.l.bf16 %v130
    %v178 = vunpack.c.h.bf16 %v130
    %v179 = vunpack.c.l.bf16 %v131
    %v180 = vunpack.c.h.bf16 %v131
    %v181 = vunpack.c.l.bf16 %v132
    %v182 = vunpack.c.h.bf16 %v132
    %v183 = vunpack.c.l.bf16 %v133
    %v184 = vunpack.c.h.bf16 %v133
    %v185 = vunpack.c.l.bf16 %v134
    %v186 = vunpack.c.h.bf16 %v134
    %v187 = vunpack.c.l.bf16 %v135
    %v188 = vunpack.c.h.bf16 %v135
    %v189 = vunpack.c.l.bf16 %v136
    %v190 = vunpack.c.h.bf16 %v136
    %v191 = vunpack.c.l.bf16 %v137
    %v192 = vunpack.c.h.bf16 %v137
    %v193 = vunpack.c.l.bf16 %v138
    %v194 = vunpack.c.h.bf16 %v138
    %v195 = vunpack.c.l.bf16 %v139
    %v196 = vunpack.c.h.bf16 %v139
    %v197 = vunpack.c.l.bf16 %v140
    %v198 = vunpack.c.h.bf16 %v140
    %v199 = vunpack.c.l.bf16 %v141
    %v200 = vunpack.c.h.bf16 %v141
    %v201 = vunpack.c.l.bf16 %v142
    %v202 = vunpack.c.h.bf16 %v142
    %v203 = vunpack.c.l.bf16 %v143
    %v204 = vunpack.c.h.bf16 %v143
    %v205 = vunpack.c.l.bf16 %v144
    %v206 = vunpack.c.h.bf16 %v144
    %v207 = vunpack.c.l.bf16 %v145
    %v208 = vunpack.c.h.bf16 %v145
    %v209 = vunpack.c.l.bf16 %v146
    %v210 = vunpack.c.h.bf16 %v146
    %v211 = vld [vmem:[#allocation8] sm:$0x3]
    %v213 = vlaneseq
    %v214 = vshrl.u32 %v213, 7
    %v215 = vsub.s32 0, %v214
    %v216 = vrot.slane %v211, %v215
    %v217 = vlaneseq
    %v218 = vshrl.u32 %v217, 7
    %v219 = vsub.s32 1, %v218
    %v220 = vrot.slane %v211, %v219
    %v227 = vcombine.low %v110, %v111
    %v228 = vcombine.low %v112, %v113
    %v230 = vunpack.c.l.s4 1966171168
    %v231 = vunpack.c.0.s8 %v230
    %v232 = vlaneseq
    %v233 = vshrl.u32 %v232, 7
    %v234 = vsub.s32 %v231, %v233
    %v235 = vrot.slane %v227, %v234
    %v237 = vunpack.c.l.s4 1966171168
    %v238 = vunpack.c.0.s8 %v237
    %v239 = vlaneseq
    %v240 = vshrl.u32 %v239, 7
    %v241 = vsub.s32 %v238, %v240
    %v242 = vrot.slane %v228, %v241
    %v243 = vcombine.low %v235, %v242
    %v244 = vcombine.high %v235, %v242
    %v246 = vunpack.c.l.s4 1966171168
    %v247 = vunpack.c.0.s8 %v246
    %v248 = vlaneseq
    %v249 = vshrl.u32 %v248, 7
    %v250 = vsub.s32 %v247, %v249
    %v251 = vrot.slane %v243, %v250
    %v253 = vunpack.c.l.s4 1966171168
    %v254 = vunpack.c.0.s8 %v253
    %v255 = vlaneseq
    %v256 = vshrl.u32 %v255, 7
    %v257 = vsub.s32 %v254, %v256
    %v258 = vrot.slane %v244, %v257
    %261 = vmatprep.subr.mxu0 %v178
    %262 = vmatpush1.msra.mxu0 %v177
    %263 = vmatprep.subr.mxu0 %v176
    %264 = vmatpush1.msra.mxu0 %v175
    %265 = vmatprep.subr.mxu0 %v174
    %266 = vmatpush1.msra.mxu0 %v173
    %267 = vmatprep.subr.mxu0 %v172
    %268 = vmatpush1.msra.mxu0 %v171
    %269 = vmatprep.subr.mxu0 %v170
    %270 = vmatpush1.msra.mxu0 %v169
    %271 = vmatprep.subr.mxu0 %v168
    %272 = vmatpush1.msra.mxu0 %v167
    %273 = vmatprep.subr.mxu0 %v166
    %274 = vmatpush1.msra.mxu0 %v165
    %275 = vmatprep.subr.mxu0 %v164
    %276 = vmatpush1.msra.mxu0 %v163
    %277 = vmatprep.subr.mxu0 %v162
    %278 = vmatpush1.msra.mxu0 %v161
    %279 = vmatprep.subr.mxu0 %v160
    %280 = vmatpush1.msra.mxu0 %v159
    %281 = vmatprep.subr.mxu0 %v158
    %282 = vmatpush1.msra.mxu0 %v157
    %283 = vmatprep.subr.mxu0 %v156
    %284 = vmatpush1.msra.mxu0 %v155
    %285 = vmatprep.subr.mxu0 %v154
    %286 = vmatpush1.msra.mxu0 %v153
    %287 = vmatprep.subr.mxu0 %v152
    %288 = vmatpush1.msra.mxu0 %v151
    %289 = vmatprep.subr.mxu0 %v150
    %290 = vmatpush1.msra.mxu0 %v149
    %291 = vmatprep.subr.mxu0 %v148
    %292 = vmatpush1.msra.mxu0 %v147
    %293 = vmatprep.subr.mxu0 %v210
    %294 = vmatpush2.msra.mxu0 %v209
    %295 = vmatprep.subr.mxu0 %v208
    %296 = vmatpush2.msra.mxu0 %v207
    %297 = vmatprep.subr.mxu0 %v206
    %298 = vmatpush2.msra.mxu0 %v205
    %299 = vmatprep.subr.mxu0 %v204
    %300 = vmatpush2.msra.mxu0 %v203
    %301 = vmatprep.subr.mxu0 %v202
    %302 = vmatpush2.msra.mxu0 %v201
    %303 = vmatprep.subr.mxu0 %v200
    %304 = vmatpush2.msra.mxu0 %v199
    %305 = vmatprep.subr.mxu0 %v198
    %306 = vmatpush2.msra.mxu0 %v197
    %307 = vmatprep.subr.mxu0 %v196
    %308 = vmatpush2.msra.mxu0 %v195
    %309 = vmatprep.subr.mxu0 %v194
    %310 = vmatpush2.msra.mxu0 %v193
    %311 = vmatprep.subr.mxu0 %v192
    %312 = vmatpush2.msra.mxu0 %v191
    %313 = vmatprep.subr.mxu0 %v190
    %314 = vmatpush2.msra.mxu0 %v189
    %315 = vmatprep.subr.mxu0 %v188
    %316 = vmatpush2.msra.mxu0 %v187
    %317 = vmatprep.subr.mxu0 %v186
    %318 = vmatpush2.msra.mxu0 %v185
    %319 = vmatprep.subr.mxu0 %v184
    %320 = vmatpush2.msra.mxu0 %v183
    %321 = vmatprep.subr.mxu0 %v182
    %322 = vmatpush2.msra.mxu0 %v181
    %323 = vmatprep.subr.mxu0 %v180
    %324 = vmatpush2.msra.mxu0 %v179
    %325 = vmatprep.mubr.f32.mxu0 %v258
    %326 = vmatmul.mubr.f32.gmra.mxu0 %v251
    %v327 = vpop.f32.mrf.mxu0
    %v328 = vadd.f32 %v216, %v327
    %v329 = vpop.f32.mrf.mxu0
    %v330 = vadd.f32 %v220, %v329
    %331 = vdwg.mxu0
    %v334 = vcombine.low %v328, %v330
    %v336 = vunpack.c.l.s4 1966171168
    %v337 = vunpack.c.0.s8 %v336
    %v338 = vlaneseq
    %v339 = vshrl.u32 %v338, 7
    %v340 = vsub.s32 %v337, %v339
    %v341 = vrot.slane %v334, %v340
    %v342 = vcombine.high %v341, %v341
    %v344 = vunpack.c.l.s4 1966171168
    %v345 = vunpack.c.0.s8 %v344
    %v346 = vlaneseq
    %v347 = vshrl.u32 %v346, 7
    %v348 = vsub.s32 %v345, %v347
    %v349 = vrot.slane %v341, %v348
    %v351 = vunpack.c.l.s4 1966171168
    %v352 = vunpack.c.0.s8 %v351
    %v353 = vlaneseq
    %v354 = vshrl.u32 %v353, 7
    %v355 = vsub.s32 %v352, %v354
    %v356 = vrot.slane %v342, %v355
    %v357 = vcombine.high %v349, %v349
    %v358 = vcombine.high %v356, %v356
    %v363 = vmax.f32 %v349, 0.0
    %v364 = vmax.f32 %v356, 0.0
    %v365 = vmax.f32 %v357, 0.0
    %v366 = vmax.f32 %v358, 0.0
    %s367 = scalar_lea.vmem [#allocation7], 768
    %v368 = vld [vmem:[%s367] sm:$0xff]
    %v369 = vld [vmem:[%s367 + $0x8] sm:$0xff]
    %v370 = vld [vmem:[%s367 + $0x10] sm:$0xff]
    %v371 = vld [vmem:[%s367 + $0x18] sm:$0xff]
    %v372 = vld [vmem:[%s367 + $0x20] sm:$0xff]
    %v373 = vld [vmem:[%s367 + $0x28] sm:$0xff]
    %v374 = vld [vmem:[%s367 + $0x30] sm:$0xff]
    %v375 = vld [vmem:[%s367 + $0x38] sm:$0xff]
    %v376 = vld [vmem:[%s367 + $0x40] sm:$0xff]
    %v377 = vld [vmem:[%s367 + $0x48] sm:$0xff]
    %v378 = vld [vmem:[%s367 + $0x50] sm:$0xff]
    %v379 = vld [vmem:[%s367 + $0x58] sm:$0xff]
    %v380 = vld [vmem:[%s367 + $0x60] sm:$0xff]
    %v381 = vld [vmem:[%s367 + $0x68] sm:$0xff]
    %v382 = vld [vmem:[%s367 + $0x70] sm:$0xff]
    %v383 = vld [vmem:[%s367 + $0x78] sm:$0xff]
    %v384 = vld [vmem:[%s367 + $0x80] sm:$0xff]
    %v385 = vld [vmem:[%s367 + $0x88] sm:$0xff]
    %v386 = vld [vmem:[%s367 + $0x90] sm:$0xff]
    %v387 = vld [vmem:[%s367 + $0x98] sm:$0xff]
    %v388 = vld [vmem:[%s367 + $0xa0] sm:$0xff]
    %v389 = vld [vmem:[%s367 + $0xa8] sm:$0xff]
    %v390 = vld [vmem:[%s367 + $0xb0] sm:$0xff]
    %v391 = vld [vmem:[%s367 + $0xb8] sm:$0xff]
    %v392 = vld [vmem:[%s367 + $0xc0] sm:$0xff]
    %v393 = vld [vmem:[%s367 + $0xc8] sm:$0xff]
    %v394 = vld [vmem:[%s367 + $0xd0] sm:$0xff]
    %v395 = vld [vmem:[%s367 + $0xd8] sm:$0xff]
    %v396 = vld [vmem:[%s367 + $0xe0] sm:$0xff]
    %v397 = vld [vmem:[%s367 + $0xe8] sm:$0xff]
    %v398 = vld [vmem:[%s367 + $0xf0] sm:$0xff]
    %v399 = vld [vmem:[%s367 + $0xf8] sm:$0xff]
    %v400 = vunpack.c.l.bf16 %v368
    %v401 = vunpack.c.h.bf16 %v368
    %v402 = vunpack.c.l.bf16 %v369
    %v403 = vunpack.c.h.bf16 %v369
    %v404 = vunpack.c.l.bf16 %v370
    %v405 = vunpack.c.h.bf16 %v370
    %v406 = vunpack.c.l.bf16 %v371
    %v407 = vunpack.c.h.bf16 %v371
    %v408 = vunpack.c.l.bf16 %v372
    %v409 = vunpack.c.h.bf16 %v372
    %v410 = vunpack.c.l.bf16 %v373
    %v411 = vunpack.c.h.bf16 %v373
    %v412 = vunpack.c.l.bf16 %v374
    %v413 = vunpack.c.h.bf16 %v374
    %v414 = vunpack.c.l.bf16 %v375
    %v415 = vunpack.c.h.bf16 %v375
    %v416 = vunpack.c.l.bf16 %v376
    %v417 = vunpack.c.h.bf16 %v376
    %v418 = vunpack.c.l.bf16 %v377
    %v419 = vunpack.c.h.bf16 %v377
    %v420 = vunpack.c.l.bf16 %v378
    %v421 = vunpack.c.h.bf16 %v378
    %v422 = vunpack.c.l.bf16 %v379
    %v423 = vunpack.c.h.bf16 %v379
    %v424 = vunpack.c.l.bf16 %v380
    %v425 = vunpack.c.h.bf16 %v380
    %v426 = vunpack.c.l.bf16 %v381
    %v427 = vunpack.c.h.bf16 %v381
    %v428 = vunpack.c.l.bf16 %v382
    %v429 = vunpack.c.h.bf16 %v382
    %v430 = vunpack.c.l.bf16 %v383
    %v431 = vunpack.c.h.bf16 %v383
    %v432 = vunpack.c.l.bf16 %v384
    %v433 = vunpack.c.h.bf16 %v384
    %v434 = vunpack.c.l.bf16 %v385
    %v435 = vunpack.c.h.bf16 %v385
    %v436 = vunpack.c.l.bf16 %v386
    %v437 = vunpack.c.h.bf16 %v386
    %v438 = vunpack.c.l.bf16 %v387
    %v439 = vunpack.c.h.bf16 %v387
    %v440 = vunpack.c.l.bf16 %v388
    %v441 = vunpack.c.h.bf16 %v388
    %v442 = vunpack.c.l.bf16 %v389
    %v443 = vunpack.c.h.bf16 %v389
    %v444 = vunpack.c.l.bf16 %v390
    %v445 = vunpack.c.h.bf16 %v390
    %v446 = vunpack.c.l.bf16 %v391
    %v447 = vunpack.c.h.bf16 %v391
    %v448 = vunpack.c.l.bf16 %v392
    %v449 = vunpack.c.h.bf16 %v392
    %v450 = vunpack.c.l.bf16 %v393
    %v451 = vunpack.c.h.bf16 %v393
    %v452 = vunpack.c.l.bf16 %v394
    %v453 = vunpack.c.h.bf16 %v394
    %v454 = vunpack.c.l.bf16 %v395
    %v455 = vunpack.c.h.bf16 %v395
    %v456 = vunpack.c.l.bf16 %v396
    %v457 = vunpack.c.h.bf16 %v396
    %v458 = vunpack.c.l.bf16 %v397
    %v459 = vunpack.c.h.bf16 %v397
    %v460 = vunpack.c.l.bf16 %v398
    %v461 = vunpack.c.h.bf16 %v398
    %v462 = vunpack.c.l.bf16 %v399
    %v463 = vunpack.c.h.bf16 %v399
    %s464 = scalar_lea.vmem [#allocation8], 2
    %v465 = vld [vmem:[%s464] sm:$0x3]
    %v467 = vlaneseq
    %v468 = vshrl.u32 %v467, 7
    %v469 = vsub.s32 0, %v468
    %v470 = vrot.slane %v465, %v469
    %v471 = vlaneseq
    %v472 = vshrl.u32 %v471, 7
    %v473 = vsub.s32 1, %v472
    %v474 = vrot.slane %v465, %v473
    %v481 = vcombine.low %v363, %v364
    %v482 = vcombine.low %v365, %v366
    %v484 = vunpack.c.l.s4 1966171168
    %v485 = vunpack.c.0.s8 %v484
    %v486 = vlaneseq
    %v487 = vshrl.u32 %v486, 7
    %v488 = vsub.s32 %v485, %v487
    %v489 = vrot.slane %v481, %v488
    %v491 = vunpack.c.l.s4 1966171168
    %v492 = vunpack.c.0.s8 %v491
    %v493 = vlaneseq
    %v494 = vshrl.u32 %v493, 7
    %v495 = vsub.s32 %v492, %v494
    %v496 = vrot.slane %v482, %v495
    %v497 = vcombine.low %v489, %v496
    %v498 = vcombine.high %v489, %v496
    %v500 = vunpack.c.l.s4 1966171168
    %v501 = vunpack.c.0.s8 %v500
    %v502 = vlaneseq
    %v503 = vshrl.u32 %v502, 7
    %v504 = vsub.s32 %v501, %v503
    %v505 = vrot.slane %v497, %v504
    %v507 = vunpack.c.l.s4 1966171168
    %v508 = vunpack.c.0.s8 %v507
    %v509 = vlaneseq
    %v510 = vshrl.u32 %v509, 7
    %v511 = vsub.s32 %v508, %v510
    %v512 = vrot.slane %v498, %v511
    %515 = vmatprep.subr.mxu0 %v431
    %516 = vmatpush1.msra.mxu0 %v430
    %517 = vmatprep.subr.mxu0 %v429
    %518 = vmatpush1.msra.mxu0 %v428
    %519 = vmatprep.subr.mxu0 %v427
    %520 = vmatpush1.msra.mxu0 %v426
    %521 = vmatprep.subr.mxu0 %v425
    %522 = vmatpush1.msra.mxu0 %v424
    %523 = vmatprep.subr.mxu0 %v423
    %524 = vmatpush1.msra.mxu0 %v422
    %525 = vmatprep.subr.mxu0 %v421
    %526 = vmatpush1.msra.mxu0 %v420
    %527 = vmatprep.subr.mxu0 %v419
    %528 = vmatpush1.msra.mxu0 %v418
    %529 = vmatprep.subr.mxu0 %v417
    %530 = vmatpush1.msra.mxu0 %v416
    %531 = vmatprep.subr.mxu0 %v415
    %532 = vmatpush1.msra.mxu0 %v414
    %533 = vmatprep.subr.mxu0 %v413
    %534 = vmatpush1.msra.mxu0 %v412
    %535 = vmatprep.subr.mxu0 %v411
    %536 = vmatpush1.msra.mxu0 %v410
    %537 = vmatprep.subr.mxu0 %v409
    %538 = vmatpush1.msra.mxu0 %v408
    %539 = vmatprep.subr.mxu0 %v407
    %540 = vmatpush1.msra.mxu0 %v406
    %541 = vmatprep.subr.mxu0 %v405
    %542 = vmatpush1.msra.mxu0 %v404
    %543 = vmatprep.subr.mxu0 %v403
    %544 = vmatpush1.msra.mxu0 %v402
    %545 = vmatprep.subr.mxu0 %v401
    %546 = vmatpush1.msra.mxu0 %v400
    %547 = vmatprep.subr.mxu0 %v463
    %548 = vmatpush2.msra.mxu0 %v462
    %549 = vmatprep.subr.mxu0 %v461
    %550 = vmatpush2.msra.mxu0 %v460
    %551 = vmatprep.subr.mxu0 %v459
    %552 = vmatpush2.msra.mxu0 %v458
    %553 = vmatprep.subr.mxu0 %v457
    %554 = vmatpush2.msra.mxu0 %v456
    %555 = vmatprep.subr.mxu0 %v455
    %556 = vmatpush2.msra.mxu0 %v454
    %557 = vmatprep.subr.mxu0 %v453
    %558 = vmatpush2.msra.mxu0 %v452
    %559 = vmatprep.subr.mxu0 %v451
    %560 = vmatpush2.msra.mxu0 %v450
    %561 = vmatprep.subr.mxu0 %v449
    %562 = vmatpush2.msra.mxu0 %v448
    %563 = vmatprep.subr.mxu0 %v447
    %564 = vmatpush2.msra.mxu0 %v446
    %565 = vmatprep.subr.mxu0 %v445
    %566 = vmatpush2.msra.mxu0 %v444
    %567 = vmatprep.subr.mxu0 %v443
    %568 = vmatpush2.msra.mxu0 %v442
    %569 = vmatprep.subr.mxu0 %v441
    %570 = vmatpush2.msra.mxu0 %v440
    %571 = vmatprep.subr.mxu0 %v439
    %572 = vmatpush2.msra.mxu0 %v438
    %573 = vmatprep.subr.mxu0 %v437
    %574 = vmatpush2.msra.mxu0 %v436
    %575 = vmatprep.subr.mxu0 %v435
    %576 = vmatpush2.msra.mxu0 %v434
    %577 = vmatprep.subr.mxu0 %v433
    %578 = vmatpush2.msra.mxu0 %v432
    %579 = vmatprep.mubr.f32.mxu0 %v512
    %580 = vmatmul.mubr.f32.gmra.mxu0 %v505
    %v581 = vpop.f32.mrf.mxu0
    %v582 = vadd.f32 %v470, %v581
    %v583 = vpop.f32.mrf.mxu0
    %v584 = vadd.f32 %v474, %v583
    %585 = vdwg.mxu0
    %v588 = vcombine.low %v582, %v584
    %v590 = vunpack.c.l.s4 1966171168
    %v591 = vunpack.c.0.s8 %v590
    %v592 = vlaneseq
    %v593 = vshrl.u32 %v592, 7
    %v594 = vsub.s32 %v591, %v593
    %v595 = vrot.slane %v588, %v594
    %v596 = vcombine.high %v595, %v595
    %v598 = vunpack.c.l.s4 1966171168
    %v599 = vunpack.c.0.s8 %v598
    %v600 = vlaneseq
    %v601 = vshrl.u32 %v600, 7
    %v602 = vsub.s32 %v599, %v601
    %v603 = vrot.slane %v595, %v602
    %v605 = vunpack.c.l.s4 1966171168
    %v606 = vunpack.c.0.s8 %v605
    %v607 = vlaneseq
    %v608 = vshrl.u32 %v607, 7
    %v609 = vsub.s32 %v606, %v608
    %v610 = vrot.slane %v596, %v609
    %v611 = vcombine.high %v603, %v603
    %v612 = vcombine.high %v610, %v610
    %v617 = vmax.f32 %v603, 0.0
    %v618 = vmax.f32 %v610, 0.0
    %v619 = vmax.f32 %v611, 0.0
    %v620 = vmax.f32 %v612, 0.0
    %v621 = vadd.f32 %v617, %v110
    %v622 = vadd.f32 %v618, %v111
    %v623 = vadd.f32 %v619, %v112
    %v624 = vadd.f32 %v620, %v113
    %v625 = vmax.f32 %v621, 0.0
    %v626 = vmax.f32 %v622, 0.0
    %v627 = vmax.f32 %v623, 0.0
    %v628 = vmax.f32 %v624, 0.0
    %s629 = scalar_lea.vmem [#allocation7], 1280
    %v630 = vld [vmem:[%s629] sm:$0xff]
    %v631 = vld [vmem:[%s629 + $0x8] sm:$0xff]
    %v632 = vld [vmem:[%s629 + $0x10] sm:$0xff]
    %v633 = vld [vmem:[%s629 + $0x18] sm:$0xff]
    %v634 = vld [vmem:[%s629 + $0x20] sm:$0xff]
    %v635 = vld [vmem:[%s629 + $0x28] sm:$0xff]
    %v636 = vld [vmem:[%s629 + $0x30] sm:$0xff]
    %v637 = vld [vmem:[%s629 + $0x38] sm:$0xff]
    %v638 = vld [vmem:[%s629 + $0x40] sm:$0xff]
    %v639 = vld [vmem:[%s629 + $0x48] sm:$0xff]
    %v640 = vld [vmem:[%s629 + $0x50] sm:$0xff]
    %v641 = vld [vmem:[%s629 + $0x58] sm:$0xff]
    %v642 = vld [vmem:[%s629 + $0x60] sm:$0xff]
    %v643 = vld [vmem:[%s629 + $0x68] sm:$0xff]
    %v644 = vld [vmem:[%s629 + $0x70] sm:$0xff]
    %v645 = vld [vmem:[%s629 + $0x78] sm:$0xff]
    %v646 = vld [vmem:[%s629 + $0x80] sm:$0xff]
    %v647 = vld [vmem:[%s629 + $0x88] sm:$0xff]
    %v648 = vld [vmem:[%s629 + $0x90] sm:$0xff]
    %v649 = vld [vmem:[%s629 + $0x98] sm:$0xff]
    %v650 = vld [vmem:[%s629 + $0xa0] sm:$0xff]
    %v651 = vld [vmem:[%s629 + $0xa8] sm:$0xff]
    %v652 = vld [vmem:[%s629 + $0xb0] sm:$0xff]
    %v653 = vld [vmem:[%s629 + $0xb8] sm:$0xff]
    %v654 = vld [vmem:[%s629 + $0xc0] sm:$0xff]
    %v655 = vld [vmem:[%s629 + $0xc8] sm:$0xff]
    %v656 = vld [vmem:[%s629 + $0xd0] sm:$0xff]
    %v657 = vld [vmem:[%s629 + $0xd8] sm:$0xff]
    %v658 = vld [vmem:[%s629 + $0xe0] sm:$0xff]
    %v659 = vld [vmem:[%s629 + $0xe8] sm:$0xff]
    %v660 = vld [vmem:[%s629 + $0xf0] sm:$0xff]
    %v661 = vld [vmem:[%s629 + $0xf8] sm:$0xff]
    %v662 = vunpack.c.l.bf16 %v630
    %v663 = vunpack.c.h.bf16 %v630
    %v664 = vunpack.c.l.bf16 %v631
    %v665 = vunpack.c.h.bf16 %v631
    %v666 = vunpack.c.l.bf16 %v632
    %v667 = vunpack.c.h.bf16 %v632
    %v668 = vunpack.c.l.bf16 %v633
    %v669 = vunpack.c.h.bf16 %v633
    %v670 = vunpack.c.l.bf16 %v634
    %v671 = vunpack.c.h.bf16 %v634
    %v672 = vunpack.c.l.bf16 %v635
    %v673 = vunpack.c.h.bf16 %v635
    %v674 = vunpack.c.l.bf16 %v636
    %v675 = vunpack.c.h.bf16 %v636
    %v676 = vunpack.c.l.bf16 %v637
    %v677 = vunpack.c.h.bf16 %v637
    %v678 = vunpack.c.l.bf16 %v638
    %v679 = vunpack.c.h.bf16 %v638
    %v680 = vunpack.c.l.bf16 %v639
    %v681 = vunpack.c.h.bf16 %v639
    %v682 = vunpack.c.l.bf16 %v640
    %v683 = vunpack.c.h.bf16 %v640
    %v684 = vunpack.c.l.bf16 %v641
    %v685 = vunpack.c.h.bf16 %v641
    %v686 = vunpack.c.l.bf16 %v642
    %v687 = vunpack.c.h.bf16 %v642
    %v688 = vunpack.c.l.bf16 %v643
    %v689 = vunpack.c.h.bf16 %v643
    %v690 = vunpack.c.l.bf16 %v644
    %v691 = vunpack.c.h.bf16 %v644
    %v692 = vunpack.c.l.bf16 %v645
    %v693 = vunpack.c.h.bf16 %v645
    %v694 = vunpack.c.l.bf16 %v646
    %v695 = vunpack.c.h.bf16 %v646
    %v696 = vunpack.c.l.bf16 %v647
    %v697 = vunpack.c.h.bf16 %v647
    %v698 = vunpack.c.l.bf16 %v648
    %v699 = vunpack.c.h.bf16 %v648
    %v700 = vunpack.c.l.bf16 %v649
    %v701 = vunpack.c.h.bf16 %v649
    %v702 = vunpack.c.l.bf16 %v650
    %v703 = vunpack.c.h.bf16 %v650
    %v704 = vunpack.c.l.bf16 %v651
    %v705 = vunpack.c.h.bf16 %v651
    %v706 = vunpack.c.l.bf16 %v652
    %v707 = vunpack.c.h.bf16 %v652
    %v708 = vunpack.c.l.bf16 %v653
    %v709 = vunpack.c.h.bf16 %v653
    %v710 = vunpack.c.l.bf16 %v654
    %v711 = vunpack.c.h.bf16 %v654
    %v712 = vunpack.c.l.bf16 %v655
    %v713 = vunpack.c.h.bf16 %v655
    %v714 = vunpack.c.l.bf16 %v656
    %v715 = vunpack.c.h.bf16 %v656
    %v716 = vunpack.c.l.bf16 %v657
    %v717 = vunpack.c.h.bf16 %v657
    %v718 = vunpack.c.l.bf16 %v658
    %v719 = vunpack.c.h.bf16 %v658
    %v720 = vunpack.c.l.bf16 %v659
    %v721 = vunpack.c.h.bf16 %v659
    %v722 = vunpack.c.l.bf16 %v660
    %v723 = vunpack.c.h.bf16 %v660
    %v724 = vunpack.c.l.bf16 %v661
    %v725 = vunpack.c.h.bf16 %v661
    %s726 = scalar_lea.vmem [#allocation8], 4
    %v727 = vld [vmem:[%s726] sm:$0x3]
    %v729 = vlaneseq
    %v730 = vshrl.u32 %v729, 7
    %v731 = vsub.s32 0, %v730
    %v732 = vrot.slane %v727, %v731
    %v733 = vlaneseq
    %v734 = vshrl.u32 %v733, 7
    %v735 = vsub.s32 1, %v734
    %v736 = vrot.slane %v727, %v735
    %v743 = vcombine.low %v625, %v626
    %v744 = vcombine.low %v627, %v628
    %v746 = vunpack.c.l.s4 1966171168
    %v747 = vunpack.c.0.s8 %v746
    %v748 = vlaneseq
    %v749 = vshrl.u32 %v748, 7
    %v750 = vsub.s32 %v747, %v749
    %v751 = vrot.slane %v743, %v750
    %v753 = vunpack.c.l.s4 1966171168
    %v754 = vunpack.c.0.s8 %v753
    %v755 = vlaneseq
    %v756 = vshrl.u32 %v755, 7
    %v757 = vsub.s32 %v754, %v756
    %v758 = vrot.slane %v744, %v757
    %v759 = vcombine.low %v751, %v758
    %v760 = vcombine.high %v751, %v758
    %v762 = vunpack.c.l.s4 1966171168
    %v763 = vunpack.c.0.s8 %v762
    %v764 = vlaneseq
    %v765 = vshrl.u32 %v764, 7
    %v766 = vsub.s32 %v763, %v765
    %v767 = vrot.slane %v759, %v766
    %v769 = vunpack.c.l.s4 1966171168
    %v770 = vunpack.c.0.s8 %v769
    %v771 = vlaneseq
    %v772 = vshrl.u32 %v771, 7
    %v773 = vsub.s32 %v770, %v772
    %v774 = vrot.slane %v760, %v773
    %777 = vmatprep.subr.mxu0 %v693
    %778 = vmatpush1.msra.mxu0 %v692
    %779 = vmatprep.subr.mxu0 %v691
    %780 = vmatpush1.msra.mxu0 %v690
    %781 = vmatprep.subr.mxu0 %v689
    %782 = vmatpush1.msra.mxu0 %v688
    %783 = vmatprep.subr.mxu0 %v687
    %784 = vmatpush1.msra.mxu0 %v686
    %785 = vmatprep.subr.mxu0 %v685
    %786 = vmatpush1.msra.mxu0 %v684
    %787 = vmatprep.subr.mxu0 %v683
    %788 = vmatpush1.msra.mxu0 %v682
    %789 = vmatprep.subr.mxu0 %v681
    %790 = vmatpush1.msra.mxu0 %v680
    %791 = vmatprep.subr.mxu0 %v679
    %792 = vmatpush1.msra.mxu0 %v678
    %793 = vmatprep.subr.mxu0 %v677
    %794 = vmatpush1.msra.mxu0 %v676
    %795 = vmatprep.subr.mxu0 %v675
    %796 = vmatpush1.msra.mxu0 %v674
    %797 = vmatprep.subr.mxu0 %v673
    %798 = vmatpush1.msra.mxu0 %v672
    %799 = vmatprep.subr.mxu0 %v671
    %800 = vmatpush1.msra.mxu0 %v670
    %801 = vmatprep.subr.mxu0 %v669
    %802 = vmatpush1.msra.mxu0 %v668
    %803 = vmatprep.subr.mxu0 %v667
    %804 = vmatpush1.msra.mxu0 %v666
    %805 = vmatprep.subr.mxu0 %v665
    %806 = vmatpush1.msra.mxu0 %v664
    %807 = vmatprep.subr.mxu0 %v663
    %808 = vmatpush1.msra.mxu0 %v662
    %809 = vmatprep.subr.mxu0 %v725
    %810 = vmatpush2.msra.mxu0 %v724
    %811 = vmatprep.subr.mxu0 %v723
    %812 = vmatpush2.msra.mxu0 %v722
    %813 = vmatprep.subr.mxu0 %v721
    %814 = vmatpush2.msra.mxu0 %v720
    %815 = vmatprep.subr.mxu0 %v719
    %816 = vmatpush2.msra.mxu0 %v718
    %817 = vmatprep.subr.mxu0 %v717
    %818 = vmatpush2.msra.mxu0 %v716
    %819 = vmatprep.subr.mxu0 %v715
    %820 = vmatpush2.msra.mxu0 %v714
    %821 = vmatprep.subr.mxu0 %v713
    %822 = vmatpush2.msra.mxu0 %v712
    %823 = vmatprep.subr.mxu0 %v711
    %824 = vmatpush2.msra.mxu0 %v710
    %825 = vmatprep.subr.mxu0 %v709
    %826 = vmatpush2.msra.mxu0 %v708
    %827 = vmatprep.subr.mxu0 %v707
    %828 = vmatpush2.msra.mxu0 %v706
    %829 = vmatprep.subr.mxu0 %v705
    %830 = vmatpush2.msra.mxu0 %v704
    %831 = vmatprep.subr.mxu0 %v703
    %832 = vmatpush2.msra.mxu0 %v702
    %833 = vmatprep.subr.mxu0 %v701
    %834 = vmatpush2.msra.mxu0 %v700
    %835 = vmatprep.subr.mxu0 %v699
    %836 = vmatpush2.msra.mxu0 %v698
    %837 = vmatprep.subr.mxu0 %v697
    %838 = vmatpush2.msra.mxu0 %v696
    %839 = vmatprep.subr.mxu0 %v695
    %840 = vmatpush2.msra.mxu0 %v694
    %841 = vmatprep.mubr.f32.mxu0 %v774
    %842 = vmatmul.mubr.f32.gmra.mxu0 %v767
    %v843 = vpop.f32.mrf.mxu0
    %v844 = vadd.f32 %v732, %v843
    %v845 = vpop.f32.mrf.mxu0
    %v846 = vadd.f32 %v736, %v845
    %847 = vdwg.mxu0
    %v850 = vcombine.low %v844, %v846
    %v852 = vunpack.c.l.s4 1966171168
    %v853 = vunpack.c.0.s8 %v852
    %v854 = vlaneseq
    %v855 = vshrl.u32 %v854, 7
    %v856 = vsub.s32 %v853, %v855
    %v857 = vrot.slane %v850, %v856
    %v858 = vcombine.high %v857, %v857
    %v860 = vunpack.c.l.s4 1966171168
    %v861 = vunpack.c.0.s8 %v860
    %v862 = vlaneseq
    %v863 = vshrl.u32 %v862, 7
    %v864 = vsub.s32 %v861, %v863
    %v865 = vrot.slane %v857, %v864
    %v867 = vunpack.c.l.s4 1966171168
    %v868 = vunpack.c.0.s8 %v867
    %v869 = vlaneseq
    %v870 = vshrl.u32 %v869, 7
    %v871 = vsub.s32 %v868, %v870
    %v872 = vrot.slane %v858, %v871
    %v873 = vcombine.high %v865, %v865
    %v874 = vcombine.high %v872, %v872
    %v879 = vmax.f32 %v865, 0.0
    %v880 = vmax.f32 %v872, 0.0
    %v881 = vmax.f32 %v873, 0.0
    %v882 = vmax.f32 %v874, 0.0
    %s883 = scalar_lea.vmem [#allocation7], 1792
    %v884 = vld [vmem:[%s883] sm:$0xff]
    %v885 = vld [vmem:[%s883 + $0x8] sm:$0xff]
    %v886 = vld [vmem:[%s883 + $0x10] sm:$0xff]
    %v887 = vld [vmem:[%s883 + $0x18] sm:$0xff]
    %v888 = vld [vmem:[%s883 + $0x20] sm:$0xff]
    %v889 = vld [vmem:[%s883 + $0x28] sm:$0xff]
    %v890 = vld [vmem:[%s883 + $0x30] sm:$0xff]
    %v891 = vld [vmem:[%s883 + $0x38] sm:$0xff]
    %v892 = vld [vmem:[%s883 + $0x40] sm:$0xff]
    %v893 = vld [vmem:[%s883 + $0x48] sm:$0xff]
    %v894 = vld [vmem:[%s883 + $0x50] sm:$0xff]
    %v895 = vld [vmem:[%s883 + $0x58] sm:$0xff]
    %v896 = vld [vmem:[%s883 + $0x60] sm:$0xff]
    %v897 = vld [vmem:[%s883 + $0x68] sm:$0xff]
    %v898 = vld [vmem:[%s883 + $0x70] sm:$0xff]
    %v899 = vld [vmem:[%s883 + $0x78] sm:$0xff]
    %v900 = vld [vmem:[%s883 + $0x80] sm:$0xff]
    %v901 = vld [vmem:[%s883 + $0x88] sm:$0xff]
    %v902 = vld [vmem:[%s883 + $0x90] sm:$0xff]
    %v903 = vld [vmem:[%s883 + $0x98] sm:$0xff]
    %v904 = vld [vmem:[%s883 + $0xa0] sm:$0xff]
    %v905 = vld [vmem:[%s883 + $0xa8] sm:$0xff]
    %v906 = vld [vmem:[%s883 + $0xb0] sm:$0xff]
    %v907 = vld [vmem:[%s883 + $0xb8] sm:$0xff]
    %v908 = vld [vmem:[%s883 + $0xc0] sm:$0xff]
    %v909 = vld [vmem:[%s883 + $0xc8] sm:$0xff]
    %v910 = vld [vmem:[%s883 + $0xd0] sm:$0xff]
    %v911 = vld [vmem:[%s883 + $0xd8] sm:$0xff]
    %v912 = vld [vmem:[%s883 + $0xe0] sm:$0xff]
    %v913 = vld [vmem:[%s883 + $0xe8] sm:$0xff]
    %v914 = vld [vmem:[%s883 + $0xf0] sm:$0xff]
    %v915 = vld [vmem:[%s883 + $0xf8] sm:$0xff]
    %v916 = vunpack.c.l.bf16 %v884
    %v917 = vunpack.c.h.bf16 %v884
    %v918 = vunpack.c.l.bf16 %v885
    %v919 = vunpack.c.h.bf16 %v885
    %v920 = vunpack.c.l.bf16 %v886
    %v921 = vunpack.c.h.bf16 %v886
    %v922 = vunpack.c.l.bf16 %v887
    %v923 = vunpack.c.h.bf16 %v887
    %v924 = vunpack.c.l.bf16 %v888
    %v925 = vunpack.c.h.bf16 %v888
    %v926 = vunpack.c.l.bf16 %v889
    %v927 = vunpack.c.h.bf16 %v889
    %v928 = vunpack.c.l.bf16 %v890
    %v929 = vunpack.c.h.bf16 %v890
    %v930 = vunpack.c.l.bf16 %v891
    %v931 = vunpack.c.h.bf16 %v891
    %v932 = vunpack.c.l.bf16 %v892
    %v933 = vunpack.c.h.bf16 %v892
    %v934 = vunpack.c.l.bf16 %v893
    %v935 = vunpack.c.h.bf16 %v893
    %v936 = vunpack.c.l.bf16 %v894
    %v937 = vunpack.c.h.bf16 %v894
    %v938 = vunpack.c.l.bf16 %v895
    %v939 = vunpack.c.h.bf16 %v895
    %v940 = vunpack.c.l.bf16 %v896
    %v941 = vunpack.c.h.bf16 %v896
    %v942 = vunpack.c.l.bf16 %v897
    %v943 = vunpack.c.h.bf16 %v897
    %v944 = vunpack.c.l.bf16 %v898
    %v945 = vunpack.c.h.bf16 %v898
    %v946 = vunpack.c.l.bf16 %v899
    %v947 = vunpack.c.h.bf16 %v899
    %v948 = vunpack.c.l.bf16 %v900
    %v949 = vunpack.c.h.bf16 %v900
    %v950 = vunpack.c.l.bf16 %v901
    %v951 = vunpack.c.h.bf16 %v901
    %v952 = vunpack.c.l.bf16 %v902
    %v953 = vunpack.c.h.bf16 %v902
    %v954 = vunpack.c.l.bf16 %v903
    %v955 = vunpack.c.h.bf16 %v903
    %v956 = vunpack.c.l.bf16 %v904
    %v957 = vunpack.c.h.bf16 %v904
    %v958 = vunpack.c.l.bf16 %v905
    %v959 = vunpack.c.h.bf16 %v905
    %v960 = vunpack.c.l.bf16 %v906
    %v961 = vunpack.c.h.bf16 %v906
    %v962 = vunpack.c.l.bf16 %v907
    %v963 = vunpack.c.h.bf16 %v907
    %v964 = vunpack.c.l.bf16 %v908
    %v965 = vunpack.c.h.bf16 %v908
    %v966 = vunpack.c.l.bf16 %v909
    %v967 = vunpack.c.h.bf16 %v909
    %v968 = vunpack.c.l.bf16 %v910
    %v969 = vunpack.c.h.bf16 %v910
    %v970 = vunpack.c.l.bf16 %v911
    %v971 = vunpack.c.h.bf16 %v911
    %v972 = vunpack.c.l.bf16 %v912
    %v973 = vunpack.c.h.bf16 %v912
    %v974 = vunpack.c.l.bf16 %v913
    %v975 = vunpack.c.h.bf16 %v913
    %v976 = vunpack.c.l.bf16 %v914
    %v977 = vunpack.c.h.bf16 %v914
    %v978 = vunpack.c.l.bf16 %v915
    %v979 = vunpack.c.h.bf16 %v915
    %s980 = scalar_lea.vmem [#allocation8], 6
    %v981 = vld [vmem:[%s980] sm:$0x3]
    %v983 = vlaneseq
    %v984 = vshrl.u32 %v983, 7
    %v985 = vsub.s32 0, %v984
    %v986 = vrot.slane %v981, %v985
    %v987 = vlaneseq
    %v988 = vshrl.u32 %v987, 7
    %v989 = vsub.s32 1, %v988
    %v990 = vrot.slane %v981, %v989
    %v997 = vcombine.low %v879, %v880
    %v998 = vcombine.low %v881, %v882
    %v1000 = vunpack.c.l.s4 1966171168
    %v1001 = vunpack.c.0.s8 %v1000
    %v1002 = vlaneseq
    %v1003 = vshrl.u32 %v1002, 7
    %v1004 = vsub.s32 %v1001, %v1003
    %v1005 = vrot.slane %v997, %v1004
    %v1007 = vunpack.c.l.s4 1966171168
    %v1008 = vunpack.c.0.s8 %v1007
    %v1009 = vlaneseq
    %v1010 = vshrl.u32 %v1009, 7
    %v1011 = vsub.s32 %v1008, %v1010
    %v1012 = vrot.slane %v998, %v1011
    %v1013 = vcombine.low %v1005, %v1012
    %v1014 = vcombine.high %v1005, %v1012
    %v1016 = vunpack.c.l.s4 1966171168
    %v1017 = vunpack.c.0.s8 %v1016
    %v1018 = vlaneseq
    %v1019 = vshrl.u32 %v1018, 7
    %v1020 = vsub.s32 %v1017, %v1019
    %v1021 = vrot.slane %v1013, %v1020
    %v1023 = vunpack.c.l.s4 1966171168
    %v1024 = vunpack.c.0.s8 %v1023
    %v1025 = vlaneseq
    %v1026 = vshrl.u32 %v1025, 7
    %v1027 = vsub.s32 %v1024, %v1026
    %v1028 = vrot.slane %v1014, %v1027
    %1031 = vmatprep.subr.mxu0 %v947
    %1032 = vmatpush1.msra.mxu0 %v946
    %1033 = vmatprep.subr.mxu0 %v945
    %1034 = vmatpush1.msra.mxu0 %v944
    %1035 = vmatprep.subr.mxu0 %v943
    %1036 = vmatpush1.msra.mxu0 %v942
    %1037 = vmatprep.subr.mxu0 %v941
    %1038 = vmatpush1.msra.mxu0 %v940
    %1039 = vmatprep.subr.mxu0 %v939
    %1040 = vmatpush1.msra.mxu0 %v938
    %1041 = vmatprep.subr.mxu0 %v937
    %1042 = vmatpush1.msra.mxu0 %v936
    %1043 = vmatprep.subr.mxu0 %v935
    %1044 = vmatpush1.msra.mxu0 %v934
    %1045 = vmatprep.subr.mxu0 %v933
    %1046 = vmatpush1.msra.mxu0 %v932
    %1047 = vmatprep.subr.mxu0 %v931
    %1048 = vmatpush1.msra.mxu0 %v930
    %1049 = vmatprep.subr.mxu0 %v929
    %1050 = vmatpush1.msra.mxu0 %v928
    %1051 = vmatprep.subr.mxu0 %v927
    %1052 = vmatpush1.msra.mxu0 %v926
    %1053 = vmatprep.subr.mxu0 %v925
    %1054 = vmatpush1.msra.mxu0 %v924
    %1055 = vmatprep.subr.mxu0 %v923
    %1056 = vmatpush1.msra.mxu0 %v922
    %1057 = vmatprep.subr.mxu0 %v921
    %1058 = vmatpush1.msra.mxu0 %v920
    %1059 = vmatprep.subr.mxu0 %v919
    %1060 = vmatpush1.msra.mxu0 %v918
    %1061 = vmatprep.subr.mxu0 %v917
    %1062 = vmatpush1.msra.mxu0 %v916
    %1063 = vmatprep.subr.mxu0 %v979
    %1064 = vmatpush2.msra.mxu0 %v978
    %1065 = vmatprep.subr.mxu0 %v977
    %1066 = vmatpush2.msra.mxu0 %v976
    %1067 = vmatprep.subr.mxu0 %v975
    %1068 = vmatpush2.msra.mxu0 %v974
    %1069 = vmatprep.subr.mxu0 %v973
    %1070 = vmatpush2.msra.mxu0 %v972
    %1071 = vmatprep.subr.mxu0 %v971
    %1072 = vmatpush2.msra.mxu0 %v970
    %1073 = vmatprep.subr.mxu0 %v969
    %1074 = vmatpush2.msra.mxu0 %v968
    %1075 = vmatprep.subr.mxu0 %v967
    %1076 = vmatpush2.msra.mxu0 %v966
    %1077 = vmatprep.subr.mxu0 %v965
    %1078 = vmatpush2.msra.mxu0 %v964
    %1079 = vmatprep.subr.mxu0 %v963
    %1080 = vmatpush2.msra.mxu0 %v962
    %1081 = vmatprep.subr.mxu0 %v961
    %1082 = vmatpush2.msra.mxu0 %v960
    %1083 = vmatprep.subr.mxu0 %v959
    %1084 = vmatpush2.msra.mxu0 %v958
    %1085 = vmatprep.subr.mxu0 %v957
    %1086 = vmatpush2.msra.mxu0 %v956
    %1087 = vmatprep.subr.mxu0 %v955
    %1088 = vmatpush2.msra.mxu0 %v954
    %1089 = vmatprep.subr.mxu0 %v953
    %1090 = vmatpush2.msra.mxu0 %v952
    %1091 = vmatprep.subr.mxu0 %v951
    %1092 = vmatpush2.msra.mxu0 %v950
    %1093 = vmatprep.subr.mxu0 %v949
    %1094 = vmatpush2.msra.mxu0 %v948
    %1095 = vmatprep.mubr.f32.mxu0 %v1028
    %1096 = vmatmul.mubr.f32.gmra.mxu0 %v1021
    %v1097 = vpop.f32.mrf.mxu0
    %v1098 = vadd.f32 %v986, %v1097
    %v1099 = vpop.f32.mrf.mxu0
    %v1100 = vadd.f32 %v990, %v1099
    %1101 = vdwg.mxu0
    %v1104 = vcombine.low %v1098, %v1100
    %v1106 = vunpack.c.l.s4 1966171168
    %v1107 = vunpack.c.0.s8 %v1106
    %v1108 = vlaneseq
    %v1109 = vshrl.u32 %v1108, 7
    %v1110 = vsub.s32 %v1107, %v1109
    %v1111 = vrot.slane %v1104, %v1110
    %v1112 = vcombine.high %v1111, %v1111
    %v1114 = vunpack.c.l.s4 1966171168
    %v1115 = vunpack.c.0.s8 %v1114
    %v1116 = vlaneseq
    %v1117 = vshrl.u32 %v1116, 7
    %v1118 = vsub.s32 %v1115, %v1117
    %v1119 = vrot.slane %v1111, %v1118
    %v1121 = vunpack.c.l.s4 1966171168
    %v1122 = vunpack.c.0.s8 %v1121
    %v1123 = vlaneseq
    %v1124 = vshrl.u32 %v1123, 7
    %v1125 = vsub.s32 %v1122, %v1124
    %v1126 = vrot.slane %v1112, %v1125
    %v1127 = vcombine.high %v1119, %v1119
    %v1128 = vcombine.high %v1126, %v1126
    %v1133 = vmax.f32 %v1119, 0.0
    %v1134 = vmax.f32 %v1126, 0.0
    %v1135 = vmax.f32 %v1127, 0.0
    %v1136 = vmax.f32 %v1128, 0.0
    %v1137 = vadd.f32 %v1133, %v625
    %v1138 = vadd.f32 %v1134, %v626
    %v1139 = vadd.f32 %v1135, %v627
    %v1140 = vadd.f32 %v1136, %v628
    %v1141 = vmax.f32 %v1137, 0.0
    %v1142 = vmax.f32 %v1138, 0.0
    %v1143 = vmax.f32 %v1139, 0.0
    %v1144 = vmax.f32 %v1140, 0.0
    %s1145 = scalar_lea.vmem [#allocation7], 2304
    %v1146 = vld [vmem:[%s1145] sm:$0xff]
    %v1147 = vld [vmem:[%s1145 + $0x8] sm:$0xff]
    %v1148 = vld [vmem:[%s1145 + $0x10] sm:$0xff]
    %v1149 = vld [vmem:[%s1145 + $0x18] sm:$0xff]
    %v1150 = vld [vmem:[%s1145 + $0x20] sm:$0xff]
    %v1151 = vld [vmem:[%s1145 + $0x28] sm:$0xff]
    %v1152 = vld [vmem:[%s1145 + $0x30] sm:$0xff]
    %v1153 = vld [vmem:[%s1145 + $0x38] sm:$0xff]
    %v1154 = vld [vmem:[%s1145 + $0x40] sm:$0xff]
    %v1155 = vld [vmem:[%s1145 + $0x48] sm:$0xff]
    %v1156 = vld [vmem:[%s1145 + $0x50] sm:$0xff]
    %v1157 = vld [vmem:[%s1145 + $0x58] sm:$0xff]
    %v1158 = vld [vmem:[%s1145 + $0x60] sm:$0xff]
    %v1159 = vld [vmem:[%s1145 + $0x68] sm:$0xff]
    %v1160 = vld [vmem:[%s1145 + $0x70] sm:$0xff]
    %v1161 = vld [vmem:[%s1145 + $0x78] sm:$0xff]
    %v1162 = vld [vmem:[%s1145 + $0x80] sm:$0xff]
    %v1163 = vld [vmem:[%s1145 + $0x88] sm:$0xff]
    %v1164 = vld [vmem:[%s1145 + $0x90] sm:$0xff]
    %v1165 = vld [vmem:[%s1145 + $0x98] sm:$0xff]
    %v1166 = vld [vmem:[%s1145 + $0xa0] sm:$0xff]
    %v1167 = vld [vmem:[%s1145 + $0xa8] sm:$0xff]
    %v1168 = vld [vmem:[%s1145 + $0xb0] sm:$0xff]
    %v1169 = vld [vmem:[%s1145 + $0xb8] sm:$0xff]
    %v1170 = vld [vmem:[%s1145 + $0xc0] sm:$0xff]
    %v1171 = vld [vmem:[%s1145 + $0xc8] sm:$0xff]
    %v1172 = vld [vmem:[%s1145 + $0xd0] sm:$0xff]
    %v1173 = vld [vmem:[%s1145 + $0xd8] sm:$0xff]
    %v1174 = vld [vmem:[%s1145 + $0xe0] sm:$0xff]
    %v1175 = vld [vmem:[%s1145 + $0xe8] sm:$0xff]
    %v1176 = vld [vmem:[%s1145 + $0xf0] sm:$0xff]
    %v1177 = vld [vmem:[%s1145 + $0xf8] sm:$0xff]
    %v1178 = vunpack.c.l.bf16 %v1146
    %v1179 = vunpack.c.h.bf16 %v1146
    %v1180 = vunpack.c.l.bf16 %v1147
    %v1181 = vunpack.c.h.bf16 %v1147
    %v1182 = vunpack.c.l.bf16 %v1148
    %v1183 = vunpack.c.h.bf16 %v1148
    %v1184 = vunpack.c.l.bf16 %v1149
    %v1185 = vunpack.c.h.bf16 %v1149
    %v1186 = vunpack.c.l.bf16 %v1150
    %v1187 = vunpack.c.h.bf16 %v1150
    %v1188 = vunpack.c.l.bf16 %v1151
    %v1189 = vunpack.c.h.bf16 %v1151
    %v1190 = vunpack.c.l.bf16 %v1152
    %v1191 = vunpack.c.h.bf16 %v1152
    %v1192 = vunpack.c.l.bf16 %v1153
    %v1193 = vunpack.c.h.bf16 %v1153
    %v1194 = vunpack.c.l.bf16 %v1154
    %v1195 = vunpack.c.h.bf16 %v1154
    %v1196 = vunpack.c.l.bf16 %v1155
    %v1197 = vunpack.c.h.bf16 %v1155
    %v1198 = vunpack.c.l.bf16 %v1156
    %v1199 = vunpack.c.h.bf16 %v1156
    %v1200 = vunpack.c.l.bf16 %v1157
    %v1201 = vunpack.c.h.bf16 %v1157
    %v1202 = vunpack.c.l.bf16 %v1158
    %v1203 = vunpack.c.h.bf16 %v1158
    %v1204 = vunpack.c.l.bf16 %v1159
    %v1205 = vunpack.c.h.bf16 %v1159
    %v1206 = vunpack.c.l.bf16 %v1160
    %v1207 = vunpack.c.h.bf16 %v1160
    %v1208 = vunpack.c.l.bf16 %v1161
    %v1209 = vunpack.c.h.bf16 %v1161
    %v1210 = vunpack.c.l.bf16 %v1162
    %v1211 = vunpack.c.h.bf16 %v1162
    %v1212 = vunpack.c.l.bf16 %v1163
    %v1213 = vunpack.c.h.bf16 %v1163
    %v1214 = vunpack.c.l.bf16 %v1164
    %v1215 = vunpack.c.h.bf16 %v1164
    %v1216 = vunpack.c.l.bf16 %v1165
    %v1217 = vunpack.c.h.bf16 %v1165
    %v1218 = vunpack.c.l.bf16 %v1166
    %v1219 = vunpack.c.h.bf16 %v1166
    %v1220 = vunpack.c.l.bf16 %v1167
    %v1221 = vunpack.c.h.bf16 %v1167
    %v1222 = vunpack.c.l.bf16 %v1168
    %v1223 = vunpack.c.h.bf16 %v1168
    %v1224 = vunpack.c.l.bf16 %v1169
    %v1225 = vunpack.c.h.bf16 %v1169
    %v1226 = vunpack.c.l.bf16 %v1170
    %v1227 = vunpack.c.h.bf16 %v1170
    %v1228 = vunpack.c.l.bf16 %v1171
    %v1229 = vunpack.c.h.bf16 %v1171
    %v1230 = vunpack.c.l.bf16 %v1172
    %v1231 = vunpack.c.h.bf16 %v1172
    %v1232 = vunpack.c.l.bf16 %v1173
    %v1233 = vunpack.c.h.bf16 %v1173
    %v1234 = vunpack.c.l.bf16 %v1174
    %v1235 = vunpack.c.h.bf16 %v1174
    %v1236 = vunpack.c.l.bf16 %v1175
    %v1237 = vunpack.c.h.bf16 %v1175
    %v1238 = vunpack.c.l.bf16 %v1176
    %v1239 = vunpack.c.h.bf16 %v1176
    %v1240 = vunpack.c.l.bf16 %v1177
    %v1241 = vunpack.c.h.bf16 %v1177
    %s1242 = scalar_lea.vmem [#allocation8], 8
    %v1243 = vld [vmem:[%s1242] sm:$0x3]
    %v1245 = vlaneseq
    %v1246 = vshrl.u32 %v1245, 7
    %v1247 = vsub.s32 0, %v1246
    %v1248 = vrot.slane %v1243, %v1247
    %v1249 = vlaneseq
    %v1250 = vshrl.u32 %v1249, 7
    %v1251 = vsub.s32 1, %v1250
    %v1252 = vrot.slane %v1243, %v1251
    %v1259 = vcombine.low %v1141, %v1142
    %v1260 = vcombine.low %v1143, %v1144
    %v1262 = vunpack.c.l.s4 1966171168
    %v1263 = vunpack.c.0.s8 %v1262
    %v1264 = vlaneseq
    %v1265 = vshrl.u32 %v1264, 7
    %v1266 = vsub.s32 %v1263, %v1265
    %v1267 = vrot.slane %v1259, %v1266
    %v1269 = vunpack.c.l.s4 1966171168
    %v1270 = vunpack.c.0.s8 %v1269
    %v1271 = vlaneseq
    %v1272 = vshrl.u32 %v1271, 7
    %v1273 = vsub.s32 %v1270, %v1272
    %v1274 = vrot.slane %v1260, %v1273
    %v1275 = vcombine.low %v1267, %v1274
    %v1276 = vcombine.high %v1267, %v1274
    %v1278 = vunpack.c.l.s4 1966171168
    %v1279 = vunpack.c.0.s8 %v1278
    %v1280 = vlaneseq
    %v1281 = vshrl.u32 %v1280, 7
    %v1282 = vsub.s32 %v1279, %v1281
    %v1283 = vrot.slane %v1275, %v1282
    %v1285 = vunpack.c.l.s4 1966171168
    %v1286 = vunpack.c.0.s8 %v1285
    %v1287 = vlaneseq
    %v1288 = vshrl.u32 %v1287, 7
    %v1289 = vsub.s32 %v1286, %v1288
    %v1290 = vrot.slane %v1276, %v1289
    %1293 = vmatprep.subr.mxu0 %v1209
    %1294 = vmatpush1.msra.mxu0 %v1208
    %1295 = vmatprep.subr.mxu0 %v1207
    %1296 = vmatpush1.msra.mxu0 %v1206
    %1297 = vmatprep.subr.mxu0 %v1205
    %1298 = vmatpush1.msra.mxu0 %v1204
    %1299 = vmatprep.subr.mxu0 %v1203
    %1300 = vmatpush1.msra.mxu0 %v1202
    %1301 = vmatprep.subr.mxu0 %v1201
    %1302 = vmatpush1.msra.mxu0 %v1200
    %1303 = vmatprep.subr.mxu0 %v1199
    %1304 = vmatpush1.msra.mxu0 %v1198
    %1305 = vmatprep.subr.mxu0 %v1197
    %1306 = vmatpush1.msra.mxu0 %v1196
    %1307 = vmatprep.subr.mxu0 %v1195
    %1308 = vmatpush1.msra.mxu0 %v1194
    %1309 = vmatprep.subr.mxu0 %v1193
    %1310 = vmatpush1.msra.mxu0 %v1192
    %1311 = vmatprep.subr.mxu0 %v1191
    %1312 = vmatpush1.msra.mxu0 %v1190
    %1313 = vmatprep.subr.mxu0 %v1189
    %1314 = vmatpush1.msra.mxu0 %v1188
    %1315 = vmatprep.subr.mxu0 %v1187
    %1316 = vmatpush1.msra.mxu0 %v1186
    %1317 = vmatprep.subr.mxu0 %v1185
    %1318 = vmatpush1.msra.mxu0 %v1184
    %1319 = vmatprep.subr.mxu0 %v1183
    %1320 = vmatpush1.msra.mxu0 %v1182
    %1321 = vmatprep.subr.mxu0 %v1181
    %1322 = vmatpush1.msra.mxu0 %v1180
    %1323 = vmatprep.subr.mxu0 %v1179
    %1324 = vmatpush1.msra.mxu0 %v1178
    %1325 = vmatprep.subr.mxu0 %v1241
    %1326 = vmatpush2.msra.mxu0 %v1240
    %1327 = vmatprep.subr.mxu0 %v1239
    %1328 = vmatpush2.msra.mxu0 %v1238
    %1329 = vmatprep.subr.mxu0 %v1237
    %1330 = vmatpush2.msra.mxu0 %v1236
    %1331 = vmatprep.subr.mxu0 %v1235
    %1332 = vmatpush2.msra.mxu0 %v1234
    %1333 = vmatprep.subr.mxu0 %v1233
    %1334 = vmatpush2.msra.mxu0 %v1232
    %1335 = vmatprep.subr.mxu0 %v1231
    %1336 = vmatpush2.msra.mxu0 %v1230
    %1337 = vmatprep.subr.mxu0 %v1229
    %1338 = vmatpush2.msra.mxu0 %v1228
    %1339 = vmatprep.subr.mxu0 %v1227
    %1340 = vmatpush2.msra.mxu0 %v1226
    %1341 = vmatprep.subr.mxu0 %v1225
    %1342 = vmatpush2.msra.mxu0 %v1224
    %1343 = vmatprep.subr.mxu0 %v1223
    %1344 = vmatpush2.msra.mxu0 %v1222
    %1345 = vmatprep.subr.mxu0 %v1221
    %1346 = vmatpush2.msra.mxu0 %v1220
    %1347 = vmatprep.subr.mxu0 %v1219
    %1348 = vmatpush2.msra.mxu0 %v1218
    %1349 = vmatprep.subr.mxu0 %v1217
    %1350 = vmatpush2.msra.mxu0 %v1216
    %1351 = vmatprep.subr.mxu0 %v1215
    %1352 = vmatpush2.msra.mxu0 %v1214
    %1353 = vmatprep.subr.mxu0 %v1213
    %1354 = vmatpush2.msra.mxu0 %v1212
    %1355 = vmatprep.subr.mxu0 %v1211
    %1356 = vmatpush2.msra.mxu0 %v1210
    %1357 = vmatprep.mubr.f32.mxu0 %v1290
    %1358 = vmatmul.mubr.f32.gmra.mxu0 %v1283
    %v1359 = vpop.f32.mrf.mxu0
    %v1360 = vadd.f32 %v1248, %v1359
    %v1361 = vpop.f32.mrf.mxu0
    %v1362 = vadd.f32 %v1252, %v1361
    %1363 = vdwg.mxu0
    %v1366 = vcombine.low %v1360, %v1362
    %v1368 = vunpack.c.l.s4 1966171168
    %v1369 = vunpack.c.0.s8 %v1368
    %v1370 = vlaneseq
    %v1371 = vshrl.u32 %v1370, 7
    %v1372 = vsub.s32 %v1369, %v1371
    %v1373 = vrot.slane %v1366, %v1372
    %v1374 = vcombine.high %v1373, %v1373
    %v1376 = vunpack.c.l.s4 1966171168
    %v1377 = vunpack.c.0.s8 %v1376
    %v1378 = vlaneseq
    %v1379 = vshrl.u32 %v1378, 7
    %v1380 = vsub.s32 %v1377, %v1379
    %v1381 = vrot.slane %v1373, %v1380
    %v1383 = vunpack.c.l.s4 1966171168
    %v1384 = vunpack.c.0.s8 %v1383
    %v1385 = vlaneseq
    %v1386 = vshrl.u32 %v1385, 7
    %v1387 = vsub.s32 %v1384, %v1386
    %v1388 = vrot.slane %v1374, %v1387
    %v1389 = vcombine.high %v1381, %v1381
    %v1390 = vcombine.high %v1388, %v1388
    %v1395 = vmax.f32 %v1381, 0.0
    %v1396 = vmax.f32 %v1388, 0.0
    %v1397 = vmax.f32 %v1389, 0.0
    %v1398 = vmax.f32 %v1390, 0.0
    %s1399 = scalar_lea.vmem [#allocation7], 2816
    %v1400 = vld [vmem:[%s1399] sm:$0xff]
    %v1401 = vld [vmem:[%s1399 + $0x8] sm:$0xff]
    %v1402 = vld [vmem:[%s1399 + $0x10] sm:$0xff]
    %v1403 = vld [vmem:[%s1399 + $0x18] sm:$0xff]
    %v1404 = vld [vmem:[%s1399 + $0x20] sm:$0xff]
    %v1405 = vld [vmem:[%s1399 + $0x28] sm:$0xff]
    %v1406 = vld [vmem:[%s1399 + $0x30] sm:$0xff]
    %v1407 = vld [vmem:[%s1399 + $0x38] sm:$0xff]
    %v1408 = vld [vmem:[%s1399 + $0x40] sm:$0xff]
    %v1409 = vld [vmem:[%s1399 + $0x48] sm:$0xff]
    %v1410 = vld [vmem:[%s1399 + $0x50] sm:$0xff]
    %v1411 = vld [vmem:[%s1399 + $0x58] sm:$0xff]
    %v1412 = vld [vmem:[%s1399 + $0x60] sm:$0xff]
    %v1413 = vld [vmem:[%s1399 + $0x68] sm:$0xff]
    %v1414 = vld [vmem:[%s1399 + $0x70] sm:$0xff]
    %v1415 = vld [vmem:[%s1399 + $0x78] sm:$0xff]
    %v1416 = vld [vmem:[%s1399 + $0x80] sm:$0xff]
    %v1417 = vld [vmem:[%s1399 + $0x88] sm:$0xff]
    %v1418 = vld [vmem:[%s1399 + $0x90] sm:$0xff]
    %v1419 = vld [vmem:[%s1399 + $0x98] sm:$0xff]
    %v1420 = vld [vmem:[%s1399 + $0xa0] sm:$0xff]
    %v1421 = vld [vmem:[%s1399 + $0xa8] sm:$0xff]
    %v1422 = vld [vmem:[%s1399 + $0xb0] sm:$0xff]
    %v1423 = vld [vmem:[%s1399 + $0xb8] sm:$0xff]
    %v1424 = vld [vmem:[%s1399 + $0xc0] sm:$0xff]
    %v1425 = vld [vmem:[%s1399 + $0xc8] sm:$0xff]
    %v1426 = vld [vmem:[%s1399 + $0xd0] sm:$0xff]
    %v1427 = vld [vmem:[%s1399 + $0xd8] sm:$0xff]
    %v1428 = vld [vmem:[%s1399 + $0xe0] sm:$0xff]
    %v1429 = vld [vmem:[%s1399 + $0xe8] sm:$0xff]
    %v1430 = vld [vmem:[%s1399 + $0xf0] sm:$0xff]
    %v1431 = vld [vmem:[%s1399 + $0xf8] sm:$0xff]
    %v1432 = vunpack.c.l.bf16 %v1400
    %v1433 = vunpack.c.h.bf16 %v1400
    %v1434 = vunpack.c.l.bf16 %v1401
    %v1435 = vunpack.c.h.bf16 %v1401
    %v1436 = vunpack.c.l.bf16 %v1402
    %v1437 = vunpack.c.h.bf16 %v1402
    %v1438 = vunpack.c.l.bf16 %v1403
    %v1439 = vunpack.c.h.bf16 %v1403
    %v1440 = vunpack.c.l.bf16 %v1404
    %v1441 = vunpack.c.h.bf16 %v1404
    %v1442 = vunpack.c.l.bf16 %v1405
    %v1443 = vunpack.c.h.bf16 %v1405
    %v1444 = vunpack.c.l.bf16 %v1406
    %v1445 = vunpack.c.h.bf16 %v1406
    %v1446 = vunpack.c.l.bf16 %v1407
    %v1447 = vunpack.c.h.bf16 %v1407
    %v1448 = vunpack.c.l.bf16 %v1408
    %v1449 = vunpack.c.h.bf16 %v1408
    %v1450 = vunpack.c.l.bf16 %v1409
    %v1451 = vunpack.c.h.bf16 %v1409
    %v1452 = vunpack.c.l.bf16 %v1410
    %v1453 = vunpack.c.h.bf16 %v1410
    %v1454 = vunpack.c.l.bf16 %v1411
    %v1455 = vunpack.c.h.bf16 %v1411
    %v1456 = vunpack.c.l.bf16 %v1412
    %v1457 = vunpack.c.h.bf16 %v1412
    %v1458 = vunpack.c.l.bf16 %v1413
    %v1459 = vunpack.c.h.bf16 %v1413
    %v1460 = vunpack.c.l.bf16 %v1414
    %v1461 = vunpack.c.h.bf16 %v1414
    %v1462 = vunpack.c.l.bf16 %v1415
    %v1463 = vunpack.c.h.bf16 %v1415
    %v1464 = vunpack.c.l.bf16 %v1416
    %v1465 = vunpack.c.h.bf16 %v1416
    %v1466 = vunpack.c.l.bf16 %v1417
    %v1467 = vunpack.c.h.bf16 %v1417
    %v1468 = vunpack.c.l.bf16 %v1418
    %v1469 = vunpack.c.h.bf16 %v1418
    %v1470 = vunpack.c.l.bf16 %v1419
    %v1471 = vunpack.c.h.bf16 %v1419
    %v1472 = vunpack.c.l.bf16 %v1420
    %v1473 = vunpack.c.h.bf16 %v1420
    %v1474 = vunpack.c.l.bf16 %v1421
    %v1475 = vunpack.c.h.bf16 %v1421
    %v1476 = vunpack.c.l.bf16 %v1422
    %v1477 = vunpack.c.h.bf16 %v1422
    %v1478 = vunpack.c.l.bf16 %v1423
    %v1479 = vunpack.c.h.bf16 %v1423
    %v1480 = vunpack.c.l.bf16 %v1424
    %v1481 = vunpack.c.h.bf16 %v1424
    %v1482 = vunpack.c.l.bf16 %v1425
    %v1483 = vunpack.c.h.bf16 %v1425
    %v1484 = vunpack.c.l.bf16 %v1426
    %v1485 = vunpack.c.h.bf16 %v1426
    %v1486 = vunpack.c.l.bf16 %v1427
    %v1487 = vunpack.c.h.bf16 %v1427
    %v1488 = vunpack.c.l.bf16 %v1428
    %v1489 = vunpack.c.h.bf16 %v1428
    %v1490 = vunpack.c.l.bf16 %v1429
    %v1491 = vunpack.c.h.bf16 %v1429
    %v1492 = vunpack.c.l.bf16 %v1430
    %v1493 = vunpack.c.h.bf16 %v1430
    %v1494 = vunpack.c.l.bf16 %v1431
    %v1495 = vunpack.c.h.bf16 %v1431
    %s1496 = scalar_lea.vmem [#allocation8], 10
    %v1497 = vld [vmem:[%s1496] sm:$0x3]
    %v1499 = vlaneseq
    %v1500 = vshrl.u32 %v1499, 7
    %v1501 = vsub.s32 0, %v1500
    %v1502 = vrot.slane %v1497, %v1501
    %v1503 = vlaneseq
    %v1504 = vshrl.u32 %v1503, 7
    %v1505 = vsub.s32 1, %v1504
    %v1506 = vrot.slane %v1497, %v1505
    %v1513 = vcombine.low %v1395, %v1396
    %v1514 = vcombine.low %v1397, %v1398
    %v1516 = vunpack.c.l.s4 1966171168
    %v1517 = vunpack.c.0.s8 %v1516
    %v1518 = vlaneseq
    %v1519 = vshrl.u32 %v1518, 7
    %v1520 = vsub.s32 %v1517, %v1519
    %v1521 = vrot.slane %v1513, %v1520
    %v1523 = vunpack.c.l.s4 1966171168
    %v1524 = vunpack.c.0.s8 %v1523
    %v1525 = vlaneseq
    %v1526 = vshrl.u32 %v1525, 7
    %v1527 = vsub.s32 %v1524, %v1526
    %v1528 = vrot.slane %v1514, %v1527
    %v1529 = vcombine.low %v1521, %v1528
    %v1530 = vcombine.high %v1521, %v1528
    %v1532 = vunpack.c.l.s4 1966171168
    %v1533 = vunpack.c.0.s8 %v1532
    %v1534 = vlaneseq
    %v1535 = vshrl.u32 %v1534, 7
    %v1536 = vsub.s32 %v1533, %v1535
    %v1537 = vrot.slane %v1529, %v1536
    %v1539 = vunpack.c.l.s4 1966171168
    %v1540 = vunpack.c.0.s8 %v1539
    %v1541 = vlaneseq
    %v1542 = vshrl.u32 %v1541, 7
    %v1543 = vsub.s32 %v1540, %v1542
    %v1544 = vrot.slane %v1530, %v1543
    %1547 = vmatprep.subr.mxu0 %v1463
    %1548 = vmatpush1.msra.mxu0 %v1462
    %1549 = vmatprep.subr.mxu0 %v1461
    %1550 = vmatpush1.msra.mxu0 %v1460
    %1551 = vmatprep.subr.mxu0 %v1459
    %1552 = vmatpush1.msra.mxu0 %v1458
    %1553 = vmatprep.subr.mxu0 %v1457
    %1554 = vmatpush1.msra.mxu0 %v1456
    %1555 = vmatprep.subr.mxu0 %v1455
    %1556 = vmatpush1.msra.mxu0 %v1454
    %1557 = vmatprep.subr.mxu0 %v1453
    %1558 = vmatpush1.msra.mxu0 %v1452
    %1559 = vmatprep.subr.mxu0 %v1451
    %1560 = vmatpush1.msra.mxu0 %v1450
    %1561 = vmatprep.subr.mxu0 %v1449
    %1562 = vmatpush1.msra.mxu0 %v1448
    %1563 = vmatprep.subr.mxu0 %v1447
    %1564 = vmatpush1.msra.mxu0 %v1446
    %1565 = vmatprep.subr.mxu0 %v1445
    %1566 = vmatpush1.msra.mxu0 %v1444
    %1567 = vmatprep.subr.mxu0 %v1443
    %1568 = vmatpush1.msra.mxu0 %v1442
    %1569 = vmatprep.subr.mxu0 %v1441
    %1570 = vmatpush1.msra.mxu0 %v1440
    %1571 = vmatprep.subr.mxu0 %v1439
    %1572 = vmatpush1.msra.mxu0 %v1438
    %1573 = vmatprep.subr.mxu0 %v1437
    %1574 = vmatpush1.msra.mxu0 %v1436
    %1575 = vmatprep.subr.mxu0 %v1435
    %1576 = vmatpush1.msra.mxu0 %v1434
    %1577 = vmatprep.subr.mxu0 %v1433
    %1578 = vmatpush1.msra.mxu0 %v1432
    %1579 = vmatprep.subr.mxu0 %v1495
    %1580 = vmatpush2.msra.mxu0 %v1494
    %1581 = vmatprep.subr.mxu0 %v1493
    %1582 = vmatpush2.msra.mxu0 %v1492
    %1583 = vmatprep.subr.mxu0 %v1491
    %1584 = vmatpush2.msra.mxu0 %v1490
    %1585 = vmatprep.subr.mxu0 %v1489
    %1586 = vmatpush2.msra.mxu0 %v1488
    %1587 = vmatprep.subr.mxu0 %v1487
    %1588 = vmatpush2.msra.mxu0 %v1486
    %1589 = vmatprep.subr.mxu0 %v1485
    %1590 = vmatpush2.msra.mxu0 %v1484
    %1591 = vmatprep.subr.mxu0 %v1483
    %1592 = vmatpush2.msra.mxu0 %v1482
    %1593 = vmatprep.subr.mxu0 %v1481
    %1594 = vmatpush2.msra.mxu0 %v1480
    %1595 = vmatprep.subr.mxu0 %v1479
    %1596 = vmatpush2.msra.mxu0 %v1478
    %1597 = vmatprep.subr.mxu0 %v1477
    %1598 = vmatpush2.msra.mxu0 %v1476
    %1599 = vmatprep.subr.mxu0 %v1475
    %1600 = vmatpush2.msra.mxu0 %v1474
    %1601 = vmatprep.subr.mxu0 %v1473
    %1602 = vmatpush2.msra.mxu0 %v1472
    %1603 = vmatprep.subr.mxu0 %v1471
    %1604 = vmatpush2.msra.mxu0 %v1470
    %1605 = vmatprep.subr.mxu0 %v1469
    %1606 = vmatpush2.msra.mxu0 %v1468
    %1607 = vmatprep.subr.mxu0 %v1467
    %1608 = vmatpush2.msra.mxu0 %v1466
    %1609 = vmatprep.subr.mxu0 %v1465
    %1610 = vmatpush2.msra.mxu0 %v1464
    %1611 = vmatprep.mubr.f32.mxu0 %v1544
    %1612 = vmatmul.mubr.f32.gmra.mxu0 %v1537
    %v1613 = vpop.f32.mrf.mxu0
    %v1614 = vadd.f32 %v1502, %v1613
    %v1615 = vpop.f32.mrf.mxu0
    %v1616 = vadd.f32 %v1506, %v1615
    %1617 = vdwg.mxu0
    %v1620 = vcombine.low %v1614, %v1616
    %v1622 = vunpack.c.l.s4 1966171168
    %v1623 = vunpack.c.0.s8 %v1622
    %v1624 = vlaneseq
    %v1625 = vshrl.u32 %v1624, 7
    %v1626 = vsub.s32 %v1623, %v1625
    %v1627 = vrot.slane %v1620, %v1626
    %v1628 = vcombine.high %v1627, %v1627
    %v1630 = vunpack.c.l.s4 1966171168
    %v1631 = vunpack.c.0.s8 %v1630
    %v1632 = vlaneseq
    %v1633 = vshrl.u32 %v1632, 7
    %v1634 = vsub.s32 %v1631, %v1633
    %v1635 = vrot.slane %v1627, %v1634
    %v1637 = vunpack.c.l.s4 1966171168
    %v1638 = vunpack.c.0.s8 %v1637
    %v1639 = vlaneseq
    %v1640 = vshrl.u32 %v1639, 7
    %v1641 = vsub.s32 %v1638, %v1640
    %v1642 = vrot.slane %v1628, %v1641
    %v1643 = vcombine.high %v1635, %v1635
    %v1644 = vcombine.high %v1642, %v1642
    %v1649 = vmax.f32 %v1635, 0.0
    %v1650 = vmax.f32 %v1642, 0.0
    %v1651 = vmax.f32 %v1643, 0.0
    %v1652 = vmax.f32 %v1644, 0.0
    %v1653 = vadd.f32 %v1649, %v1141
    %v1654 = vadd.f32 %v1650, %v1142
    %v1655 = vadd.f32 %v1651, %v1143
    %v1656 = vadd.f32 %v1652, %v1144
    %v1657 = vmax.f32 %v1653, 0.0
    %v1658 = vmax.f32 %v1654, 0.0
    %v1659 = vmax.f32 %v1655, 0.0
    %v1660 = vmax.f32 %v1656, 0.0
    %v1661 = vlaneseq
    %v1662 = vshrl.u32 %v1661, 7
    %v1663 = vadd.s32 %v1662, 8
    %v1664 = vadd.s32 %v1662, 16
    %v1665 = vadd.s32 %v1662, 24
    %v1666 = vadd.s32 %v1662, 32
    %v1667 = vadd.s32 %v1662, 40
    %v1668 = vadd.s32 %v1662, 48
    %v1669 = vadd.s32 %v1662, 56
    %v1670 = vadd.s32 %v1662, 64
    %v1671 = vadd.s32 %v1662, 72
    %v1672 = vadd.s32 %v1662, 80
    %v1673 = vadd.s32 %v1662, 88
    %v1674 = vadd.s32 %v1662, 96
    %v1675 = vadd.s32 %v1662, 104
    %v1676 = vadd.s32 %v1662, 112
    %v1677 = vadd.s32 %v1662, 120
    %v1678 = vadd.s32 %v1662, 128
    %v1679 = vadd.s32 %v1662, 136
    %v1680 = vadd.s32 %v1662, 144
    %v1681 = vadd.s32 %v1662, 152
    %v1682 = vadd.s32 %v1662, 160
    %v1683 = vadd.s32 %v1662, 168
    %v1684 = vadd.s32 %v1662, 176
    %v1685 = vadd.s32 %v1662, 184
    %v1686 = vadd.s32 %v1662, 192
    %v1687 = vadd.s32 %v1662, 200
    %v1688 = vadd.s32 %v1662, 208
    %v1689 = vadd.s32 %v1662, 216
    %v1690 = vadd.s32 %v1662, 224
    %v1691 = vadd.s32 %v1662, 232
    %v1692 = vadd.s32 %v1662, 240
    %v1693 = vadd.s32 %v1662, 248
    %v1694 = vlaneseq
    %v1695 = vand.u32 %v1694, 127
    %v1696 = vadd.s32 %v1695, 128
    %vm1697 = vcmp.eq.s32.totalorder %v1662, %v1695
    %vm1698 = vcmp.eq.s32.totalorder %v1662, %v1696
    %vm1699 = vcmp.eq.s32.totalorder %v1663, %v1695
    %vm1700 = vcmp.eq.s32.totalorder %v1663, %v1696
    %vm1701 = vcmp.eq.s32.totalorder %v1664, %v1695
    %vm1702 = vcmp.eq.s32.totalorder %v1664, %v1696
    %vm1703 = vcmp.eq.s32.totalorder %v1665, %v1695
    %vm1704 = vcmp.eq.s32.totalorder %v1665, %v1696
    %vm1705 = vcmp.eq.s32.totalorder %v1666, %v1695
    %vm1706 = vcmp.eq.s32.totalorder %v1666, %v1696
    %vm1707 = vcmp.eq.s32.totalorder %v1667, %v1695
    %vm1708 = vcmp.eq.s32.totalorder %v1667, %v1696
    %vm1709 = vcmp.eq.s32.totalorder %v1668, %v1695
    %vm1710 = vcmp.eq.s32.totalorder %v1668, %v1696
    %vm1711 = vcmp.eq.s32.totalorder %v1669, %v1695
    %vm1712 = vcmp.eq.s32.totalorder %v1669, %v1696
    %vm1713 = vcmp.eq.s32.totalorder %v1670, %v1695
    %vm1714 = vcmp.eq.s32.totalorder %v1670, %v1696
    %vm1715 = vcmp.eq.s32.totalorder %v1671, %v1695
    %vm1716 = vcmp.eq.s32.totalorder %v1671, %v1696
    %vm1717 = vcmp.eq.s32.totalorder %v1672, %v1695
    %vm1718 = vcmp.eq.s32.totalorder %v1672, %v1696
    %vm1719 = vcmp.eq.s32.totalorder %v1673, %v1695
    %vm1720 = vcmp.eq.s32.totalorder %v1673, %v1696
    %vm1721 = vcmp.eq.s32.totalorder %v1674, %v1695
    %vm1722 = vcmp.eq.s32.totalorder %v1674, %v1696
    %vm1723 = vcmp.eq.s32.totalorder %v1675, %v1695
    %vm1724 = vcmp.eq.s32.totalorder %v1675, %v1696
    %vm1725 = vcmp.eq.s32.totalorder %v1676, %v1695
    %vm1726 = vcmp.eq.s32.totalorder %v1676, %v1696
    %vm1727 = vcmp.eq.s32.totalorder %v1677, %v1695
    %vm1728 = vcmp.eq.s32.totalorder %v1677, %v1696
    %vm1729 = vcmp.eq.s32.totalorder %v1678, %v1695
    %vm1730 = vcmp.eq.s32.totalorder %v1678, %v1696
    %vm1731 = vcmp.eq.s32.totalorder %v1679, %v1695
    %vm1732 = vcmp.eq.s32.totalorder %v1679, %v1696
    %vm1733 = vcmp.eq.s32.totalorder %v1680, %v1695
    %vm1734 = vcmp.eq.s32.totalorder %v1680, %v1696
    %vm1735 = vcmp.eq.s32.totalorder %v1681, %v1695
    %vm1736 = vcmp.eq.s32.totalorder %v1681, %v1696
    %vm1737 = vcmp.eq.s32.totalorder %v1682, %v1695
    %vm1738 = vcmp.eq.s32.totalorder %v1682, %v1696
    %vm1739 = vcmp.eq.s32.totalorder %v1683, %v1695
    %vm1740 = vcmp.eq.s32.totalorder %v1683, %v1696
    %vm1741 = vcmp.eq.s32.totalorder %v1684, %v1695
    %vm1742 = vcmp.eq.s32.totalorder %v1684, %v1696
    %vm1743 = vcmp.eq.s32.totalorder %v1685, %v1695
    %vm1744 = vcmp.eq.s32.totalorder %v1685, %v1696
    %vm1745 = vcmp.eq.s32.totalorder %v1686, %v1695
    %vm1746 = vcmp.eq.s32.totalorder %v1686, %v1696
    %vm1747 = vcmp.eq.s32.totalorder %v1687, %v1695
    %vm1748 = vcmp.eq.s32.totalorder %v1687, %v1696
    %vm1749 = vcmp.eq.s32.totalorder %v1688, %v1695
    %vm1750 = vcmp.eq.s32.totalorder %v1688, %v1696
    %vm1751 = vcmp.eq.s32.totalorder %v1689, %v1695
    %vm1752 = vcmp.eq.s32.totalorder %v1689, %v1696
    %vm1753 = vcmp.eq.s32.totalorder %v1690, %v1695
    %vm1754 = vcmp.eq.s32.totalorder %v1690, %v1696
    %vm1755 = vcmp.eq.s32.totalorder %v1691, %v1695
    %vm1756 = vcmp.eq.s32.totalorder %v1691, %v1696
    %vm1757 = vcmp.eq.s32.totalorder %v1692, %v1695
    %vm1758 = vcmp.eq.s32.totalorder %v1692, %v1696
    %vm1759 = vcmp.eq.s32.totalorder %v1693, %v1695
    %vm1760 = vcmp.eq.s32.totalorder %v1693, %v1696
    %v1761 = vld [vmem:[#allocation10] sm:$0x3]
    %v1763 = vlaneseq
    %v1764 = vshrl.u32 %v1763, 7
    %v1765 = vsub.s32 0, %v1764
    %v1766 = vrot.slane %v1761, %v1765
    %v1767 = vlaneseq
    %v1768 = vshrl.u32 %v1767, 7
    %v1769 = vsub.s32 1, %v1768
    %v1770 = vrot.slane %v1761, %v1769
    %v1773 = vld [vmem:[#allocation11] sm:$0x3]
    %v1775 = vlaneseq
    %v1776 = vshrl.u32 %v1775, 7
    %v1777 = vsub.s32 0, %v1776
    %v1778 = vrot.slane %v1657, %v1777
    %v1779 = vlaneseq
    %v1780 = vshrl.u32 %v1779, 7
    %v1781 = vsub.s32 1, %v1780
    %v1782 = vrot.slane %v1657, %v1781
    %v1785 = vsel %vm1697, %v1778, 0.0
    %v1786 = vsel %vm1698, %v1782, 0.0
    %v1787 = vsel %vm1699, %v1778, 0.0
    %v1788 = vsel %vm1700, %v1782, 0.0
    %v1789 = vsel %vm1701, %v1778, 0.0
    %v1790 = vsel %vm1702, %v1782, 0.0
    %v1791 = vsel %vm1703, %v1778, 0.0
    %v1792 = vsel %vm1704, %v1782, 0.0
    %v1793 = vsel %vm1705, %v1778, 0.0
    %v1794 = vsel %vm1706, %v1782, 0.0
    %v1795 = vsel %vm1707, %v1778, 0.0
    %v1796 = vsel %vm1708, %v1782, 0.0
    %v1797 = vsel %vm1709, %v1778, 0.0
    %v1798 = vsel %vm1710, %v1782, 0.0
    %v1799 = vsel %vm1711, %v1778, 0.0
    %v1800 = vsel %vm1712, %v1782, 0.0
    %v1801 = vsel %vm1713, %v1778, 0.0
    %v1802 = vsel %vm1714, %v1782, 0.0
    %v1803 = vsel %vm1715, %v1778, 0.0
    %v1804 = vsel %vm1716, %v1782, 0.0
    %v1805 = vsel %vm1717, %v1778, 0.0
    %v1806 = vsel %vm1718, %v1782, 0.0
    %v1807 = vsel %vm1719, %v1778, 0.0
    %v1808 = vsel %vm1720, %v1782, 0.0
    %v1809 = vsel %vm1721, %v1778, 0.0
    %v1810 = vsel %vm1722, %v1782, 0.0
    %v1811 = vsel %vm1723, %v1778, 0.0
    %v1812 = vsel %vm1724, %v1782, 0.0
    %v1813 = vsel %vm1725, %v1778, 0.0
    %v1814 = vsel %vm1726, %v1782, 0.0
    %v1815 = vsel %vm1727, %v1778, 0.0
    %v1816 = vsel %vm1728, %v1782, 0.0
    %v1817 = vsel %vm1729, %v1778, 0.0
    %v1818 = vsel %vm1730, %v1782, 0.0
    %v1819 = vsel %vm1731, %v1778, 0.0
    %v1820 = vsel %vm1732, %v1782, 0.0
    %v1821 = vsel %vm1733, %v1778, 0.0
    %v1822 = vsel %vm1734, %v1782, 0.0
    %v1823 = vsel %vm1735, %v1778, 0.0
    %v1824 = vsel %vm1736, %v1782, 0.0
    %v1825 = vsel %vm1737, %v1778, 0.0
    %v1826 = vsel %vm1738, %v1782, 0.0
    %v1827 = vsel %vm1739, %v1778, 0.0
    %v1828 = vsel %vm1740, %v1782, 0.0
    %v1829 = vsel %vm1741, %v1778, 0.0
    %v1830 = vsel %vm1742, %v1782, 0.0
    %v1831 = vsel %vm1743, %v1778, 0.0
    %v1832 = vsel %vm1744, %v1782, 0.0
    %v1833 = vsel %vm1745, %v1778, 0.0
    %v1834 = vsel %vm1746, %v1782, 0.0
    %v1835 = vsel %vm1747, %v1778, 0.0
    %v1836 = vsel %vm1748, %v1782, 0.0
    %v1837 = vsel %vm1749, %v1778, 0.0
    %v1838 = vsel %vm1750, %v1782, 0.0
    %v1839 = vsel %vm1751, %v1778, 0.0
    %v1840 = vsel %vm1752, %v1782, 0.0
    %v1841 = vsel %vm1753, %v1778, 0.0
    %v1842 = vsel %vm1754, %v1782, 0.0
    %v1843 = vsel %vm1755, %v1778, 0.0
    %v1844 = vsel %vm1756, %v1782, 0.0
    %v1845 = vsel %vm1757, %v1778, 0.0
    %v1846 = vsel %vm1758, %v1782, 0.0
    %v1847 = vsel %vm1759, %v1778, 0.0
    %v1848 = vsel %vm1760, %v1782, 0.0
    %v1850 = vlaneseq
    %v1851 = vshrl.u32 %v1850, 7
    %v1852 = vsub.s32 0, %v1851
    %v1853 = vrot.slane %v1773, %v1852
    %v1854 = vlaneseq
    %v1855 = vshrl.u32 %v1854, 7
    %v1856 = vsub.s32 1, %v1855
    %v1857 = vrot.slane %v1773, %v1856
    %1860 = vmatprep.subr.mxu0 %v1770
    %1861 = vmatpush1.msra.mxu0 %v1766
    %1862 = vmatprep.subr.mxu0 %v1770
    %1863 = vmatpush1.msra.mxu0 %v1766
    %1864 = vmatprep.subr.mxu0 %v1770
    %1865 = vmatpush1.msra.mxu0 %v1766
    %1866 = vmatprep.subr.mxu0 %v1770
    %1867 = vmatpush1.msra.mxu0 %v1766
    %1868 = vmatprep.subr.mxu0 %v1770
    %1869 = vmatpush1.msra.mxu0 %v1766
    %1870 = vmatprep.subr.mxu0 %v1770
    %1871 = vmatpush1.msra.mxu0 %v1766
    %1872 = vmatprep.subr.mxu0 %v1770
    %1873 = vmatpush1.msra.mxu0 %v1766
    %1874 = vmatprep.subr.mxu0 %v1770
    %1875 = vmatpush1.msra.mxu0 %v1766
    %1876 = vmatprep.subr.mxu0 %v1770
    %1877 = vmatpush1.msra.mxu0 %v1766
    %1878 = vmatprep.subr.mxu0 %v1770
    %1879 = vmatpush1.msra.mxu0 %v1766
    %1880 = vmatprep.subr.mxu0 %v1770
    %1881 = vmatpush1.msra.mxu0 %v1766
    %1882 = vmatprep.subr.mxu0 %v1770
    %1883 = vmatpush1.msra.mxu0 %v1766
    %1884 = vmatprep.subr.mxu0 %v1770
    %1885 = vmatpush1.msra.mxu0 %v1766
    %1886 = vmatprep.subr.mxu0 %v1770
    %1887 = vmatpush1.msra.mxu0 %v1766
    %1888 = vmatprep.subr.mxu0 %v1770
    %1889 = vmatpush1.msra.mxu0 %v1766
    %1890 = vmatprep.subr.mxu0 %v1770
    %1891 = vmatpush1.msra.mxu0 %v1766
    %1892 = vmatprep.subr.mxu0 %v1770
    %1893 = vmatpush2.msra.mxu0 %v1766
    %1894 = vmatprep.subr.mxu0 %v1770
    %1895 = vmatpush2.msra.mxu0 %v1766
    %1896 = vmatprep.subr.mxu0 %v1770
    %1897 = vmatpush2.msra.mxu0 %v1766
    %1898 = vmatprep.subr.mxu0 %v1770
    %1899 = vmatpush2.msra.mxu0 %v1766
    %1900 = vmatprep.subr.mxu0 %v1770
    %1901 = vmatpush2.msra.mxu0 %v1766
    %1902 = vmatprep.subr.mxu0 %v1770
    %1903 = vmatpush2.msra.mxu0 %v1766
    %1904 = vmatprep.subr.mxu0 %v1770
    %1905 = vmatpush2.msra.mxu0 %v1766
    %1906 = vmatprep.subr.mxu0 %v1770
    %1907 = vmatpush2.msra.mxu0 %v1766
    %1908 = vmatprep.subr.mxu0 %v1770
    %1909 = vmatpush2.msra.mxu0 %v1766
    %1910 = vmatprep.subr.mxu0 %v1770
    %1911 = vmatpush2.msra.mxu0 %v1766
    %1912 = vmatprep.subr.mxu0 %v1770
    %1913 = vmatpush2.msra.mxu0 %v1766
    %1914 = vmatprep.subr.mxu0 %v1770
    %1915 = vmatpush2.msra.mxu0 %v1766
    %1916 = vmatprep.subr.mxu0 %v1770
    %1917 = vmatpush2.msra.mxu0 %v1766
    %1918 = vmatprep.subr.mxu0 %v1770
    %1919 = vmatpush2.msra.mxu0 %v1766
    %1920 = vmatprep.subr.mxu0 %v1770
    %1921 = vmatpush2.msra.mxu0 %v1766
    %1922 = vmatprep.subr.mxu0 %v1770
    %1923 = vmatpush2.msra.mxu0 %v1766
    %1924 = vmatprep.mubr.f32.mxu0 %v1786
    %1925 = vmatmul.mubr.f32.gmra.mxu0 %v1785
    %v1926 = vpop.f32.mrf.mxu0
    %v1927 = vadd.f32 %v1853, %v1926
    %v1928 = vpop.f32.mrf.mxu0
    %v1929 = vadd.f32 %v1857, %v1928
    %1930 = vmatprep.mubr.f32.mxu0 %v1788
    %1931 = vmatmul.mubr.f32.gmra.mxu0 %v1787
    %v1932 = vpop.f32.mrf.mxu0
    %v1933 = vadd.f32 %v1853, %v1932
    %v1934 = vpop.f32.mrf.mxu0
    %v1935 = vadd.f32 %v1857, %v1934
    %1936 = vmatprep.mubr.f32.mxu0 %v1790
    %1937 = vmatmul.mubr.f32.gmra.mxu0 %v1789
    %v1938 = vpop.f32.mrf.mxu0
    %v1939 = vadd.f32 %v1853, %v1938
    %v1940 = vpop.f32.mrf.mxu0
    %v1941 = vadd.f32 %v1857, %v1940
    %1942 = vmatprep.mubr.f32.mxu0 %v1792
    %1943 = vmatmul.mubr.f32.gmra.mxu0 %v1791
    %v1944 = vpop.f32.mrf.mxu0
    %v1945 = vadd.f32 %v1853, %v1944
    %v1946 = vpop.f32.mrf.mxu0
    %v1947 = vadd.f32 %v1857, %v1946
    %1948 = vmatprep.mubr.f32.mxu0 %v1794
    %1949 = vmatmul.mubr.f32.gmra.mxu0 %v1793
    %v1950 = vpop.f32.mrf.mxu0
    %v1951 = vadd.f32 %v1853, %v1950
    %v1952 = vpop.f32.mrf.mxu0
    %v1953 = vadd.f32 %v1857, %v1952
    %1954 = vmatprep.mubr.f32.mxu0 %v1796
    %1955 = vmatmul.mubr.f32.gmra.mxu0 %v1795
    %v1956 = vpop.f32.mrf.mxu0
    %v1957 = vadd.f32 %v1853, %v1956
    %v1958 = vpop.f32.mrf.mxu0
    %v1959 = vadd.f32 %v1857, %v1958
    %1960 = vmatprep.mubr.f32.mxu0 %v1798
    %1961 = vmatmul.mubr.f32.gmra.mxu0 %v1797
    %v1962 = vpop.f32.mrf.mxu0
    %v1963 = vadd.f32 %v1853, %v1962
    %v1964 = vpop.f32.mrf.mxu0
    %v1965 = vadd.f32 %v1857, %v1964
    %1966 = vmatprep.mubr.f32.mxu0 %v1800
    %1967 = vmatmul.mubr.f32.gmra.mxu0 %v1799
    %v1968 = vpop.f32.mrf.mxu0
    %v1969 = vadd.f32 %v1853, %v1968
    %v1970 = vpop.f32.mrf.mxu0
    %v1971 = vadd.f32 %v1857, %v1970
    %1972 = vmatprep.mubr.f32.mxu0 %v1802
    %1973 = vmatmul.mubr.f32.gmra.mxu0 %v1801
    %v1974 = vpop.f32.mrf.mxu0
    %v1975 = vadd.f32 %v1853, %v1974
    %v1976 = vpop.f32.mrf.mxu0
    %v1977 = vadd.f32 %v1857, %v1976
    %1978 = vmatprep.mubr.f32.mxu0 %v1804
    %1979 = vmatmul.mubr.f32.gmra.mxu0 %v1803
    %v1980 = vpop.f32.mrf.mxu0
    %v1981 = vadd.f32 %v1853, %v1980
    %v1982 = vpop.f32.mrf.mxu0
    %v1983 = vadd.f32 %v1857, %v1982
    %1984 = vmatprep.mubr.f32.mxu0 %v1806
    %1985 = vmatmul.mubr.f32.gmra.mxu0 %v1805
    %v1986 = vpop.f32.mrf.mxu0
    %v1987 = vadd.f32 %v1853, %v1986
    %v1988 = vpop.f32.mrf.mxu0
    %v1989 = vadd.f32 %v1857, %v1988
    %1990 = vmatprep.mubr.f32.mxu0 %v1808
    %1991 = vmatmul.mubr.f32.gmra.mxu0 %v1807
    %v1992 = vpop.f32.mrf.mxu0
    %v1993 = vadd.f32 %v1853, %v1992
    %v1994 = vpop.f32.mrf.mxu0
    %v1995 = vadd.f32 %v1857, %v1994
    %1996 = vmatprep.mubr.f32.mxu0 %v1810
    %1997 = vmatmul.mubr.f32.gmra.mxu0 %v1809
    %v1998 = vpop.f32.mrf.mxu0
    %v1999 = vadd.f32 %v1853, %v1998
    %v2000 = vpop.f32.mrf.mxu0
    %v2001 = vadd.f32 %v1857, %v2000
    %2002 = vmatprep.mubr.f32.mxu0 %v1812
    %2003 = vmatmul.mubr.f32.gmra.mxu0 %v1811
    %v2004 = vpop.f32.mrf.mxu0
    %v2005 = vadd.f32 %v1853, %v2004
    %v2006 = vpop.f32.mrf.mxu0
    %v2007 = vadd.f32 %v1857, %v2006
    %2008 = vmatprep.mubr.f32.mxu0 %v1814
    %2009 = vmatmul.mubr.f32.gmra.mxu0 %v1813
    %v2010 = vpop.f32.mrf.mxu0
    %v2011 = vadd.f32 %v1853, %v2010
    %v2012 = vpop.f32.mrf.mxu0
    %v2013 = vadd.f32 %v1857, %v2012
    %2014 = vmatprep.mubr.f32.mxu0 %v1816
    %2015 = vmatmul.mubr.f32.gmra.mxu0 %v1815
    %v2016 = vpop.f32.mrf.mxu0
    %v2017 = vadd.f32 %v1853, %v2016
    %v2018 = vpop.f32.mrf.mxu0
    %v2019 = vadd.f32 %v1857, %v2018
    %2020 = vmatprep.mubr.f32.mxu0 %v1818
    %2021 = vmatmul.mubr.f32.gmra.mxu0 %v1817
    %v2022 = vpop.f32.mrf.mxu0
    %v2023 = vadd.f32 %v1853, %v2022
    %v2024 = vpop.f32.mrf.mxu0
    %v2025 = vadd.f32 %v1857, %v2024
    %2026 = vmatprep.mubr.f32.mxu0 %v1820
    %2027 = vmatmul.mubr.f32.gmra.mxu0 %v1819
    %v2028 = vpop.f32.mrf.mxu0
    %v2029 = vadd.f32 %v1853, %v2028
    %v2030 = vpop.f32.mrf.mxu0
    %v2031 = vadd.f32 %v1857, %v2030
    %2032 = vmatprep.mubr.f32.mxu0 %v1822
    %2033 = vmatmul.mubr.f32.gmra.mxu0 %v1821
    %v2034 = vpop.f32.mrf.mxu0
    %v2035 = vadd.f32 %v1853, %v2034
    %v2036 = vpop.f32.mrf.mxu0
    %v2037 = vadd.f32 %v1857, %v2036
    %2038 = vmatprep.mubr.f32.mxu0 %v1824
    %2039 = vmatmul.mubr.f32.gmra.mxu0 %v1823
    %v2040 = vpop.f32.mrf.mxu0
    %v2041 = vadd.f32 %v1853, %v2040
    %v2042 = vpop.f32.mrf.mxu0
    %v2043 = vadd.f32 %v1857, %v2042
    %2044 = vmatprep.mubr.f32.mxu0 %v1826
    %2045 = vmatmul.mubr.f32.gmra.mxu0 %v1825
    %v2046 = vpop.f32.mrf.mxu0
    %v2047 = vadd.f32 %v1853, %v2046
    %v2048 = vpop.f32.mrf.mxu0
    %v2049 = vadd.f32 %v1857, %v2048
    %2050 = vmatprep.mubr.f32.mxu0 %v1828
    %2051 = vmatmul.mubr.f32.gmra.mxu0 %v1827
    %v2052 = vpop.f32.mrf.mxu0
    %v2053 = vadd.f32 %v1853, %v2052
    %v2054 = vpop.f32.mrf.mxu0
    %v2055 = vadd.f32 %v1857, %v2054
    %2056 = vmatprep.mubr.f32.mxu0 %v1830
    %2057 = vmatmul.mubr.f32.gmra.mxu0 %v1829
    %v2058 = vpop.f32.mrf.mxu0
    %v2059 = vadd.f32 %v1853, %v2058
    %v2060 = vpop.f32.mrf.mxu0
    %v2061 = vadd.f32 %v1857, %v2060
    %2062 = vmatprep.mubr.f32.mxu0 %v1832
    %2063 = vmatmul.mubr.f32.gmra.mxu0 %v1831
    %v2064 = vpop.f32.mrf.mxu0
    %v2065 = vadd.f32 %v1853, %v2064
    %v2066 = vpop.f32.mrf.mxu0
    %v2067 = vadd.f32 %v1857, %v2066
    %2068 = vmatprep.mubr.f32.mxu0 %v1834
    %2069 = vmatmul.mubr.f32.gmra.mxu0 %v1833
    %v2070 = vpop.f32.mrf.mxu0
    %v2071 = vadd.f32 %v1853, %v2070
    %v2072 = vpop.f32.mrf.mxu0
    %v2073 = vadd.f32 %v1857, %v2072
    %2074 = vmatprep.mubr.f32.mxu0 %v1836
    %2075 = vmatmul.mubr.f32.gmra.mxu0 %v1835
    %v2076 = vpop.f32.mrf.mxu0
    %v2077 = vadd.f32 %v1853, %v2076
    %v2078 = vpop.f32.mrf.mxu0
    %v2079 = vadd.f32 %v1857, %v2078
    %2080 = vmatprep.mubr.f32.mxu0 %v1838
    %2081 = vmatmul.mubr.f32.gmra.mxu0 %v1837
    %v2082 = vpop.f32.mrf.mxu0
    %v2083 = vadd.f32 %v1853, %v2082
    %v2084 = vpop.f32.mrf.mxu0
    %v2085 = vadd.f32 %v1857, %v2084
    %2086 = vmatprep.mubr.f32.mxu0 %v1840
    %2087 = vmatmul.mubr.f32.gmra.mxu0 %v1839
    %v2088 = vpop.f32.mrf.mxu0
    %v2089 = vadd.f32 %v1853, %v2088
    %v2090 = vpop.f32.mrf.mxu0
    %v2091 = vadd.f32 %v1857, %v2090
    %2092 = vmatprep.mubr.f32.mxu0 %v1842
    %2093 = vmatmul.mubr.f32.gmra.mxu0 %v1841
    %v2094 = vpop.f32.mrf.mxu0
    %v2095 = vadd.f32 %v1853, %v2094
    %v2096 = vpop.f32.mrf.mxu0
    %v2097 = vadd.f32 %v1857, %v2096
    %2098 = vmatprep.mubr.f32.mxu0 %v1844
    %2099 = vmatmul.mubr.f32.gmra.mxu0 %v1843
    %v2100 = vpop.f32.mrf.mxu0
    %v2101 = vadd.f32 %v1853, %v2100
    %v2102 = vpop.f32.mrf.mxu0
    %v2103 = vadd.f32 %v1857, %v2102
    %2104 = vmatprep.mubr.f32.mxu0 %v1846
    %2105 = vmatmul.mubr.f32.gmra.mxu0 %v1845
    %v2106 = vpop.f32.mrf.mxu0
    %v2107 = vadd.f32 %v1853, %v2106
    %v2108 = vpop.f32.mrf.mxu0
    %v2109 = vadd.f32 %v1857, %v2108
    %2110 = vmatprep.mubr.f32.mxu0 %v1848
    %2111 = vmatmul.mubr.f32.gmra.mxu0 %v1847
    %v2112 = vpop.f32.mrf.mxu0
    %v2113 = vadd.f32 %v1853, %v2112
    %v2114 = vpop.f32.mrf.mxu0
    %v2115 = vadd.f32 %v1857, %v2114
    %2116 = vdwg.mxu0
    %2117 = vst [vmem:[#allocation13] sm:$0xff] %v1927
    %2118 = vst [vmem:[#allocation13 + $0x8] sm:$0xff] %v1929
    %2119 = vst [vmem:[#allocation13 + $0x10] sm:$0xff] %v1933
    %2120 = vst [vmem:[#allocation13 + $0x18] sm:$0xff] %v1935
    %2121 = vst [vmem:[#allocation13 + $0x20] sm:$0xff] %v1939
    %2122 = vst [vmem:[#allocation13 + $0x28] sm:$0xff] %v1941
    %2123 = vst [vmem:[#allocation13 + $0x30] sm:$0xff] %v1945
    %2124 = vst [vmem:[#allocation13 + $0x38] sm:$0xff] %v1947
    %2125 = vst [vmem:[#allocation13 + $0x40] sm:$0xff] %v1951
    %2126 = vst [vmem:[#allocation13 + $0x48] sm:$0xff] %v1953
    %2127 = vst [vmem:[#allocation13 + $0x50] sm:$0xff] %v1957
    %2128 = vst [vmem:[#allocation13 + $0x58] sm:$0xff] %v1959
    %2129 = vst [vmem:[#allocation13 + $0x60] sm:$0xff] %v1963
    %2130 = vst [vmem:[#allocation13 + $0x68] sm:$0xff] %v1965
    %2131 = vst [vmem:[#allocation13 + $0x70] sm:$0xff] %v1969
    %2132 = vst [vmem:[#allocation13 + $0x78] sm:$0xff] %v1971
    %2133 = vst [vmem:[#allocation13 + $0x80] sm:$0xff] %v1975
    %2134 = vst [vmem:[#allocation13 + $0x88] sm:$0xff] %v1977
    %2135 = vst [vmem:[#allocation13 + $0x90] sm:$0xff] %v1981
    %2136 = vst [vmem:[#allocation13 + $0x98] sm:$0xff] %v1983
    %2137 = vst [vmem:[#allocation13 + $0xa0] sm:$0xff] %v1987
    %2138 = vst [vmem:[#allocation13 + $0xa8] sm:$0xff] %v1989
    %2139 = vst [vmem:[#allocation13 + $0xb0] sm:$0xff] %v1993
    %2140 = vst [vmem:[#allocation13 + $0xb8] sm:$0xff] %v1995
    %2141 = vst [vmem:[#allocation13 + $0xc0] sm:$0xff] %v1999
    %2142 = vst [vmem:[#allocation13 + $0xc8] sm:$0xff] %v2001
    %2143 = vst [vmem:[#allocation13 + $0xd0] sm:$0xff] %v2005
    %2144 = vst [vmem:[#allocation13 + $0xd8] sm:$0xff] %v2007
    %2145 = vst [vmem:[#allocation13 + $0xe0] sm:$0xff] %v2011
    %2146 = vst [vmem:[#allocation13 + $0xe8] sm:$0xff] %v2013
    %2147 = vst [vmem:[#allocation13 + $0xf0] sm:$0xff] %v2017
    %2148 = vst [vmem:[#allocation13 + $0xf8] sm:$0xff] %v2019
    %2149 = vst [vmem:[#allocation13 + $0x100] sm:$0xff] %v2023
    %2150 = vst [vmem:[#allocation13 + $0x108] sm:$0xff] %v2025
    %2151 = vst [vmem:[#allocation13 + $0x110] sm:$0xff] %v2029
    %2152 = vst [vmem:[#allocation13 + $0x118] sm:$0xff] %v2031
    %2153 = vst [vmem:[#allocation13 + $0x120] sm:$0xff] %v2035
    %2154 = vst [vmem:[#allocation13 + $0x128] sm:$0xff] %v2037
    %2155 = vst [vmem:[#allocation13 + $0x130] sm:$0xff] %v2041
    %2156 = vst [vmem:[#allocation13 + $0x138] sm:$0xff] %v2043
    %2157 = vst [vmem:[#allocation13 + $0x140] sm:$0xff] %v2047
    %2158 = vst [vmem:[#allocation13 + $0x148] sm:$0xff] %v2049
    %2159 = vst [vmem:[#allocation13 + $0x150] sm:$0xff] %v2053
    %2160 = vst [vmem:[#allocation13 + $0x158] sm:$0xff] %v2055
    %2161 = vst [vmem:[#allocation13 + $0x160] sm:$0xff] %v2059
    %2162 = vst [vmem:[#allocation13 + $0x168] sm:$0xff] %v2061
    %2163 = vst [vmem:[#allocation13 + $0x170] sm:$0xff] %v2065
    %2164 = vst [vmem:[#allocation13 + $0x178] sm:$0xff] %v2067
    %2165 = vst [vmem:[#allocation13 + $0x180] sm:$0xff] %v2071
    %2166 = vst [vmem:[#allocation13 + $0x188] sm:$0xff] %v2073
    %2167 = vst [vmem:[#allocation13 + $0x190] sm:$0xff] %v2077
    %2168 = vst [vmem:[#allocation13 + $0x198] sm:$0xff] %v2079
    %2169 = vst [vmem:[#allocation13 + $0x1a0] sm:$0xff] %v2083
    %2170 = vst [vmem:[#allocation13 + $0x1a8] sm:$0xff] %v2085
    %2171 = vst [vmem:[#allocation13 + $0x1b0] sm:$0xff] %v2089
    %2172 = vst [vmem:[#allocation13 + $0x1b8] sm:$0xff] %v2091
    %2173 = vst [vmem:[#allocation13 + $0x1c0] sm:$0xff] %v2095
    %2174 = vst [vmem:[#allocation13 + $0x1c8] sm:$0xff] %v2097
    %2175 = vst [vmem:[#allocation13 + $0x1d0] sm:$0xff] %v2101
    %2176 = vst [vmem:[#allocation13 + $0x1d8] sm:$0xff] %v2103
    %2177 = vst [vmem:[#allocation13 + $0x1e0] sm:$0xff] %v2107
    %2178 = vst [vmem:[#allocation13 + $0x1e8] sm:$0xff] %v2109
    %2179 = vst [vmem:[#allocation13 + $0x1f0] sm:$0xff] %v2113
    %2180 = vst [vmem:[#allocation13 + $0x1f8] sm:$0xff] %v2115
    %v2182 = vlaneseq
    %v2183 = vshrl.u32 %v2182, 7
    %v2184 = vsub.s32 0, %v2183
    %v2185 = vrot.slane %v1658, %v2184
    %v2186 = vlaneseq
    %v2187 = vshrl.u32 %v2186, 7
    %v2188 = vsub.s32 1, %v2187
    %v2189 = vrot.slane %v1658, %v2188
    %v2192 = vsel %vm1697, %v2185, 0.0
    %v2193 = vsel %vm1698, %v2189, 0.0
    %v2194 = vsel %vm1699, %v2185, 0.0
    %v2195 = vsel %vm1700, %v2189, 0.0
    %v2196 = vsel %vm1701, %v2185, 0.0
    %v2197 = vsel %vm1702, %v2189, 0.0
    %v2198 = vsel %vm1703, %v2185, 0.0
    %v2199 = vsel %vm1704, %v2189, 0.0
    %v2200 = vsel %vm1705, %v2185, 0.0
    %v2201 = vsel %vm1706, %v2189, 0.0
    %v2202 = vsel %vm1707, %v2185, 0.0
    %v2203 = vsel %vm1708, %v2189, 0.0
    %v2204 = vsel %vm1709, %v2185, 0.0
    %v2205 = vsel %vm1710, %v2189, 0.0
    %v2206 = vsel %vm1711, %v2185, 0.0
    %v2207 = vsel %vm1712, %v2189, 0.0
    %v2208 = vsel %vm1713, %v2185, 0.0
    %v2209 = vsel %vm1714, %v2189, 0.0
    %v2210 = vsel %vm1715, %v2185, 0.0
    %v2211 = vsel %vm1716, %v2189, 0.0
    %v2212 = vsel %vm1717, %v2185, 0.0
    %v2213 = vsel %vm1718, %v2189, 0.0
    %v2214 = vsel %vm1719, %v2185, 0.0
    %v2215 = vsel %vm1720, %v2189, 0.0
    %v2216 = vsel %vm1721, %v2185, 0.0
    %v2217 = vsel %vm1722, %v2189, 0.0
    %v2218 = vsel %vm1723, %v2185, 0.0
    %v2219 = vsel %vm1724, %v2189, 0.0
    %v2220 = vsel %vm1725, %v2185, 0.0
    %v2221 = vsel %vm1726, %v2189, 0.0
    %v2222 = vsel %vm1727, %v2185, 0.0
    %v2223 = vsel %vm1728, %v2189, 0.0
    %v2224 = vsel %vm1729, %v2185, 0.0
    %v2225 = vsel %vm1730, %v2189, 0.0
    %v2226 = vsel %vm1731, %v2185, 0.0
    %v2227 = vsel %vm1732, %v2189, 0.0
    %v2228 = vsel %vm1733, %v2185, 0.0
    %v2229 = vsel %vm1734, %v2189, 0.0
    %v2230 = vsel %vm1735, %v2185, 0.0
    %v2231 = vsel %vm1736, %v2189, 0.0
    %v2232 = vsel %vm1737, %v2185, 0.0
    %v2233 = vsel %vm1738, %v2189, 0.0
    %v2234 = vsel %vm1739, %v2185, 0.0
    %v2235 = vsel %vm1740, %v2189, 0.0
    %v2236 = vsel %vm1741, %v2185, 0.0
    %v2237 = vsel %vm1742, %v2189, 0.0
    %v2238 = vsel %vm1743, %v2185, 0.0
    %v2239 = vsel %vm1744, %v2189, 0.0
    %v2240 = vsel %vm1745, %v2185, 0.0
    %v2241 = vsel %vm1746, %v2189, 0.0
    %v2242 = vsel %vm1747, %v2185, 0.0
    %v2243 = vsel %vm1748, %v2189, 0.0
    %v2244 = vsel %vm1749, %v2185, 0.0
    %v2245 = vsel %vm1750, %v2189, 0.0
    %v2246 = vsel %vm1751, %v2185, 0.0
    %v2247 = vsel %vm1752, %v2189, 0.0
    %v2248 = vsel %vm1753, %v2185, 0.0
    %v2249 = vsel %vm1754, %v2189, 0.0
    %v2250 = vsel %vm1755, %v2185, 0.0
    %v2251 = vsel %vm1756, %v2189, 0.0
    %v2252 = vsel %vm1757, %v2185, 0.0
    %v2253 = vsel %vm1758, %v2189, 0.0
    %v2254 = vsel %vm1759, %v2185, 0.0
    %v2255 = vsel %vm1760, %v2189, 0.0
    %2256 = vmatprep.subr.mxu0 %v1770
    %2257 = vmatpush1.msra.mxu0 %v1766
    %2258 = vmatprep.subr.mxu0 %v1770
    %2259 = vmatpush1.msra.mxu0 %v1766
    %2260 = vmatprep.subr.mxu0 %v1770
    %2261 = vmatpush1.msra.mxu0 %v1766
    %2262 = vmatprep.subr.mxu0 %v1770
    %2263 = vmatpush1.msra.mxu0 %v1766
    %2264 = vmatprep.subr.mxu0 %v1770
    %2265 = vmatpush1.msra.mxu0 %v1766
    %2266 = vmatprep.subr.mxu0 %v1770
    %2267 = vmatpush1.msra.mxu0 %v1766
    %2268 = vmatprep.subr.mxu0 %v1770
    %2269 = vmatpush1.msra.mxu0 %v1766
    %2270 = vmatprep.subr.mxu0 %v1770
    %2271 = vmatpush1.msra.mxu0 %v1766
    %2272 = vmatprep.subr.mxu0 %v1770
    %2273 = vmatpush1.msra.mxu0 %v1766
    %2274 = vmatprep.subr.mxu0 %v1770
    %2275 = vmatpush1.msra.mxu0 %v1766
    %2276 = vmatprep.subr.mxu0 %v1770
    %2277 = vmatpush1.msra.mxu0 %v1766
    %2278 = vmatprep.subr.mxu0 %v1770
    %2279 = vmatpush1.msra.mxu0 %v1766
    %2280 = vmatprep.subr.mxu0 %v1770
    %2281 = vmatpush1.msra.mxu0 %v1766
    %2282 = vmatprep.subr.mxu0 %v1770
    %2283 = vmatpush1.msra.mxu0 %v1766
    %2284 = vmatprep.subr.mxu0 %v1770
    %2285 = vmatpush1.msra.mxu0 %v1766
    %2286 = vmatprep.subr.mxu0 %v1770
    %2287 = vmatpush1.msra.mxu0 %v1766
    %2288 = vmatprep.subr.mxu0 %v1770
    %2289 = vmatpush2.msra.mxu0 %v1766
    %2290 = vmatprep.subr.mxu0 %v1770
    %2291 = vmatpush2.msra.mxu0 %v1766
    %2292 = vmatprep.subr.mxu0 %v1770
    %2293 = vmatpush2.msra.mxu0 %v1766
    %2294 = vmatprep.subr.mxu0 %v1770
    %2295 = vmatpush2.msra.mxu0 %v1766
    %2296 = vmatprep.subr.mxu0 %v1770
    %2297 = vmatpush2.msra.mxu0 %v1766
    %2298 = vmatprep.subr.mxu0 %v1770
    %2299 = vmatpush2.msra.mxu0 %v1766
    %2300 = vmatprep.subr.mxu0 %v1770
    %2301 = vmatpush2.msra.mxu0 %v1766
    %2302 = vmatprep.subr.mxu0 %v1770
    %2303 = vmatpush2.msra.mxu0 %v1766
    %2304 = vmatprep.subr.mxu0 %v1770
    %2305 = vmatpush2.msra.mxu0 %v1766
    %2306 = vmatprep.subr.mxu0 %v1770
    %2307 = vmatpush2.msra.mxu0 %v1766
    %2308 = vmatprep.subr.mxu0 %v1770
    %2309 = vmatpush2.msra.mxu0 %v1766
    %2310 = vmatprep.subr.mxu0 %v1770
    %2311 = vmatpush2.msra.mxu0 %v1766
    %2312 = vmatprep.subr.mxu0 %v1770
    %2313 = vmatpush2.msra.mxu0 %v1766
    %2314 = vmatprep.subr.mxu0 %v1770
    %2315 = vmatpush2.msra.mxu0 %v1766
    %2316 = vmatprep.subr.mxu0 %v1770
    %2317 = vmatpush2.msra.mxu0 %v1766
    %2318 = vmatprep.subr.mxu0 %v1770
    %2319 = vmatpush2.msra.mxu0 %v1766
    %2320 = vmatprep.mubr.f32.mxu0 %v2193
    %2321 = vmatmul.mubr.f32.gmra.mxu0 %v2192
    %v2322 = vpop.f32.mrf.mxu0
    %v2323 = vadd.f32 %v1853, %v2322
    %v2324 = vpop.f32.mrf.mxu0
    %v2325 = vadd.f32 %v1857, %v2324
    %2326 = vmatprep.mubr.f32.mxu0 %v2195
    %2327 = vmatmul.mubr.f32.gmra.mxu0 %v2194
    %v2328 = vpop.f32.mrf.mxu0
    %v2329 = vadd.f32 %v1853, %v2328
    %v2330 = vpop.f32.mrf.mxu0
    %v2331 = vadd.f32 %v1857, %v2330
    %2332 = vmatprep.mubr.f32.mxu0 %v2197
    %2333 = vmatmul.mubr.f32.gmra.mxu0 %v2196
    %v2334 = vpop.f32.mrf.mxu0
    %v2335 = vadd.f32 %v1853, %v2334
    %v2336 = vpop.f32.mrf.mxu0
    %v2337 = vadd.f32 %v1857, %v2336
    %2338 = vmatprep.mubr.f32.mxu0 %v2199
    %2339 = vmatmul.mubr.f32.gmra.mxu0 %v2198
    %v2340 = vpop.f32.mrf.mxu0
    %v2341 = vadd.f32 %v1853, %v2340
    %v2342 = vpop.f32.mrf.mxu0
    %v2343 = vadd.f32 %v1857, %v2342
    %2344 = vmatprep.mubr.f32.mxu0 %v2201
    %2345 = vmatmul.mubr.f32.gmra.mxu0 %v2200
    %v2346 = vpop.f32.mrf.mxu0
    %v2347 = vadd.f32 %v1853, %v2346
    %v2348 = vpop.f32.mrf.mxu0
    %v2349 = vadd.f32 %v1857, %v2348
    %2350 = vmatprep.mubr.f32.mxu0 %v2203
    %2351 = vmatmul.mubr.f32.gmra.mxu0 %v2202
    %v2352 = vpop.f32.mrf.mxu0
    %v2353 = vadd.f32 %v1853, %v2352
    %v2354 = vpop.f32.mrf.mxu0
    %v2355 = vadd.f32 %v1857, %v2354
    %2356 = vmatprep.mubr.f32.mxu0 %v2205
    %2357 = vmatmul.mubr.f32.gmra.mxu0 %v2204
    %v2358 = vpop.f32.mrf.mxu0
    %v2359 = vadd.f32 %v1853, %v2358
    %v2360 = vpop.f32.mrf.mxu0
    %v2361 = vadd.f32 %v1857, %v2360
    %2362 = vmatprep.mubr.f32.mxu0 %v2207
    %2363 = vmatmul.mubr.f32.gmra.mxu0 %v2206
    %v2364 = vpop.f32.mrf.mxu0
    %v2365 = vadd.f32 %v1853, %v2364
    %v2366 = vpop.f32.mrf.mxu0
    %v2367 = vadd.f32 %v1857, %v2366
    %2368 = vmatprep.mubr.f32.mxu0 %v2209
    %2369 = vmatmul.mubr.f32.gmra.mxu0 %v2208
    %v2370 = vpop.f32.mrf.mxu0
    %v2371 = vadd.f32 %v1853, %v2370
    %v2372 = vpop.f32.mrf.mxu0
    %v2373 = vadd.f32 %v1857, %v2372
    %2374 = vmatprep.mubr.f32.mxu0 %v2211
    %2375 = vmatmul.mubr.f32.gmra.mxu0 %v2210
    %v2376 = vpop.f32.mrf.mxu0
    %v2377 = vadd.f32 %v1853, %v2376
    %v2378 = vpop.f32.mrf.mxu0
    %v2379 = vadd.f32 %v1857, %v2378
    %2380 = vmatprep.mubr.f32.mxu0 %v2213
    %2381 = vmatmul.mubr.f32.gmra.mxu0 %v2212
    %v2382 = vpop.f32.mrf.mxu0
    %v2383 = vadd.f32 %v1853, %v2382
    %v2384 = vpop.f32.mrf.mxu0
    %v2385 = vadd.f32 %v1857, %v2384
    %2386 = vmatprep.mubr.f32.mxu0 %v2215
    %2387 = vmatmul.mubr.f32.gmra.mxu0 %v2214
    %v2388 = vpop.f32.mrf.mxu0
    %v2389 = vadd.f32 %v1853, %v2388
    %v2390 = vpop.f32.mrf.mxu0
    %v2391 = vadd.f32 %v1857, %v2390
    %2392 = vmatprep.mubr.f32.mxu0 %v2217
    %2393 = vmatmul.mubr.f32.gmra.mxu0 %v2216
    %v2394 = vpop.f32.mrf.mxu0
    %v2395 = vadd.f32 %v1853, %v2394
    %v2396 = vpop.f32.mrf.mxu0
    %v2397 = vadd.f32 %v1857, %v2396
    %2398 = vmatprep.mubr.f32.mxu0 %v2219
    %2399 = vmatmul.mubr.f32.gmra.mxu0 %v2218
    %v2400 = vpop.f32.mrf.mxu0
    %v2401 = vadd.f32 %v1853, %v2400
    %v2402 = vpop.f32.mrf.mxu0
    %v2403 = vadd.f32 %v1857, %v2402
    %2404 = vmatprep.mubr.f32.mxu0 %v2221
    %2405 = vmatmul.mubr.f32.gmra.mxu0 %v2220
    %v2406 = vpop.f32.mrf.mxu0
    %v2407 = vadd.f32 %v1853, %v2406
    %v2408 = vpop.f32.mrf.mxu0
    %v2409 = vadd.f32 %v1857, %v2408
    %2410 = vmatprep.mubr.f32.mxu0 %v2223
    %2411 = vmatmul.mubr.f32.gmra.mxu0 %v2222
    %v2412 = vpop.f32.mrf.mxu0
    %v2413 = vadd.f32 %v1853, %v2412
    %v2414 = vpop.f32.mrf.mxu0
    %v2415 = vadd.f32 %v1857, %v2414
    %2416 = vmatprep.mubr.f32.mxu0 %v2225
    %2417 = vmatmul.mubr.f32.gmra.mxu0 %v2224
    %v2418 = vpop.f32.mrf.mxu0
    %v2419 = vadd.f32 %v1853, %v2418
    %v2420 = vpop.f32.mrf.mxu0
    %v2421 = vadd.f32 %v1857, %v2420
    %2422 = vmatprep.mubr.f32.mxu0 %v2227
    %2423 = vmatmul.mubr.f32.gmra.mxu0 %v2226
    %v2424 = vpop.f32.mrf.mxu0
    %v2425 = vadd.f32 %v1853, %v2424
    %v2426 = vpop.f32.mrf.mxu0
    %v2427 = vadd.f32 %v1857, %v2426
    %2428 = vmatprep.mubr.f32.mxu0 %v2229
    %2429 = vmatmul.mubr.f32.gmra.mxu0 %v2228
    %v2430 = vpop.f32.mrf.mxu0
    %v2431 = vadd.f32 %v1853, %v2430
    %v2432 = vpop.f32.mrf.mxu0
    %v2433 = vadd.f32 %v1857, %v2432
    %2434 = vmatprep.mubr.f32.mxu0 %v2231
    %2435 = vmatmul.mubr.f32.gmra.mxu0 %v2230
    %v2436 = vpop.f32.mrf.mxu0
    %v2437 = vadd.f32 %v1853, %v2436
    %v2438 = vpop.f32.mrf.mxu0
    %v2439 = vadd.f32 %v1857, %v2438
    %2440 = vmatprep.mubr.f32.mxu0 %v2233
    %2441 = vmatmul.mubr.f32.gmra.mxu0 %v2232
    %v2442 = vpop.f32.mrf.mxu0
    %v2443 = vadd.f32 %v1853, %v2442
    %v2444 = vpop.f32.mrf.mxu0
    %v2445 = vadd.f32 %v1857, %v2444
    %2446 = vmatprep.mubr.f32.mxu0 %v2235
    %2447 = vmatmul.mubr.f32.gmra.mxu0 %v2234
    %v2448 = vpop.f32.mrf.mxu0
    %v2449 = vadd.f32 %v1853, %v2448
    %v2450 = vpop.f32.mrf.mxu0
    %v2451 = vadd.f32 %v1857, %v2450
    %2452 = vmatprep.mubr.f32.mxu0 %v2237
    %2453 = vmatmul.mubr.f32.gmra.mxu0 %v2236
    %v2454 = vpop.f32.mrf.mxu0
    %v2455 = vadd.f32 %v1853, %v2454
    %v2456 = vpop.f32.mrf.mxu0
    %v2457 = vadd.f32 %v1857, %v2456
    %2458 = vmatprep.mubr.f32.mxu0 %v2239
    %2459 = vmatmul.mubr.f32.gmra.mxu0 %v2238
    %v2460 = vpop.f32.mrf.mxu0
    %v2461 = vadd.f32 %v1853, %v2460
    %v2462 = vpop.f32.mrf.mxu0
    %v2463 = vadd.f32 %v1857, %v2462
    %2464 = vmatprep.mubr.f32.mxu0 %v2241
    %2465 = vmatmul.mubr.f32.gmra.mxu0 %v2240
    %v2466 = vpop.f32.mrf.mxu0
    %v2467 = vadd.f32 %v1853, %v2466
    %v2468 = vpop.f32.mrf.mxu0
    %v2469 = vadd.f32 %v1857, %v2468
    %2470 = vmatprep.mubr.f32.mxu0 %v2243
    %2471 = vmatmul.mubr.f32.gmra.mxu0 %v2242
    %v2472 = vpop.f32.mrf.mxu0
    %v2473 = vadd.f32 %v1853, %v2472
    %v2474 = vpop.f32.mrf.mxu0
    %v2475 = vadd.f32 %v1857, %v2474
    %2476 = vmatprep.mubr.f32.mxu0 %v2245
    %2477 = vmatmul.mubr.f32.gmra.mxu0 %v2244
    %v2478 = vpop.f32.mrf.mxu0
    %v2479 = vadd.f32 %v1853, %v2478
    %v2480 = vpop.f32.mrf.mxu0
    %v2481 = vadd.f32 %v1857, %v2480
    %2482 = vmatprep.mubr.f32.mxu0 %v2247
    %2483 = vmatmul.mubr.f32.gmra.mxu0 %v2246
    %v2484 = vpop.f32.mrf.mxu0
    %v2485 = vadd.f32 %v1853, %v2484
    %v2486 = vpop.f32.mrf.mxu0
    %v2487 = vadd.f32 %v1857, %v2486
    %2488 = vmatprep.mubr.f32.mxu0 %v2249
    %2489 = vmatmul.mubr.f32.gmra.mxu0 %v2248
    %v2490 = vpop.f32.mrf.mxu0
    %v2491 = vadd.f32 %v1853, %v2490
    %v2492 = vpop.f32.mrf.mxu0
    %v2493 = vadd.f32 %v1857, %v2492
    %2494 = vmatprep.mubr.f32.mxu0 %v2251
    %2495 = vmatmul.mubr.f32.gmra.mxu0 %v2250
    %v2496 = vpop.f32.mrf.mxu0
    %v2497 = vadd.f32 %v1853, %v2496
    %v2498 = vpop.f32.mrf.mxu0
    %v2499 = vadd.f32 %v1857, %v2498
    %2500 = vmatprep.mubr.f32.mxu0 %v2253
    %2501 = vmatmul.mubr.f32.gmra.mxu0 %v2252
    %v2502 = vpop.f32.mrf.mxu0
    %v2503 = vadd.f32 %v1853, %v2502
    %v2504 = vpop.f32.mrf.mxu0
    %v2505 = vadd.f32 %v1857, %v2504
    %2506 = vmatprep.mubr.f32.mxu0 %v2255
    %2507 = vmatmul.mubr.f32.gmra.mxu0 %v2254
    %v2508 = vpop.f32.mrf.mxu0
    %v2509 = vadd.f32 %v1853, %v2508
    %v2510 = vpop.f32.mrf.mxu0
    %v2511 = vadd.f32 %v1857, %v2510
    %2512 = vdwg.mxu0
    %s2513 = scalar_lea.vmem [#allocation13], 512
    %2514 = vst [vmem:[%s2513] sm:$0xff] %v2323
    %2515 = vst [vmem:[%s2513 + $0x8] sm:$0xff] %v2325
    %2516 = vst [vmem:[%s2513 + $0x10] sm:$0xff] %v2329
    %2517 = vst [vmem:[%s2513 + $0x18] sm:$0xff] %v2331
    %2518 = vst [vmem:[%s2513 + $0x20] sm:$0xff] %v2335
    %2519 = vst [vmem:[%s2513 + $0x28] sm:$0xff] %v2337
    %2520 = vst [vmem:[%s2513 + $0x30] sm:$0xff] %v2341
    %2521 = vst [vmem:[%s2513 + $0x38] sm:$0xff] %v2343
    %2522 = vst [vmem:[%s2513 + $0x40] sm:$0xff] %v2347
    %2523 = vst [vmem:[%s2513 + $0x48] sm:$0xff] %v2349
    %2524 = vst [vmem:[%s2513 + $0x50] sm:$0xff] %v2353
    %2525 = vst [vmem:[%s2513 + $0x58] sm:$0xff] %v2355
    %2526 = vst [vmem:[%s2513 + $0x60] sm:$0xff] %v2359
    %2527 = vst [vmem:[%s2513 + $0x68] sm:$0xff] %v2361
    %2528 = vst [vmem:[%s2513 + $0x70] sm:$0xff] %v2365
    %2529 = vst [vmem:[%s2513 + $0x78] sm:$0xff] %v2367
    %2530 = vst [vmem:[%s2513 + $0x80] sm:$0xff] %v2371
    %2531 = vst [vmem:[%s2513 + $0x88] sm:$0xff] %v2373
    %2532 = vst [vmem:[%s2513 + $0x90] sm:$0xff] %v2377
    %2533 = vst [vmem:[%s2513 + $0x98] sm:$0xff] %v2379
    %2534 = vst [vmem:[%s2513 + $0xa0] sm:$0xff] %v2383
    %2535 = vst [vmem:[%s2513 + $0xa8] sm:$0xff] %v2385
    %2536 = vst [vmem:[%s2513 + $0xb0] sm:$0xff] %v2389
    %2537 = vst [vmem:[%s2513 + $0xb8] sm:$0xff] %v2391
    %2538 = vst [vmem:[%s2513 + $0xc0] sm:$0xff] %v2395
    %2539 = vst [vmem:[%s2513 + $0xc8] sm:$0xff] %v2397
    %2540 = vst [vmem:[%s2513 + $0xd0] sm:$0xff] %v2401
    %2541 = vst [vmem:[%s2513 + $0xd8] sm:$0xff] %v2403
    %2542 = vst [vmem:[%s2513 + $0xe0] sm:$0xff] %v2407
    %2543 = vst [vmem:[%s2513 + $0xe8] sm:$0xff] %v2409
    %2544 = vst [vmem:[%s2513 + $0xf0] sm:$0xff] %v2413
    %2545 = vst [vmem:[%s2513 + $0xf8] sm:$0xff] %v2415
    %2546 = vst [vmem:[%s2513 + $0x100] sm:$0xff] %v2419
    %2547 = vst [vmem:[%s2513 + $0x108] sm:$0xff] %v2421
    %2548 = vst [vmem:[%s2513 + $0x110] sm:$0xff] %v2425
    %2549 = vst [vmem:[%s2513 + $0x118] sm:$0xff] %v2427
    %2550 = vst [vmem:[%s2513 + $0x120] sm:$0xff] %v2431
    %2551 = vst [vmem:[%s2513 + $0x128] sm:$0xff] %v2433
    %2552 = vst [vmem:[%s2513 + $0x130] sm:$0xff] %v2437
    %2553 = vst [vmem:[%s2513 + $0x138] sm:$0xff] %v2439
    %2554 = vst [vmem:[%s2513 + $0x140] sm:$0xff] %v2443
    %2555 = vst [vmem:[%s2513 + $0x148] sm:$0xff] %v2445
    %2556 = vst [vmem:[%s2513 + $0x150] sm:$0xff] %v2449
    %2557 = vst [vmem:[%s2513 + $0x158] sm:$0xff] %v2451
    %2558 = vst [vmem:[%s2513 + $0x160] sm:$0xff] %v2455
    %2559 = vst [vmem:[%s2513 + $0x168] sm:$0xff] %v2457
    %2560 = vst [vmem:[%s2513 + $0x170] sm:$0xff] %v2461
    %2561 = vst [vmem:[%s2513 + $0x178] sm:$0xff] %v2463
    %2562 = vst [vmem:[%s2513 + $0x180] sm:$0xff] %v2467
    %2563 = vst [vmem:[%s2513 + $0x188] sm:$0xff] %v2469
    %2564 = vst [vmem:[%s2513 + $0x190] sm:$0xff] %v2473
    %2565 = vst [vmem:[%s2513 + $0x198] sm:$0xff] %v2475
    %2566 = vst [vmem:[%s2513 + $0x1a0] sm:$0xff] %v2479
    %2567 = vst [vmem:[%s2513 + $0x1a8] sm:$0xff] %v2481
    %2568 = vst [vmem:[%s2513 + $0x1b0] sm:$0xff] %v2485
    %2569 = vst [vmem:[%s2513 + $0x1b8] sm:$0xff] %v2487
    %2570 = vst [vmem:[%s2513 + $0x1c0] sm:$0xff] %v2491
    %2571 = vst [vmem:[%s2513 + $0x1c8] sm:$0xff] %v2493
    %2572 = vst [vmem:[%s2513 + $0x1d0] sm:$0xff] %v2497
    %2573 = vst [vmem:[%s2513 + $0x1d8] sm:$0xff] %v2499
    %2574 = vst [vmem:[%s2513 + $0x1e0] sm:$0xff] %v2503
    %2575 = vst [vmem:[%s2513 + $0x1e8] sm:$0xff] %v2505
    %2576 = vst [vmem:[%s2513 + $0x1f0] sm:$0xff] %v2509
    %2577 = vst [vmem:[%s2513 + $0x1f8] sm:$0xff] %v2511
    %v2579 = vlaneseq
    %v2580 = vshrl.u32 %v2579, 7
    %v2581 = vsub.s32 0, %v2580
    %v2582 = vrot.slane %v1659, %v2581
    %v2583 = vlaneseq
    %v2584 = vshrl.u32 %v2583, 7
    %v2585 = vsub.s32 1, %v2584
    %v2586 = vrot.slane %v1659, %v2585
    %v2589 = vsel %vm1697, %v2582, 0.0
    %v2590 = vsel %vm1698, %v2586, 0.0
    %v2591 = vsel %vm1699, %v2582, 0.0
    %v2592 = vsel %vm1700, %v2586, 0.0
    %v2593 = vsel %vm1701, %v2582, 0.0
    %v2594 = vsel %vm1702, %v2586, 0.0
    %v2595 = vsel %vm1703, %v2582, 0.0
    %v2596 = vsel %vm1704, %v2586, 0.0
    %v2597 = vsel %vm1705, %v2582, 0.0
    %v2598 = vsel %vm1706, %v2586, 0.0
    %v2599 = vsel %vm1707, %v2582, 0.0
    %v2600 = vsel %vm1708, %v2586, 0.0
    %v2601 = vsel %vm1709, %v2582, 0.0
    %v2602 = vsel %vm1710, %v2586, 0.0
    %v2603 = vsel %vm1711, %v2582, 0.0
    %v2604 = vsel %vm1712, %v2586, 0.0
    %v2605 = vsel %vm1713, %v2582, 0.0
    %v2606 = vsel %vm1714, %v2586, 0.0
    %v2607 = vsel %vm1715, %v2582, 0.0
    %v2608 = vsel %vm1716, %v2586, 0.0
    %v2609 = vsel %vm1717, %v2582, 0.0
    %v2610 = vsel %vm1718, %v2586, 0.0
    %v2611 = vsel %vm1719, %v2582, 0.0
    %v2612 = vsel %vm1720, %v2586, 0.0
    %v2613 = vsel %vm1721, %v2582, 0.0
    %v2614 = vsel %vm1722, %v2586, 0.0
    %v2615 = vsel %vm1723, %v2582, 0.0
    %v2616 = vsel %vm1724, %v2586, 0.0
    %v2617 = vsel %vm1725, %v2582, 0.0
    %v2618 = vsel %vm1726, %v2586, 0.0
    %v2619 = vsel %vm1727, %v2582, 0.0
    %v2620 = vsel %vm1728, %v2586, 0.0
    %v2621 = vsel %vm1729, %v2582, 0.0
    %v2622 = vsel %vm1730, %v2586, 0.0
    %v2623 = vsel %vm1731, %v2582, 0.0
    %v2624 = vsel %vm1732, %v2586, 0.0
    %v2625 = vsel %vm1733, %v2582, 0.0
    %v2626 = vsel %vm1734, %v2586, 0.0
    %v2627 = vsel %vm1735, %v2582, 0.0
    %v2628 = vsel %vm1736, %v2586, 0.0
    %v2629 = vsel %vm1737, %v2582, 0.0
    %v2630 = vsel %vm1738, %v2586, 0.0
    %v2631 = vsel %vm1739, %v2582, 0.0
    %v2632 = vsel %vm1740, %v2586, 0.0
    %v2633 = vsel %vm1741, %v2582, 0.0
    %v2634 = vsel %vm1742, %v2586, 0.0
    %v2635 = vsel %vm1743, %v2582, 0.0
    %v2636 = vsel %vm1744, %v2586, 0.0
    %v2637 = vsel %vm1745, %v2582, 0.0
    %v2638 = vsel %vm1746, %v2586, 0.0
    %v2639 = vsel %vm1747, %v2582, 0.0
    %v2640 = vsel %vm1748, %v2586, 0.0
    %v2641 = vsel %vm1749, %v2582, 0.0
    %v2642 = vsel %vm1750, %v2586, 0.0
    %v2643 = vsel %vm1751, %v2582, 0.0
    %v2644 = vsel %vm1752, %v2586, 0.0
    %v2645 = vsel %vm1753, %v2582, 0.0
    %v2646 = vsel %vm1754, %v2586, 0.0
    %v2647 = vsel %vm1755, %v2582, 0.0
    %v2648 = vsel %vm1756, %v2586, 0.0
    %v2649 = vsel %vm1757, %v2582, 0.0
    %v2650 = vsel %vm1758, %v2586, 0.0
    %v2651 = vsel %vm1759, %v2582, 0.0
    %v2652 = vsel %vm1760, %v2586, 0.0
    %2653 = vmatprep.subr.mxu0 %v1770
    %2654 = vmatpush1.msra.mxu0 %v1766
    %2655 = vmatprep.subr.mxu0 %v1770
    %2656 = vmatpush1.msra.mxu0 %v1766
    %2657 = vmatprep.subr.mxu0 %v1770
    %2658 = vmatpush1.msra.mxu0 %v1766
    %2659 = vmatprep.subr.mxu0 %v1770
    %2660 = vmatpush1.msra.mxu0 %v1766
    %2661 = vmatprep.subr.mxu0 %v1770
    %2662 = vmatpush1.msra.mxu0 %v1766
    %2663 = vmatprep.subr.mxu0 %v1770
    %2664 = vmatpush1.msra.mxu0 %v1766
    %2665 = vmatprep.subr.mxu0 %v1770
    %2666 = vmatpush1.msra.mxu0 %v1766
    %2667 = vmatprep.subr.mxu0 %v1770
    %2668 = vmatpush1.msra.mxu0 %v1766
    %2669 = vmatprep.subr.mxu0 %v1770
    %2670 = vmatpush1.msra.mxu0 %v1766
    %2671 = vmatprep.subr.mxu0 %v1770
    %2672 = vmatpush1.msra.mxu0 %v1766
    %2673 = vmatprep.subr.mxu0 %v1770
    %2674 = vmatpush1.msra.mxu0 %v1766
    %2675 = vmatprep.subr.mxu0 %v1770
    %2676 = vmatpush1.msra.mxu0 %v1766
    %2677 = vmatprep.subr.mxu0 %v1770
    %2678 = vmatpush1.msra.mxu0 %v1766
    %2679 = vmatprep.subr.mxu0 %v1770
    %2680 = vmatpush1.msra.mxu0 %v1766
    %2681 = vmatprep.subr.mxu0 %v1770
    %2682 = vmatpush1.msra.mxu0 %v1766
    %2683 = vmatprep.subr.mxu0 %v1770
    %2684 = vmatpush1.msra.mxu0 %v1766
    %2685 = vmatprep.subr.mxu0 %v1770
    %2686 = vmatpush2.msra.mxu0 %v1766
    %2687 = vmatprep.subr.mxu0 %v1770
    %2688 = vmatpush2.msra.mxu0 %v1766
    %2689 = vmatprep.subr.mxu0 %v1770
    %2690 = vmatpush2.msra.mxu0 %v1766
    %2691 = vmatprep.subr.mxu0 %v1770
    %2692 = vmatpush2.msra.mxu0 %v1766
    %2693 = vmatprep.subr.mxu0 %v1770
    %2694 = vmatpush2.msra.mxu0 %v1766
    %2695 = vmatprep.subr.mxu0 %v1770
    %2696 = vmatpush2.msra.mxu0 %v1766
    %2697 = vmatprep.subr.mxu0 %v1770
    %2698 = vmatpush2.msra.mxu0 %v1766
    %2699 = vmatprep.subr.mxu0 %v1770
    %2700 = vmatpush2.msra.mxu0 %v1766
    %2701 = vmatprep.subr.mxu0 %v1770
    %2702 = vmatpush2.msra.mxu0 %v1766
    %2703 = vmatprep.subr.mxu0 %v1770
    %2704 = vmatpush2.msra.mxu0 %v1766
    %2705 = vmatprep.subr.mxu0 %v1770
    %2706 = vmatpush2.msra.mxu0 %v1766
    %2707 = vmatprep.subr.mxu0 %v1770
    %2708 = vmatpush2.msra.mxu0 %v1766
    %2709 = vmatprep.subr.mxu0 %v1770
    %2710 = vmatpush2.msra.mxu0 %v1766
    %2711 = vmatprep.subr.mxu0 %v1770
    %2712 = vmatpush2.msra.mxu0 %v1766
    %2713 = vmatprep.subr.mxu0 %v1770
    %2714 = vmatpush2.msra.mxu0 %v1766
    %2715 = vmatprep.subr.mxu0 %v1770
    %2716 = vmatpush2.msra.mxu0 %v1766
    %2717 = vmatprep.mubr.f32.mxu0 %v2590
    %2718 = vmatmul.mubr.f32.gmra.mxu0 %v2589
    %v2719 = vpop.f32.mrf.mxu0
    %v2720 = vadd.f32 %v1853, %v2719
    %v2721 = vpop.f32.mrf.mxu0
    %v2722 = vadd.f32 %v1857, %v2721
    %2723 = vmatprep.mubr.f32.mxu0 %v2592
    %2724 = vmatmul.mubr.f32.gmra.mxu0 %v2591
    %v2725 = vpop.f32.mrf.mxu0
    %v2726 = vadd.f32 %v1853, %v2725
    %v2727 = vpop.f32.mrf.mxu0
    %v2728 = vadd.f32 %v1857, %v2727
    %2729 = vmatprep.mubr.f32.mxu0 %v2594
    %2730 = vmatmul.mubr.f32.gmra.mxu0 %v2593
    %v2731 = vpop.f32.mrf.mxu0
    %v2732 = vadd.f32 %v1853, %v2731
    %v2733 = vpop.f32.mrf.mxu0
    %v2734 = vadd.f32 %v1857, %v2733
    %2735 = vmatprep.mubr.f32.mxu0 %v2596
    %2736 = vmatmul.mubr.f32.gmra.mxu0 %v2595
    %v2737 = vpop.f32.mrf.mxu0
    %v2738 = vadd.f32 %v1853, %v2737
    %v2739 = vpop.f32.mrf.mxu0
    %v2740 = vadd.f32 %v1857, %v2739
    %2741 = vmatprep.mubr.f32.mxu0 %v2598
    %2742 = vmatmul.mubr.f32.gmra.mxu0 %v2597
    %v2743 = vpop.f32.mrf.mxu0
    %v2744 = vadd.f32 %v1853, %v2743
    %v2745 = vpop.f32.mrf.mxu0
    %v2746 = vadd.f32 %v1857, %v2745
    %2747 = vmatprep.mubr.f32.mxu0 %v2600
    %2748 = vmatmul.mubr.f32.gmra.mxu0 %v2599
    %v2749 = vpop.f32.mrf.mxu0
    %v2750 = vadd.f32 %v1853, %v2749
    %v2751 = vpop.f32.mrf.mxu0
    %v2752 = vadd.f32 %v1857, %v2751
    %2753 = vmatprep.mubr.f32.mxu0 %v2602
    %2754 = vmatmul.mubr.f32.gmra.mxu0 %v2601
    %v2755 = vpop.f32.mrf.mxu0
    %v2756 = vadd.f32 %v1853, %v2755
    %v2757 = vpop.f32.mrf.mxu0
    %v2758 = vadd.f32 %v1857, %v2757
    %2759 = vmatprep.mubr.f32.mxu0 %v2604
    %2760 = vmatmul.mubr.f32.gmra.mxu0 %v2603
    %v2761 = vpop.f32.mrf.mxu0
    %v2762 = vadd.f32 %v1853, %v2761
    %v2763 = vpop.f32.mrf.mxu0
    %v2764 = vadd.f32 %v1857, %v2763
    %2765 = vmatprep.mubr.f32.mxu0 %v2606
    %2766 = vmatmul.mubr.f32.gmra.mxu0 %v2605
    %v2767 = vpop.f32.mrf.mxu0
    %v2768 = vadd.f32 %v1853, %v2767
    %v2769 = vpop.f32.mrf.mxu0
    %v2770 = vadd.f32 %v1857, %v2769
    %2771 = vmatprep.mubr.f32.mxu0 %v2608
    %2772 = vmatmul.mubr.f32.gmra.mxu0 %v2607
    %v2773 = vpop.f32.mrf.mxu0
    %v2774 = vadd.f32 %v1853, %v2773
    %v2775 = vpop.f32.mrf.mxu0
    %v2776 = vadd.f32 %v1857, %v2775
    %2777 = vmatprep.mubr.f32.mxu0 %v2610
    %2778 = vmatmul.mubr.f32.gmra.mxu0 %v2609
    %v2779 = vpop.f32.mrf.mxu0
    %v2780 = vadd.f32 %v1853, %v2779
    %v2781 = vpop.f32.mrf.mxu0
    %v2782 = vadd.f32 %v1857, %v2781
    %2783 = vmatprep.mubr.f32.mxu0 %v2612
    %2784 = vmatmul.mubr.f32.gmra.mxu0 %v2611
    %v2785 = vpop.f32.mrf.mxu0
    %v2786 = vadd.f32 %v1853, %v2785
    %v2787 = vpop.f32.mrf.mxu0
    %v2788 = vadd.f32 %v1857, %v2787
    %2789 = vmatprep.mubr.f32.mxu0 %v2614
    %2790 = vmatmul.mubr.f32.gmra.mxu0 %v2613
    %v2791 = vpop.f32.mrf.mxu0
    %v2792 = vadd.f32 %v1853, %v2791
    %v2793 = vpop.f32.mrf.mxu0
    %v2794 = vadd.f32 %v1857, %v2793
    %2795 = vmatprep.mubr.f32.mxu0 %v2616
    %2796 = vmatmul.mubr.f32.gmra.mxu0 %v2615
    %v2797 = vpop.f32.mrf.mxu0
    %v2798 = vadd.f32 %v1853, %v2797
    %v2799 = vpop.f32.mrf.mxu0
    %v2800 = vadd.f32 %v1857, %v2799
    %2801 = vmatprep.mubr.f32.mxu0 %v2618
    %2802 = vmatmul.mubr.f32.gmra.mxu0 %v2617
    %v2803 = vpop.f32.mrf.mxu0
    %v2804 = vadd.f32 %v1853, %v2803
    %v2805 = vpop.f32.mrf.mxu0
    %v2806 = vadd.f32 %v1857, %v2805
    %2807 = vmatprep.mubr.f32.mxu0 %v2620
    %2808 = vmatmul.mubr.f32.gmra.mxu0 %v2619
    %v2809 = vpop.f32.mrf.mxu0
    %v2810 = vadd.f32 %v1853, %v2809
    %v2811 = vpop.f32.mrf.mxu0
    %v2812 = vadd.f32 %v1857, %v2811
    %2813 = vmatprep.mubr.f32.mxu0 %v2622
    %2814 = vmatmul.mubr.f32.gmra.mxu0 %v2621
    %v2815 = vpop.f32.mrf.mxu0
    %v2816 = vadd.f32 %v1853, %v2815
    %v2817 = vpop.f32.mrf.mxu0
    %v2818 = vadd.f32 %v1857, %v2817
    %2819 = vmatprep.mubr.f32.mxu0 %v2624
    %2820 = vmatmul.mubr.f32.gmra.mxu0 %v2623
    %v2821 = vpop.f32.mrf.mxu0
    %v2822 = vadd.f32 %v1853, %v2821
    %v2823 = vpop.f32.mrf.mxu0
    %v2824 = vadd.f32 %v1857, %v2823
    %2825 = vmatprep.mubr.f32.mxu0 %v2626
    %2826 = vmatmul.mubr.f32.gmra.mxu0 %v2625
    %v2827 = vpop.f32.mrf.mxu0
    %v2828 = vadd.f32 %v1853, %v2827
    %v2829 = vpop.f32.mrf.mxu0
    %v2830 = vadd.f32 %v1857, %v2829
    %2831 = vmatprep.mubr.f32.mxu0 %v2628
    %2832 = vmatmul.mubr.f32.gmra.mxu0 %v2627
    %v2833 = vpop.f32.mrf.mxu0
    %v2834 = vadd.f32 %v1853, %v2833
    %v2835 = vpop.f32.mrf.mxu0
    %v2836 = vadd.f32 %v1857, %v2835
    %2837 = vmatprep.mubr.f32.mxu0 %v2630
    %2838 = vmatmul.mubr.f32.gmra.mxu0 %v2629
    %v2839 = vpop.f32.mrf.mxu0
    %v2840 = vadd.f32 %v1853, %v2839
    %v2841 = vpop.f32.mrf.mxu0
    %v2842 = vadd.f32 %v1857, %v2841
    %2843 = vmatprep.mubr.f32.mxu0 %v2632
    %2844 = vmatmul.mubr.f32.gmra.mxu0 %v2631
    %v2845 = vpop.f32.mrf.mxu0
    %v2846 = vadd.f32 %v1853, %v2845
    %v2847 = vpop.f32.mrf.mxu0
    %v2848 = vadd.f32 %v1857, %v2847
    %2849 = vmatprep.mubr.f32.mxu0 %v2634
    %2850 = vmatmul.mubr.f32.gmra.mxu0 %v2633
    %v2851 = vpop.f32.mrf.mxu0
    %v2852 = vadd.f32 %v1853, %v2851
    %v2853 = vpop.f32.mrf.mxu0
    %v2854 = vadd.f32 %v1857, %v2853
    %2855 = vmatprep.mubr.f32.mxu0 %v2636
    %2856 = vmatmul.mubr.f32.gmra.mxu0 %v2635
    %v2857 = vpop.f32.mrf.mxu0
    %v2858 = vadd.f32 %v1853, %v2857
    %v2859 = vpop.f32.mrf.mxu0
    %v2860 = vadd.f32 %v1857, %v2859
    %2861 = vmatprep.mubr.f32.mxu0 %v2638
    %2862 = vmatmul.mubr.f32.gmra.mxu0 %v2637
    %v2863 = vpop.f32.mrf.mxu0
    %v2864 = vadd.f32 %v1853, %v2863
    %v2865 = vpop.f32.mrf.mxu0
    %v2866 = vadd.f32 %v1857, %v2865
    %2867 = vmatprep.mubr.f32.mxu0 %v2640
    %2868 = vmatmul.mubr.f32.gmra.mxu0 %v2639
    %v2869 = vpop.f32.mrf.mxu0
    %v2870 = vadd.f32 %v1853, %v2869
    %v2871 = vpop.f32.mrf.mxu0
    %v2872 = vadd.f32 %v1857, %v2871
    %2873 = vmatprep.mubr.f32.mxu0 %v2642
    %2874 = vmatmul.mubr.f32.gmra.mxu0 %v2641
    %v2875 = vpop.f32.mrf.mxu0
    %v2876 = vadd.f32 %v1853, %v2875
    %v2877 = vpop.f32.mrf.mxu0
    %v2878 = vadd.f32 %v1857, %v2877
    %2879 = vmatprep.mubr.f32.mxu0 %v2644
    %2880 = vmatmul.mubr.f32.gmra.mxu0 %v2643
    %v2881 = vpop.f32.mrf.mxu0
    %v2882 = vadd.f32 %v1853, %v2881
    %v2883 = vpop.f32.mrf.mxu0
    %v2884 = vadd.f32 %v1857, %v2883
    %2885 = vmatprep.mubr.f32.mxu0 %v2646
    %2886 = vmatmul.mubr.f32.gmra.mxu0 %v2645
    %v2887 = vpop.f32.mrf.mxu0
    %v2888 = vadd.f32 %v1853, %v2887
    %v2889 = vpop.f32.mrf.mxu0
    %v2890 = vadd.f32 %v1857, %v2889
    %2891 = vmatprep.mubr.f32.mxu0 %v2648
    %2892 = vmatmul.mubr.f32.gmra.mxu0 %v2647
    %v2893 = vpop.f32.mrf.mxu0
    %v2894 = vadd.f32 %v1853, %v2893
    %v2895 = vpop.f32.mrf.mxu0
    %v2896 = vadd.f32 %v1857, %v2895
    %2897 = vmatprep.mubr.f32.mxu0 %v2650
    %2898 = vmatmul.mubr.f32.gmra.mxu0 %v2649
    %v2899 = vpop.f32.mrf.mxu0
    %v2900 = vadd.f32 %v1853, %v2899
    %v2901 = vpop.f32.mrf.mxu0
    %v2902 = vadd.f32 %v1857, %v2901
    %2903 = vmatprep.mubr.f32.mxu0 %v2652
    %2904 = vmatmul.mubr.f32.gmra.mxu0 %v2651
    %v2905 = vpop.f32.mrf.mxu0
    %v2906 = vadd.f32 %v1853, %v2905
    %v2907 = vpop.f32.mrf.mxu0
    %v2908 = vadd.f32 %v1857, %v2907
    %2909 = vdwg.mxu0
    %s2910 = scalar_lea.vmem [#allocation13], 1024
    %2911 = vst [vmem:[%s2910] sm:$0xff] %v2720
    %2912 = vst [vmem:[%s2910 + $0x8] sm:$0xff] %v2722
    %2913 = vst [vmem:[%s2910 + $0x10] sm:$0xff] %v2726
    %2914 = vst [vmem:[%s2910 + $0x18] sm:$0xff] %v2728
    %2915 = vst [vmem:[%s2910 + $0x20] sm:$0xff] %v2732
    %2916 = vst [vmem:[%s2910 + $0x28] sm:$0xff] %v2734
    %2917 = vst [vmem:[%s2910 + $0x30] sm:$0xff] %v2738
    %2918 = vst [vmem:[%s2910 + $0x38] sm:$0xff] %v2740
    %2919 = vst [vmem:[%s2910 + $0x40] sm:$0xff] %v2744
    %2920 = vst [vmem:[%s2910 + $0x48] sm:$0xff] %v2746
    %2921 = vst [vmem:[%s2910 + $0x50] sm:$0xff] %v2750
    %2922 = vst [vmem:[%s2910 + $0x58] sm:$0xff] %v2752
    %2923 = vst [vmem:[%s2910 + $0x60] sm:$0xff] %v2756
    %2924 = vst [vmem:[%s2910 + $0x68] sm:$0xff] %v2758
    %2925 = vst [vmem:[%s2910 + $0x70] sm:$0xff] %v2762
    %2926 = vst [vmem:[%s2910 + $0x78] sm:$0xff] %v2764
    %2927 = vst [vmem:[%s2910 + $0x80] sm:$0xff] %v2768
    %2928 = vst [vmem:[%s2910 + $0x88] sm:$0xff] %v2770
    %2929 = vst [vmem:[%s2910 + $0x90] sm:$0xff] %v2774
    %2930 = vst [vmem:[%s2910 + $0x98] sm:$0xff] %v2776
    %2931 = vst [vmem:[%s2910 + $0xa0] sm:$0xff] %v2780
    %2932 = vst [vmem:[%s2910 + $0xa8] sm:$0xff] %v2782
    %2933 = vst [vmem:[%s2910 + $0xb0] sm:$0xff] %v2786
    %2934 = vst [vmem:[%s2910 + $0xb8] sm:$0xff] %v2788
    %2935 = vst [vmem:[%s2910 + $0xc0] sm:$0xff] %v2792
    %2936 = vst [vmem:[%s2910 + $0xc8] sm:$0xff] %v2794
    %2937 = vst [vmem:[%s2910 + $0xd0] sm:$0xff] %v2798
    %2938 = vst [vmem:[%s2910 + $0xd8] sm:$0xff] %v2800
    %2939 = vst [vmem:[%s2910 + $0xe0] sm:$0xff] %v2804
    %2940 = vst [vmem:[%s2910 + $0xe8] sm:$0xff] %v2806
    %2941 = vst [vmem:[%s2910 + $0xf0] sm:$0xff] %v2810
    %2942 = vst [vmem:[%s2910 + $0xf8] sm:$0xff] %v2812
    %2943 = vst [vmem:[%s2910 + $0x100] sm:$0xff] %v2816
    %2944 = vst [vmem:[%s2910 + $0x108] sm:$0xff] %v2818
    %2945 = vst [vmem:[%s2910 + $0x110] sm:$0xff] %v2822
    %2946 = vst [vmem:[%s2910 + $0x118] sm:$0xff] %v2824
    %2947 = vst [vmem:[%s2910 + $0x120] sm:$0xff] %v2828
    %2948 = vst [vmem:[%s2910 + $0x128] sm:$0xff] %v2830
    %2949 = vst [vmem:[%s2910 + $0x130] sm:$0xff] %v2834
    %2950 = vst [vmem:[%s2910 + $0x138] sm:$0xff] %v2836
    %2951 = vst [vmem:[%s2910 + $0x140] sm:$0xff] %v2840
    %2952 = vst [vmem:[%s2910 + $0x148] sm:$0xff] %v2842
    %2953 = vst [vmem:[%s2910 + $0x150] sm:$0xff] %v2846
    %2954 = vst [vmem:[%s2910 + $0x158] sm:$0xff] %v2848
    %2955 = vst [vmem:[%s2910 + $0x160] sm:$0xff] %v2852
    %2956 = vst [vmem:[%s2910 + $0x168] sm:$0xff] %v2854
    %2957 = vst [vmem:[%s2910 + $0x170] sm:$0xff] %v2858
    %2958 = vst [vmem:[%s2910 + $0x178] sm:$0xff] %v2860
    %2959 = vst [vmem:[%s2910 + $0x180] sm:$0xff] %v2864
    %2960 = vst [vmem:[%s2910 + $0x188] sm:$0xff] %v2866
    %2961 = vst [vmem:[%s2910 + $0x190] sm:$0xff] %v2870
    %2962 = vst [vmem:[%s2910 + $0x198] sm:$0xff] %v2872
    %2963 = vst [vmem:[%s2910 + $0x1a0] sm:$0xff] %v2876
    %2964 = vst [vmem:[%s2910 + $0x1a8] sm:$0xff] %v2878
    %2965 = vst [vmem:[%s2910 + $0x1b0] sm:$0xff] %v2882
    %2966 = vst [vmem:[%s2910 + $0x1b8] sm:$0xff] %v2884
    %2967 = vst [vmem:[%s2910 + $0x1c0] sm:$0xff] %v2888
    %2968 = vst [vmem:[%s2910 + $0x1c8] sm:$0xff] %v2890
    %2969 = vst [vmem:[%s2910 + $0x1d0] sm:$0xff] %v2894
    %2970 = vst [vmem:[%s2910 + $0x1d8] sm:$0xff] %v2896
    %2971 = vst [vmem:[%s2910 + $0x1e0] sm:$0xff] %v2900
    %2972 = vst [vmem:[%s2910 + $0x1e8] sm:$0xff] %v2902
    %2973 = vst [vmem:[%s2910 + $0x1f0] sm:$0xff] %v2906
    %2974 = vst [vmem:[%s2910 + $0x1f8] sm:$0xff] %v2908
    %v2976 = vlaneseq
    %v2977 = vshrl.u32 %v2976, 7
    %v2978 = vsub.s32 0, %v2977
    %v2979 = vrot.slane %v1660, %v2978
    %v2980 = vlaneseq
    %v2981 = vshrl.u32 %v2980, 7
    %v2982 = vsub.s32 1, %v2981
    %v2983 = vrot.slane %v1660, %v2982
    %v2986 = vsel %vm1697, %v2979, 0.0
    %v2987 = vsel %vm1698, %v2983, 0.0
    %v2988 = vsel %vm1699, %v2979, 0.0
    %v2989 = vsel %vm1700, %v2983, 0.0
    %v2990 = vsel %vm1701, %v2979, 0.0
    %v2991 = vsel %vm1702, %v2983, 0.0
    %v2992 = vsel %vm1703, %v2979, 0.0
    %v2993 = vsel %vm1704, %v2983, 0.0
    %v2994 = vsel %vm1705, %v2979, 0.0
    %v2995 = vsel %vm1706, %v2983, 0.0
    %v2996 = vsel %vm1707, %v2979, 0.0
    %v2997 = vsel %vm1708, %v2983, 0.0
    %v2998 = vsel %vm1709, %v2979, 0.0
    %v2999 = vsel %vm1710, %v2983, 0.0
    %v3000 = vsel %vm1711, %v2979, 0.0
    %v3001 = vsel %vm1712, %v2983, 0.0
    %v3002 = vsel %vm1713, %v2979, 0.0
    %v3003 = vsel %vm1714, %v2983, 0.0
    %v3004 = vsel %vm1715, %v2979, 0.0
    %v3005 = vsel %vm1716, %v2983, 0.0
    %v3006 = vsel %vm1717, %v2979, 0.0
    %v3007 = vsel %vm1718, %v2983, 0.0
    %v3008 = vsel %vm1719, %v2979, 0.0
    %v3009 = vsel %vm1720, %v2983, 0.0
    %v3010 = vsel %vm1721, %v2979, 0.0
    %v3011 = vsel %vm1722, %v2983, 0.0
    %v3012 = vsel %vm1723, %v2979, 0.0
    %v3013 = vsel %vm1724, %v2983, 0.0
    %v3014 = vsel %vm1725, %v2979, 0.0
    %v3015 = vsel %vm1726, %v2983, 0.0
    %v3016 = vsel %vm1727, %v2979, 0.0
    %v3017 = vsel %vm1728, %v2983, 0.0
    %v3018 = vsel %vm1729, %v2979, 0.0
    %v3019 = vsel %vm1730, %v2983, 0.0
    %v3020 = vsel %vm1731, %v2979, 0.0
    %v3021 = vsel %vm1732, %v2983, 0.0
    %v3022 = vsel %vm1733, %v2979, 0.0
    %v3023 = vsel %vm1734, %v2983, 0.0
    %v3024 = vsel %vm1735, %v2979, 0.0
    %v3025 = vsel %vm1736, %v2983, 0.0
    %v3026 = vsel %vm1737, %v2979, 0.0
    %v3027 = vsel %vm1738, %v2983, 0.0
    %v3028 = vsel %vm1739, %v2979, 0.0
    %v3029 = vsel %vm1740, %v2983, 0.0
    %v3030 = vsel %vm1741, %v2979, 0.0
    %v3031 = vsel %vm1742, %v2983, 0.0
    %v3032 = vsel %vm1743, %v2979, 0.0
    %v3033 = vsel %vm1744, %v2983, 0.0
    %v3034 = vsel %vm1745, %v2979, 0.0
    %v3035 = vsel %vm1746, %v2983, 0.0
    %v3036 = vsel %vm1747, %v2979, 0.0
    %v3037 = vsel %vm1748, %v2983, 0.0
    %v3038 = vsel %vm1749, %v2979, 0.0
    %v3039 = vsel %vm1750, %v2983, 0.0
    %v3040 = vsel %vm1751, %v2979, 0.0
    %v3041 = vsel %vm1752, %v2983, 0.0
    %v3042 = vsel %vm1753, %v2979, 0.0
    %v3043 = vsel %vm1754, %v2983, 0.0
    %v3044 = vsel %vm1755, %v2979, 0.0
    %v3045 = vsel %vm1756, %v2983, 0.0
    %v3046 = vsel %vm1757, %v2979, 0.0
    %v3047 = vsel %vm1758, %v2983, 0.0
    %v3048 = vsel %vm1759, %v2979, 0.0
    %v3049 = vsel %vm1760, %v2983, 0.0
    %3050 = vmatprep.subr.mxu0 %v1770
    %3051 = vmatpush1.msra.mxu0 %v1766
    %3052 = vmatprep.subr.mxu0 %v1770
    %3053 = vmatpush1.msra.mxu0 %v1766
    %3054 = vmatprep.subr.mxu0 %v1770
    %3055 = vmatpush1.msra.mxu0 %v1766
    %3056 = vmatprep.subr.mxu0 %v1770
    %3057 = vmatpush1.msra.mxu0 %v1766
    %3058 = vmatprep.subr.mxu0 %v1770
    %3059 = vmatpush1.msra.mxu0 %v1766
    %3060 = vmatprep.subr.mxu0 %v1770
    %3061 = vmatpush1.msra.mxu0 %v1766
    %3062 = vmatprep.subr.mxu0 %v1770
    %3063 = vmatpush1.msra.mxu0 %v1766
    %3064 = vmatprep.subr.mxu0 %v1770
    %3065 = vmatpush1.msra.mxu0 %v1766
    %3066 = vmatprep.subr.mxu0 %v1770
    %3067 = vmatpush1.msra.mxu0 %v1766
    %3068 = vmatprep.subr.mxu0 %v1770
    %3069 = vmatpush1.msra.mxu0 %v1766
    %3070 = vmatprep.subr.mxu0 %v1770
    %3071 = vmatpush1.msra.mxu0 %v1766
    %3072 = vmatprep.subr.mxu0 %v1770
    %3073 = vmatpush1.msra.mxu0 %v1766
    %3074 = vmatprep.subr.mxu0 %v1770
    %3075 = vmatpush1.msra.mxu0 %v1766
    %3076 = vmatprep.subr.mxu0 %v1770
    %3077 = vmatpush1.msra.mxu0 %v1766
    %3078 = vmatprep.subr.mxu0 %v1770
    %3079 = vmatpush1.msra.mxu0 %v1766
    %3080 = vmatprep.subr.mxu0 %v1770
    %3081 = vmatpush1.msra.mxu0 %v1766
    %3082 = vmatprep.subr.mxu0 %v1770
    %3083 = vmatpush2.msra.mxu0 %v1766
    %3084 = vmatprep.subr.mxu0 %v1770
    %3085 = vmatpush2.msra.mxu0 %v1766
    %3086 = vmatprep.subr.mxu0 %v1770
    %3087 = vmatpush2.msra.mxu0 %v1766
    %3088 = vmatprep.subr.mxu0 %v1770
    %3089 = vmatpush2.msra.mxu0 %v1766
    %3090 = vmatprep.subr.mxu0 %v1770
    %3091 = vmatpush2.msra.mxu0 %v1766
    %3092 = vmatprep.subr.mxu0 %v1770
    %3093 = vmatpush2.msra.mxu0 %v1766
    %3094 = vmatprep.subr.mxu0 %v1770
    %3095 = vmatpush2.msra.mxu0 %v1766
    %3096 = vmatprep.subr.mxu0 %v1770
    %3097 = vmatpush2.msra.mxu0 %v1766
    %3098 = vmatprep.subr.mxu0 %v1770
    %3099 = vmatpush2.msra.mxu0 %v1766
    %3100 = vmatprep.subr.mxu0 %v1770
    %3101 = vmatpush2.msra.mxu0 %v1766
    %3102 = vmatprep.subr.mxu0 %v1770
    %3103 = vmatpush2.msra.mxu0 %v1766
    %3104 = vmatprep.subr.mxu0 %v1770
    %3105 = vmatpush2.msra.mxu0 %v1766
    %3106 = vmatprep.subr.mxu0 %v1770
    %3107 = vmatpush2.msra.mxu0 %v1766
    %3108 = vmatprep.subr.mxu0 %v1770
    %3109 = vmatpush2.msra.mxu0 %v1766
    %3110 = vmatprep.subr.mxu0 %v1770
    %3111 = vmatpush2.msra.mxu0 %v1766
    %3112 = vmatprep.subr.mxu0 %v1770
    %3113 = vmatpush2.msra.mxu0 %v1766
    %3114 = vmatprep.mubr.f32.mxu0 %v2987
    %3115 = vmatmul.mubr.f32.gmra.mxu0 %v2986
    %v3116 = vpop.f32.mrf.mxu0
    %v3117 = vadd.f32 %v1853, %v3116
    %v3118 = vpop.f32.mrf.mxu0
    %v3119 = vadd.f32 %v1857, %v3118
    %3120 = vmatprep.mubr.f32.mxu0 %v2989
    %3121 = vmatmul.mubr.f32.gmra.mxu0 %v2988
    %v3122 = vpop.f32.mrf.mxu0
    %v3123 = vadd.f32 %v1853, %v3122
    %v3124 = vpop.f32.mrf.mxu0
    %v3125 = vadd.f32 %v1857, %v3124
    %3126 = vmatprep.mubr.f32.mxu0 %v2991
    %3127 = vmatmul.mubr.f32.gmra.mxu0 %v2990
    %v3128 = vpop.f32.mrf.mxu0
    %v3129 = vadd.f32 %v1853, %v3128
    %v3130 = vpop.f32.mrf.mxu0
    %v3131 = vadd.f32 %v1857, %v3130
    %3132 = vmatprep.mubr.f32.mxu0 %v2993
    %3133 = vmatmul.mubr.f32.gmra.mxu0 %v2992
    %v3134 = vpop.f32.mrf.mxu0
    %v3135 = vadd.f32 %v1853, %v3134
    %v3136 = vpop.f32.mrf.mxu0
    %v3137 = vadd.f32 %v1857, %v3136
    %3138 = vmatprep.mubr.f32.mxu0 %v2995
    %3139 = vmatmul.mubr.f32.gmra.mxu0 %v2994
    %v3140 = vpop.f32.mrf.mxu0
    %v3141 = vadd.f32 %v1853, %v3140
    %v3142 = vpop.f32.mrf.mxu0
    %v3143 = vadd.f32 %v1857, %v3142
    %3144 = vmatprep.mubr.f32.mxu0 %v2997
    %3145 = vmatmul.mubr.f32.gmra.mxu0 %v2996
    %v3146 = vpop.f32.mrf.mxu0
    %v3147 = vadd.f32 %v1853, %v3146
    %v3148 = vpop.f32.mrf.mxu0
    %v3149 = vadd.f32 %v1857, %v3148
    %3150 = vmatprep.mubr.f32.mxu0 %v2999
    %3151 = vmatmul.mubr.f32.gmra.mxu0 %v2998
    %v3152 = vpop.f32.mrf.mxu0
    %v3153 = vadd.f32 %v1853, %v3152
    %v3154 = vpop.f32.mrf.mxu0
    %v3155 = vadd.f32 %v1857, %v3154
    %3156 = vmatprep.mubr.f32.mxu0 %v3001
    %3157 = vmatmul.mubr.f32.gmra.mxu0 %v3000
    %v3158 = vpop.f32.mrf.mxu0
    %v3159 = vadd.f32 %v1853, %v3158
    %v3160 = vpop.f32.mrf.mxu0
    %v3161 = vadd.f32 %v1857, %v3160
    %3162 = vmatprep.mubr.f32.mxu0 %v3003
    %3163 = vmatmul.mubr.f32.gmra.mxu0 %v3002
    %v3164 = vpop.f32.mrf.mxu0
    %v3165 = vadd.f32 %v1853, %v3164
    %v3166 = vpop.f32.mrf.mxu0
    %v3167 = vadd.f32 %v1857, %v3166
    %3168 = vmatprep.mubr.f32.mxu0 %v3005
    %3169 = vmatmul.mubr.f32.gmra.mxu0 %v3004
    %v3170 = vpop.f32.mrf.mxu0
    %v3171 = vadd.f32 %v1853, %v3170
    %v3172 = vpop.f32.mrf.mxu0
    %v3173 = vadd.f32 %v1857, %v3172
    %3174 = vmatprep.mubr.f32.mxu0 %v3007
    %3175 = vmatmul.mubr.f32.gmra.mxu0 %v3006
    %v3176 = vpop.f32.mrf.mxu0
    %v3177 = vadd.f32 %v1853, %v3176
    %v3178 = vpop.f32.mrf.mxu0
    %v3179 = vadd.f32 %v1857, %v3178
    %3180 = vmatprep.mubr.f32.mxu0 %v3009
    %3181 = vmatmul.mubr.f32.gmra.mxu0 %v3008
    %v3182 = vpop.f32.mrf.mxu0
    %v3183 = vadd.f32 %v1853, %v3182
    %v3184 = vpop.f32.mrf.mxu0
    %v3185 = vadd.f32 %v1857, %v3184
    %3186 = vmatprep.mubr.f32.mxu0 %v3011
    %3187 = vmatmul.mubr.f32.gmra.mxu0 %v3010
    %v3188 = vpop.f32.mrf.mxu0
    %v3189 = vadd.f32 %v1853, %v3188
    %v3190 = vpop.f32.mrf.mxu0
    %v3191 = vadd.f32 %v1857, %v3190
    %3192 = vmatprep.mubr.f32.mxu0 %v3013
    %3193 = vmatmul.mubr.f32.gmra.mxu0 %v3012
    %v3194 = vpop.f32.mrf.mxu0
    %v3195 = vadd.f32 %v1853, %v3194
    %v3196 = vpop.f32.mrf.mxu0
    %v3197 = vadd.f32 %v1857, %v3196
    %3198 = vmatprep.mubr.f32.mxu0 %v3015
    %3199 = vmatmul.mubr.f32.gmra.mxu0 %v3014
    %v3200 = vpop.f32.mrf.mxu0
    %v3201 = vadd.f32 %v1853, %v3200
    %v3202 = vpop.f32.mrf.mxu0
    %v3203 = vadd.f32 %v1857, %v3202
    %3204 = vmatprep.mubr.f32.mxu0 %v3017
    %3205 = vmatmul.mubr.f32.gmra.mxu0 %v3016
    %v3206 = vpop.f32.mrf.mxu0
    %v3207 = vadd.f32 %v1853, %v3206
    %v3208 = vpop.f32.mrf.mxu0
    %v3209 = vadd.f32 %v1857, %v3208
    %3210 = vmatprep.mubr.f32.mxu0 %v3019
    %3211 = vmatmul.mubr.f32.gmra.mxu0 %v3018
    %v3212 = vpop.f32.mrf.mxu0
    %v3213 = vadd.f32 %v1853, %v3212
    %v3214 = vpop.f32.mrf.mxu0
    %v3215 = vadd.f32 %v1857, %v3214
    %3216 = vmatprep.mubr.f32.mxu0 %v3021
    %3217 = vmatmul.mubr.f32.gmra.mxu0 %v3020
    %v3218 = vpop.f32.mrf.mxu0
    %v3219 = vadd.f32 %v1853, %v3218
    %v3220 = vpop.f32.mrf.mxu0
    %v3221 = vadd.f32 %v1857, %v3220
    %3222 = vmatprep.mubr.f32.mxu0 %v3023
    %3223 = vmatmul.mubr.f32.gmra.mxu0 %v3022
    %v3224 = vpop.f32.mrf.mxu0
    %v3225 = vadd.f32 %v1853, %v3224
    %v3226 = vpop.f32.mrf.mxu0
    %v3227 = vadd.f32 %v1857, %v3226
    %3228 = vmatprep.mubr.f32.mxu0 %v3025
    %3229 = vmatmul.mubr.f32.gmra.mxu0 %v3024
    %v3230 = vpop.f32.mrf.mxu0
    %v3231 = vadd.f32 %v1853, %v3230
    %v3232 = vpop.f32.mrf.mxu0
    %v3233 = vadd.f32 %v1857, %v3232
    %3234 = vmatprep.mubr.f32.mxu0 %v3027
    %3235 = vmatmul.mubr.f32.gmra.mxu0 %v3026
    %v3236 = vpop.f32.mrf.mxu0
    %v3237 = vadd.f32 %v1853, %v3236
    %v3238 = vpop.f32.mrf.mxu0
    %v3239 = vadd.f32 %v1857, %v3238
    %3240 = vmatprep.mubr.f32.mxu0 %v3029
    %3241 = vmatmul.mubr.f32.gmra.mxu0 %v3028
    %v3242 = vpop.f32.mrf.mxu0
    %v3243 = vadd.f32 %v1853, %v3242
    %v3244 = vpop.f32.mrf.mxu0
    %v3245 = vadd.f32 %v1857, %v3244
    %3246 = vmatprep.mubr.f32.mxu0 %v3031
    %3247 = vmatmul.mubr.f32.gmra.mxu0 %v3030
    %v3248 = vpop.f32.mrf.mxu0
    %v3249 = vadd.f32 %v1853, %v3248
    %v3250 = vpop.f32.mrf.mxu0
    %v3251 = vadd.f32 %v1857, %v3250
    %3252 = vmatprep.mubr.f32.mxu0 %v3033
    %3253 = vmatmul.mubr.f32.gmra.mxu0 %v3032
    %v3254 = vpop.f32.mrf.mxu0
    %v3255 = vadd.f32 %v1853, %v3254
    %v3256 = vpop.f32.mrf.mxu0
    %v3257 = vadd.f32 %v1857, %v3256
    %3258 = vmatprep.mubr.f32.mxu0 %v3035
    %3259 = vmatmul.mubr.f32.gmra.mxu0 %v3034
    %v3260 = vpop.f32.mrf.mxu0
    %v3261 = vadd.f32 %v1853, %v3260
    %v3262 = vpop.f32.mrf.mxu0
    %v3263 = vadd.f32 %v1857, %v3262
    %3264 = vmatprep.mubr.f32.mxu0 %v3037
    %3265 = vmatmul.mubr.f32.gmra.mxu0 %v3036
    %v3266 = vpop.f32.mrf.mxu0
    %v3267 = vadd.f32 %v1853, %v3266
    %v3268 = vpop.f32.mrf.mxu0
    %v3269 = vadd.f32 %v1857, %v3268
    %3270 = vmatprep.mubr.f32.mxu0 %v3039
    %3271 = vmatmul.mubr.f32.gmra.mxu0 %v3038
    %v3272 = vpop.f32.mrf.mxu0
    %v3273 = vadd.f32 %v1853, %v3272
    %v3274 = vpop.f32.mrf.mxu0
    %v3275 = vadd.f32 %v1857, %v3274
    %3276 = vmatprep.mubr.f32.mxu0 %v3041
    %3277 = vmatmul.mubr.f32.gmra.mxu0 %v3040
    %v3278 = vpop.f32.mrf.mxu0
    %v3279 = vadd.f32 %v1853, %v3278
    %v3280 = vpop.f32.mrf.mxu0
    %v3281 = vadd.f32 %v1857, %v3280
    %3282 = vmatprep.mubr.f32.mxu0 %v3043
    %3283 = vmatmul.mubr.f32.gmra.mxu0 %v3042
    %v3284 = vpop.f32.mrf.mxu0
    %v3285 = vadd.f32 %v1853, %v3284
    %v3286 = vpop.f32.mrf.mxu0
    %v3287 = vadd.f32 %v1857, %v3286
    %3288 = vmatprep.mubr.f32.mxu0 %v3045
    %3289 = vmatmul.mubr.f32.gmra.mxu0 %v3044
    %v3290 = vpop.f32.mrf.mxu0
    %v3291 = vadd.f32 %v1853, %v3290
    %v3292 = vpop.f32.mrf.mxu0
    %v3293 = vadd.f32 %v1857, %v3292
    %3294 = vmatprep.mubr.f32.mxu0 %v3047
    %3295 = vmatmul.mubr.f32.gmra.mxu0 %v3046
    %v3296 = vpop.f32.mrf.mxu0
    %v3297 = vadd.f32 %v1853, %v3296
    %v3298 = vpop.f32.mrf.mxu0
    %v3299 = vadd.f32 %v1857, %v3298
    %3300 = vmatprep.mubr.f32.mxu0 %v3049
    %3301 = vmatmul.mubr.f32.gmra.mxu0 %v3048
    %v3302 = vpop.f32.mrf.mxu0
    %v3303 = vadd.f32 %v1853, %v3302
    %v3304 = vpop.f32.mrf.mxu0
    %v3305 = vadd.f32 %v1857, %v3304
    %3306 = vdwg.mxu0
    %s3307 = scalar_lea.vmem [#allocation13], 1536
    %3308 = vst [vmem:[%s3307] sm:$0xff] %v3117
    %3309 = vst [vmem:[%s3307 + $0x8] sm:$0xff] %v3119
    %3310 = vst [vmem:[%s3307 + $0x10] sm:$0xff] %v3123
    %3311 = vst [vmem:[%s3307 + $0x18] sm:$0xff] %v3125
    %3312 = vst [vmem:[%s3307 + $0x20] sm:$0xff] %v3129
    %3313 = vst [vmem:[%s3307 + $0x28] sm:$0xff] %v3131
    %3314 = vst [vmem:[%s3307 + $0x30] sm:$0xff] %v3135
    %3315 = vst [vmem:[%s3307 + $0x38] sm:$0xff] %v3137
    %3316 = vst [vmem:[%s3307 + $0x40] sm:$0xff] %v3141
    %3317 = vst [vmem:[%s3307 + $0x48] sm:$0xff] %v3143
    %3318 = vst [vmem:[%s3307 + $0x50] sm:$0xff] %v3147
    %3319 = vst [vmem:[%s3307 + $0x58] sm:$0xff] %v3149
    %3320 = vst [vmem:[%s3307 + $0x60] sm:$0xff] %v3153
    %3321 = vst [vmem:[%s3307 + $0x68] sm:$0xff] %v3155
    %3322 = vst [vmem:[%s3307 + $0x70] sm:$0xff] %v3159
    %3323 = vst [vmem:[%s3307 + $0x78] sm:$0xff] %v3161
    %3324 = vst [vmem:[%s3307 + $0x80] sm:$0xff] %v3165
    %3325 = vst [vmem:[%s3307 + $0x88] sm:$0xff] %v3167
    %3326 = vst [vmem:[%s3307 + $0x90] sm:$0xff] %v3171
    %3327 = vst [vmem:[%s3307 + $0x98] sm:$0xff] %v3173
    %3328 = vst [vmem:[%s3307 + $0xa0] sm:$0xff] %v3177
    %3329 = vst [vmem:[%s3307 + $0xa8] sm:$0xff] %v3179
    %3330 = vst [vmem:[%s3307 + $0xb0] sm:$0xff] %v3183
    %3331 = vst [vmem:[%s3307 + $0xb8] sm:$0xff] %v3185
    %3332 = vst [vmem:[%s3307 + $0xc0] sm:$0xff] %v3189
    %3333 = vst [vmem:[%s3307 + $0xc8] sm:$0xff] %v3191
    %3334 = vst [vmem:[%s3307 + $0xd0] sm:$0xff] %v3195
    %3335 = vst [vmem:[%s3307 + $0xd8] sm:$0xff] %v3197
    %3336 = vst [vmem:[%s3307 + $0xe0] sm:$0xff] %v3201
    %3337 = vst [vmem:[%s3307 + $0xe8] sm:$0xff] %v3203
    %3338 = vst [vmem:[%s3307 + $0xf0] sm:$0xff] %v3207
    %3339 = vst [vmem:[%s3307 + $0xf8] sm:$0xff] %v3209
    %3340 = vst [vmem:[%s3307 + $0x100] sm:$0xff] %v3213
    %3341 = vst [vmem:[%s3307 + $0x108] sm:$0xff] %v3215
    %3342 = vst [vmem:[%s3307 + $0x110] sm:$0xff] %v3219
    %3343 = vst [vmem:[%s3307 + $0x118] sm:$0xff] %v3221
    %3344 = vst [vmem:[%s3307 + $0x120] sm:$0xff] %v3225
    %3345 = vst [vmem:[%s3307 + $0x128] sm:$0xff] %v3227
    %3346 = vst [vmem:[%s3307 + $0x130] sm:$0xff] %v3231
    %3347 = vst [vmem:[%s3307 + $0x138] sm:$0xff] %v3233
    %3348 = vst [vmem:[%s3307 + $0x140] sm:$0xff] %v3237
    %3349 = vst [vmem:[%s3307 + $0x148] sm:$0xff] %v3239
    %3350 = vst [vmem:[%s3307 + $0x150] sm:$0xff] %v3243
    %3351 = vst [vmem:[%s3307 + $0x158] sm:$0xff] %v3245
    %3352 = vst [vmem:[%s3307 + $0x160] sm:$0xff] %v3249
    %3353 = vst [vmem:[%s3307 + $0x168] sm:$0xff] %v3251
    %3354 = vst [vmem:[%s3307 + $0x170] sm:$0xff] %v3255
    %3355 = vst [vmem:[%s3307 + $0x178] sm:$0xff] %v3257
    %3356 = vst [vmem:[%s3307 + $0x180] sm:$0xff] %v3261
    %3357 = vst [vmem:[%s3307 + $0x188] sm:$0xff] %v3263
    %3358 = vst [vmem:[%s3307 + $0x190] sm:$0xff] %v3267
    %3359 = vst [vmem:[%s3307 + $0x198] sm:$0xff] %v3269
    %3360 = vst [vmem:[%s3307 + $0x1a0] sm:$0xff] %v3273
    %3361 = vst [vmem:[%s3307 + $0x1a8] sm:$0xff] %v3275
    %3362 = vst [vmem:[%s3307 + $0x1b0] sm:$0xff] %v3279
    %3363 = vst [vmem:[%s3307 + $0x1b8] sm:$0xff] %v3281
    %3364 = vst [vmem:[%s3307 + $0x1c0] sm:$0xff] %v3285
    %3365 = vst [vmem:[%s3307 + $0x1c8] sm:$0xff] %v3287
    %3366 = vst [vmem:[%s3307 + $0x1d0] sm:$0xff] %v3291
    %3367 = vst [vmem:[%s3307 + $0x1d8] sm:$0xff] %v3293
    %3368 = vst [vmem:[%s3307 + $0x1e0] sm:$0xff] %v3297
    %3369 = vst [vmem:[%s3307 + $0x1e8] sm:$0xff] %v3299
    %3370 = vst [vmem:[%s3307 + $0x1f0] sm:$0xff] %v3303
    %3371 = vst [vmem:[%s3307 + $0x1f8] sm:$0xff] %v3305
    // Predicated region
    $region50: #{tpu_custom_call.1} parent=1 // pred_check
      _
    $region51: #{tpu_custom_call.1} parent=1 // pred_check_branch
      %3373 = sbr.rel (0) target = $region53
    $region52: #{tpu_custom_call.1} parent=1 // pred_region
      %s3375 = ssub.s32 32768, 32768
      %3376 = vsyncadd [#allocation4], %s3375
      %s3377 = sshll.u32 [#allocation13], 4
      %s3378 = int_to_ptr.vmem [resolvable:$true] %s3377
      %3383 = dma.vmem_to_hbm [thread:$0]  %s3378, 32768, %s6, [#allocation4], 256, 256, 16
    $region53: #{tpu_custom_call.1} parent=1 // pred_fallthru
      _
    // Predicated region
    $region54: #{tpu_custom_call.1} parent=1 // pred_check
      _
    $region55: #{tpu_custom_call.1} parent=1 // pred_check_branch
      %3385 = sbr.rel (0) target = $region57
    $region56: #{tpu_custom_call.1} parent=1 // pred_region
      %3386 = dma.done [#allocation4], 32768
    $region57: #{tpu_custom_call.1} parent=1 // pred_fallthru
      _
    %3387 = vsyncpa [#allocation3], 1
    %3388 = vsyncpa [#allocation6], 1
    %3389 = vsyncpa [#allocation9], 1
    %3390 = vsyncpa [#allocation12], 1
    %3391 = vsyncpa [#allocation4], 1

</llo_original>
